<compile_context>
chip_gen: v6e
topology: v6e:2x2x1
jax: 0.10.0
libtpu: 0.0.40
codegen_flags: <defaults>
</compile_context>

<pallas_src>
from functools import partial

import jax
import jax.numpy as jnp
from jax.experimental import pallas as pl
from jax.experimental.pallas import tpu as pltpu


LANES = 128                          # pad every channel/feature dim to this
_VMEM_LIMIT = 32 * 1024 * 1024       # explicit scoped-VMEM cap (safe on all gens)


def _round_up(x, m):
    return (x + m - 1) // m * m


# ------------------------------ Pallas kernels ------------------------------

def _conv_relu_pool_kernel(x_ref, w_ref, b_ref, o_ref):
    """One image: 4 pool-tap GEMMs -> bias + relu -> 2x2 max-pool (elementwise).

    x_ref: (1, 4, Q, Kp) bf16 im2col patches, pool-tap-major.
    w_ref: (Kp, 128) bf16.   b_ref: (1, 128) f32.   o_ref: (1, Q, 128) bf16.
    """
    w = w_ref[...]
    b = b_ref[...]

    def tap(p):
        acc = jnp.dot(x_ref[0, p], w, preferred_element_type=jnp.float32)
        return jnp.maximum(acc + b, 0.0)      # relu commutes with the max below

    out = jnp.maximum(jnp.maximum(tap(0), tap(1)),
                      jnp.maximum(tap(2), tap(3)))
    o_ref[0] = out.astype(o_ref.dtype)


def conv_relu_pool(patches, w, b):
    """patches: (B, 4, Q, Kp) bf16; w: (Kp, 128) bf16; b: (1, 128) f32."""
    B, _, Q, Kp = patches.shape
    return pl.pallas_call(
        _conv_relu_pool_kernel,
        out_shape=jax.ShapeDtypeStruct((B, Q, LANES), jnp.bfloat16),
        grid=(B,),
        in_specs=[
            pl.BlockSpec((1, 4, Q, Kp), lambda bi: (bi, 0, 0, 0)),
            pl.BlockSpec((Kp, LANES), lambda bi: (0, 0)),     # weights resident
            pl.BlockSpec((1, LANES), lambda bi: (0, 0)),
        ],
        out_specs=pl.BlockSpec((1, Q, LANES), lambda bi: (bi, 0, 0)),
        compiler_params=pltpu.CompilerParams(
            dimension_semantics=("parallel",),
            vmem_limit_bytes=_VMEM_LIMIT),
    )(patches, w, b)


def _tail_kernel(x_ref, w3_ref, b3_ref, w4_ref, b4_ref, w5_ref, b5_ref, o_ref,
                 *, n_classes):
    # conv3 (1x1 output spatial -> plain GEMM); no activation in the reference.
    h = jnp.dot(x_ref[...], w3_ref[...], preferred_element_type=jnp.float32)
    h = h + b3_ref[...]
    # fc1 + relu
    h = jnp.dot(h.astype(jnp.bfloat16), w4_ref[...],
                preferred_element_type=jnp.float32) + b4_ref[...]
    h = jnp.maximum(h, 0.0)
    # fc2 + relu (reference applies relu to logits before log_softmax)
    h = jnp.dot(h.astype(jnp.bfloat16), w5_ref[...],
                preferred_element_type=jnp.float32) + b5_ref[...]
    h = jnp.maximum(h, 0.0)
    # log_softmax over the real classes only (other lanes are padding)
    lane = jax.lax.broadcasted_iota(jnp.int32, h.shape, 1)
    h = jnp.where(lane < n_classes, h, -1e30)
    m = jnp.max(h, axis=-1, keepdims=True)
    s = h - m
    lse = jnp.log(jnp.sum(jnp.exp(s), axis=-1, keepdims=True))
    o_ref[...] = (s - lse).astype(o_ref.dtype)


def fused_tail(x, w3, b3, w4, b4, w5, b5, *, n_classes):
    M, Kp = x.shape
    tile_m = min(256, M)
    grid = (pl.cdiv(M, tile_m),)
    return pl.pallas_call(
        partial(_tail_kernel, n_classes=n_classes),
        out_shape=jax.ShapeDtypeStruct((M, LANES), jnp.float32),
        grid=grid,
        in_specs=[
            pl.BlockSpec((tile_m, Kp), lambda i: (i, 0)),
            pl.BlockSpec(w3.shape, lambda i: (0, 0)),
            pl.BlockSpec(b3.shape, lambda i: (0, 0)),
            pl.BlockSpec(w4.shape, lambda i: (0, 0)),
            pl.BlockSpec(b4.shape, lambda i: (0, 0)),
            pl.BlockSpec(w5.shape, lambda i: (0, 0)),
            pl.BlockSpec(b5.shape, lambda i: (0, 0)),
        ],
        out_specs=pl.BlockSpec((tile_m, LANES), lambda i: (i, 0)),
        compiler_params=pltpu.CompilerParams(
            dimension_semantics=("parallel",),
            vmem_limit_bytes=_VMEM_LIMIT),
    )(x, w3, b3, w4, b4, w5, b5)


# --------------------------------- XLA glue ---------------------------------

def _im2col_pooled(x_nhwc, kh, kw, pad):
    """(B,H,W,C) -> (B, 4, Ho*Wo, Kp) bf16 patches, pool-tap-major.

    Group p = dh*2 + dw holds the im2col rows of conv-output pixels
    (2*ho + dh, 2*wo + dw); row order inside a group is (ho, wo) row-major,
    feature order is (kh, kw, cin).  Kp is K zero-padded to a multiple of 128.
    """
    B, H, W, C = x_nhwc.shape
    xp = jnp.pad(x_nhwc, ((0, 0), (pad, pad), (pad, pad), (0, 0)))
    H1 = H + 2 * pad - kh + 1
    W1 = W + 2 * pad - kw + 1
    Ho, Wo = H1 // 2, W1 // 2
    K = kh * kw * C
    Kp = _round_up(K, LANES)

    groups = []
    for dh in range(2):
        for dw in range(2):
            cols = [xp[:, dh + i: dh + i + 2 * Ho: 2,
                        dw + j: dw + j + 2 * Wo: 2, :]
                    for i in range(kh) for j in range(kw)]
            g = jnp.stack(cols, axis=3).reshape(B, Ho * Wo, K)
            groups.append(g)
    patches = jnp.stack(groups, axis=1)                      # (B, 4, Ho*Wo, K)
    if Kp != K:
        patches = jnp.pad(patches, ((0, 0), (0, 0), (0, 0), (0, Kp - K)))
    return patches.astype(jnp.bfloat16), Ho, Wo


def _conv_weight(w_oihw, Kp):
    """(O,I,kh,kw) -> (Kp, 128) bf16; row order (kh,kw,in) matches _im2col_pooled."""
    O, I, kh, kw = w_oihw.shape
    w2d = jnp.transpose(w_oihw, (2, 3, 1, 0)).reshape(kh * kw * I, O)
    w2d = jnp.pad(w2d, ((0, Kp - kh * kw * I), (0, LANES - O)))
    return w2d.astype(jnp.bfloat16)


def _linear_weight(w_out_in, Kp):
    O, I = w_out_in.shape
    w2d = jnp.pad(w_out_in.T, ((0, Kp - I), (0, LANES - O)))
    return w2d.astype(jnp.bfloat16)


def _pad_bias(b):
    return jnp.pad(b, (0, LANES - b.shape[0])).reshape(1, LANES).astype(jnp.float32)


# ------------------------------ model definition ----------------------------

def init_params(key):
    """PyTorch-style uniform(-1/sqrt(fan_in), +1/sqrt(fan_in)) init."""
    def uniform(k, shape, fan_in):
        bound = 1.0 / jnp.sqrt(jnp.float32(fan_in))
        return jax.random.uniform(k, shape, jnp.float32, -bound, bound)

    ks = jax.random.split(key, 10)
    return {
        "conv1_w": uniform(ks[0], (6, 3, 7, 7), 3 * 7 * 7),
        "conv1_b": uniform(ks[1], (6,), 3 * 7 * 7),
        "conv2_w": uniform(ks[2], (16, 6, 7, 7), 6 * 7 * 7),
        "conv2_b": uniform(ks[3], (16,), 6 * 7 * 7),
        "conv3_w": uniform(ks[4], (120, 16, 6, 6), 16 * 6 * 6),
        "conv3_b": uniform(ks[5], (120,), 16 * 6 * 6),
        "fc1_w": uniform(ks[6], (84, 120), 120),   # PyTorch Linear: (out, in)
        "fc1_b": uniform(ks[7], (84,), 120),
        "fc2_w": uniform(ks[8], (10, 84), 84),
        "fc2_b": uniform(ks[9], (10,), 84),
    }


def lenet_k6_forward(params, x_nchw):
    x = jnp.transpose(x_nchw, (0, 2, 3, 1)).astype(jnp.bfloat16)    # NCHW -> NHWC
    B = x.shape[0]

    # conv1 (7x7, pad 3) + relu + 2x2 max pool, all in one kernel
    p1, Ho1, Wo1 = _im2col_pooled(x, 7, 7, 3)                        # (B,4,256,256)
    a1 = conv_relu_pool(p1, _conv_weight(params["conv1_w"], p1.shape[-1]),
                        _pad_bias(params["conv1_b"]))                # (B,256,128)
    a1 = a1.reshape(B, Ho1, Wo1, LANES)[..., :6]                     # (B,16,16,6)

    # conv2 (7x7, pad 1) + relu + 2x2 max pool
    p2, Ho2, Wo2 = _im2col_pooled(a1, 7, 7, 1)                       # (B,4,36,384)
    a2 = conv_relu_pool(p2, _conv_weight(params["conv2_w"], p2.shape[-1]),
                        _pad_bias(params["conv2_b"]))                # (B,36,128)

    # fused tail: conv3 (6x6 -> 1x1 spatial) + fc1 + fc2 + log_softmax
    feat = a2.reshape(B, Ho2, Wo2, LANES)[..., :16].reshape(B, Ho2 * Wo2 * 16)
    Kp3 = _round_up(feat.shape[1], LANES)                            # 640
    feat = jnp.pad(feat, ((0, 0), (0, Kp3 - feat.shape[1]))).astype(jnp.bfloat16)
    logp = fused_tail(
        feat,
        _conv_weight(params["conv3_w"], Kp3), _pad_bias(params["conv3_b"]),
        _linear_weight(params["fc1_w"], LANES), _pad_bias(params["fc1_b"]),
        _linear_weight(params["fc2_w"], LANES), _pad_bias(params["fc2_b"]),
        n_classes=10)                                                # (B,128) f32
    return logp[:, :10]


if __name__ == "__main__":
    key = jax.random.PRNGKey(0)
    pkey, xkey = jax.random.split(key)
    params = init_params(pkey)

    # Architecture forces 32x32 input (conv3 with k=6 reduces the 6x6 map to 1x1).
    x = jax.random.normal(xkey, (2, 3, 32, 32), jnp.float32)

    out = jax.jit(lenet_k6_forward)(params, x)
    out = jax.block_until_ready(out)

    assert out.shape == (2, 10), out.shape
    assert bool(jnp.all(jnp.isfinite(out)))
    # log_softmax rows should exponentiate-and-sum to ~1
    assert bool(jnp.all(jnp.abs(jnp.sum(jnp.exp(out), axis=1) - 1.0) < 1e-4))
    print("KERNEL_OK")
</pallas_src>

<mosaic_0001>
module attributes {stable_mosaic.version = 11 : i64} {
  func.func @_conv_relu_pool_kernel(%arg0: i32, %arg1: memref<1x4x256x256xbf16, #tpu.memory_space<vmem>>, %arg2: memref<256x128xbf16, #tpu.memory_space<vmem>>, %arg3: memref<1x128xf32, #tpu.memory_space<vmem>>, %arg4: memref<1x256x128xbf16, #tpu.memory_space<vmem>>) attributes {dimension_semantics = [#tpu.dimension_semantics<parallel>], iteration_bounds = array<i64: 2>, scalar_prefetch = 0 : i64, scratch_operands = 0 : i64, tpu.core_type = #tpu.core_type<tc>, window_params = [{transform_indices = @transform_0, window_bounds = array<i64: 1, 4, 256, 256>}, {pipeline_mode = #tpu.pipeline_mode<synchronous>, transform_indices = @transform_1, window_bounds = array<i64: 256, 128>}, {pipeline_mode = #tpu.pipeline_mode<synchronous>, transform_indices = @transform_2, window_bounds = array<i64: 1, 128>}, {transform_indices = @transform_3, window_bounds = array<i64: 1, 256, 128>}]} {
    %c0 = arith.constant 0 : index
    %c0_0 = arith.constant 0 : index
    %0 = vector.load %arg2[%c0, %c0_0] : memref<256x128xbf16, #tpu.memory_space<vmem>>, vector<256x128xbf16>
    %c0_1 = arith.constant 0 : index
    %c0_2 = arith.constant 0 : index
    %1 = vector.load %arg3[%c0_1, %c0_2] : memref<1x128xf32, #tpu.memory_space<vmem>>, vector<1x128xf32>
    %c0_3 = arith.constant 0 : index
    %c0_4 = arith.constant 0 : index
    %c0_5 = arith.constant 0 : index
    %c0_6 = arith.constant 0 : index
    %2 = vector.load %arg1[%c0_3, %c0_4, %c0_5, %c0_6] : memref<1x4x256x256xbf16, #tpu.memory_space<vmem>>, vector<1x1x256x256xbf16>
    %3 = vector.shape_cast %2 : vector<1x1x256x256xbf16> to vector<256x256xbf16>
    %cst = arith.constant dense<0.000000e+00> : vector<256x128xf32>
    %4 = tpu.matmul %3, %0, %cst {dimension_numbers = #tpu.dot_dimension_numbers<[1], [0], [0], [1], [0, 0, 1, 1], [], []>} : vector<256x256xbf16>, vector<256x128xbf16>, vector<256x128xf32> -> vector<256x128xf32>
    %5 = vector.broadcast %1 : vector<1x128xf32> to vector<256x128xf32>
    %6 = arith.addf %4, %5 : vector<256x128xf32>
    %cst_7 = arith.constant 0.000000e+00 : f32
    %7 = vector.broadcast %cst_7 : f32 to vector<256x128xf32>
    %8 = arith.maximumf %6, %7 : vector<256x128xf32>
    %c0_8 = arith.constant 0 : index
    %c1 = arith.constant 1 : index
    %c0_9 = arith.constant 0 : index
    %c0_10 = arith.constant 0 : index
    %9 = vector.load %arg1[%c0_8, %c1, %c0_9, %c0_10] : memref<1x4x256x256xbf16, #tpu.memory_space<vmem>>, vector<1x1x256x256xbf16>
    %10 = vector.shape_cast %9 : vector<1x1x256x256xbf16> to vector<256x256xbf16>
    %cst_11 = arith.constant dense<0.000000e+00> : vector<256x128xf32>
    %11 = tpu.matmul %10, %0, %cst_11 {dimension_numbers = #tpu.dot_dimension_numbers<[1], [0], [0], [1], [0, 0, 1, 1], [], []>} : vector<256x256xbf16>, vector<256x128xbf16>, vector<256x128xf32> -> vector<256x128xf32>
    %12 = vector.broadcast %1 : vector<1x128xf32> to vector<256x128xf32>
    %13 = arith.addf %11, %12 : vector<256x128xf32>
    %cst_12 = arith.constant 0.000000e+00 : f32
    %14 = vector.broadcast %cst_12 : f32 to vector<256x128xf32>
    %15 = arith.maximumf %13, %14 : vector<256x128xf32>
    %16 = arith.maximumf %8, %15 : vector<256x128xf32>
    %c0_13 = arith.constant 0 : index
    %c2 = arith.constant 2 : index
    %c0_14 = arith.constant 0 : index
    %c0_15 = arith.constant 0 : index
    %17 = vector.load %arg1[%c0_13, %c2, %c0_14, %c0_15] : memref<1x4x256x256xbf16, #tpu.memory_space<vmem>>, vector<1x1x256x256xbf16>
    %18 = vector.shape_cast %17 : vector<1x1x256x256xbf16> to vector<256x256xbf16>
    %cst_16 = arith.constant dense<0.000000e+00> : vector<256x128xf32>
    %19 = tpu.matmul %18, %0, %cst_16 {dimension_numbers = #tpu.dot_dimension_numbers<[1], [0], [0], [1], [0, 0, 1, 1], [], []>} : vector<256x256xbf16>, vector<256x128xbf16>, vector<256x128xf32> -> vector<256x128xf32>
    %20 = vector.broadcast %1 : vector<1x128xf32> to vector<256x128xf32>
    %21 = arith.addf %19, %20 : vector<256x128xf32>
    %cst_17 = arith.constant 0.000000e+00 : f32
    %22 = vector.broadcast %cst_17 : f32 to vector<256x128xf32>
    %23 = arith.maximumf %21, %22 : vector<256x128xf32>
    %c0_18 = arith.constant 0 : index
    %c3 = arith.constant 3 : index
    %c0_19 = arith.constant 0 : index
    %c0_20 = arith.constant 0 : index
    %24 = vector.load %arg1[%c0_18, %c3, %c0_19, %c0_20] : memref<1x4x256x256xbf16, #tpu.memory_space<vmem>>, vector<1x1x256x256xbf16>
    %25 = vector.shape_cast %24 : vector<1x1x256x256xbf16> to vector<256x256xbf16>
    %cst_21 = arith.constant dense<0.000000e+00> : vector<256x128xf32>
    %26 = tpu.matmul %25, %0, %cst_21 {dimension_numbers = #tpu.dot_dimension_numbers<[1], [0], [0], [1], [0, 0, 1, 1], [], []>} : vector<256x256xbf16>, vector<256x128xbf16>, vector<256x128xf32> -> vector<256x128xf32>
    %27 = vector.broadcast %1 : vector<1x128xf32> to vector<256x128xf32>
    %28 = arith.addf %26, %27 : vector<256x128xf32>
    %cst_22 = arith.constant 0.000000e+00 : f32
    %29 = vector.broadcast %cst_22 : f32 to vector<256x128xf32>
    %30 = arith.maximumf %28, %29 : vector<256x128xf32>
    %31 = arith.maximumf %23, %30 : vector<256x128xf32>
    %32 = arith.maximumf %16, %31 : vector<256x128xf32>
    %33 = arith.truncf %32 : vector<256x128xf32> to vector<256x128xbf16>
    %c0_23 = arith.constant 0 : index
    %c0_24 = arith.constant 0 : index
    %c0_25 = arith.constant 0 : index
    %34 = vector.load %arg4[%c0_23, %c0_24, %c0_25] : memref<1x256x128xbf16, #tpu.memory_space<vmem>>, vector<1x256x128xbf16>
    %35 = vector.shape_cast %34 : vector<1x256x128xbf16> to vector<256x128xbf16>
    %36 = vector.shape_cast %33 : vector<256x128xbf16> to vector<1x256x128xbf16>
    tpu.vector_store %arg4[%c0_23, %c0_24, %c0_25], %36 {strides = array<i32>} : memref<1x256x128xbf16, #tpu.memory_space<vmem>>, vector<1x256x128xbf16>,
    return
  }
  func.func @transform_0(%arg0: i32) -> (i32, i32, i32, i32) {
    %c0_i32 = arith.constant 0 : i32
    %c0_i32_0 = arith.constant 0 : i32
    %c0_i32_1 = arith.constant 0 : i32
    %c0_i32_2 = arith.constant 0 : i32
    return %arg0, %c0_i32, %c0_i32_0, %c0_i32_1 : i32, i32, i32, i32
  }
  func.func @transform_1(%arg0: i32) -> (i32, i32) {
    %c0_i32 = arith.constant 0 : i32
    %c0_i32_0 = arith.constant 0 : i32
    %c0_i32_1 = arith.constant 0 : i32
    return %c0_i32, %c0_i32_0 : i32, i32
  }
  func.func @transform_2(%arg0: i32) -> (i32, i32) {
    %c0_i32 = arith.constant 0 : i32
    %c0_i32_0 = arith.constant 0 : i32
    %c0_i32_1 = arith.constant 0 : i32
    return %c0_i32, %c0_i32_0 : i32, i32
  }
  func.func @transform_3(%arg0: i32) -> (i32, i32, i32) {
    %c0_i32 = arith.constant 0 : i32
    %c0_i32_0 = arith.constant 0 : i32
    %c0_i32_1 = arith.constant 0 : i32
    return %arg0, %c0_i32, %c0_i32_0 : i32, i32, i32
  }
}

module attributes {stable_mosaic.version = 11 : i64} {
  func.func @_conv_relu_pool_kernel(%arg0: i32, %arg1: memref<1x4x36x384xbf16, #tpu.memory_space<vmem>>, %arg2: memref<384x128xbf16, #tpu.memory_space<vmem>>, %arg3: memref<1x128xf32, #tpu.memory_space<vmem>>, %arg4: memref<1x36x128xbf16, #tpu.memory_space<vmem>>) attributes {dimension_semantics = [#tpu.dimension_semantics<parallel>], iteration_bounds = array<i64: 2>, scalar_prefetch = 0 : i64, scratch_operands = 0 : i64, tpu.core_type = #tpu.core_type<tc>, window_params = [{transform_indices = @transform_0, window_bounds = array<i64: 1, 4, 36, 384>}, {pipeline_mode = #tpu.pipeline_mode<synchronous>, transform_indices = @transform_1, window_bounds = array<i64: 384, 128>}, {pipeline_mode = #tpu.pipeline_mode<synchronous>, transform_indices = @transform_2, window_bounds = array<i64: 1, 128>}, {transform_indices = @transform_3, window_bounds = array<i64: 1, 36, 128>}]} {
    %c0 = arith.constant 0 : index
    %c0_0 = arith.constant 0 : index
    %0 = vector.load %arg2[%c0, %c0_0] : memref<384x128xbf16, #tpu.memory_space<vmem>>, vector<384x128xbf16>
    %c0_1 = arith.constant 0 : index
    %c0_2 = arith.constant 0 : index
    %1 = vector.load %arg3[%c0_1, %c0_2] : memref<1x128xf32, #tpu.memory_space<vmem>>, vector<1x128xf32>
    %c0_3 = arith.constant 0 : index
    %c0_4 = arith.constant 0 : index
    %c0_5 = arith.constant 0 : index
    %c0_6 = arith.constant 0 : index
    %2 = vector.load %arg1[%c0_3, %c0_4, %c0_5, %c0_6] : memref<1x4x36x384xbf16, #tpu.memory_space<vmem>>, vector<1x1x36x384xbf16>
    %3 = vector.shape_cast %2 : vector<1x1x36x384xbf16> to vector<36x384xbf16>
    %cst = arith.constant dense<0.000000e+00> : vector<36x128xf32>
    %4 = tpu.matmul %3, %0, %cst {dimension_numbers = #tpu.dot_dimension_numbers<[1], [0], [0], [1], [0, 0, 1, 1], [], []>} : vector<36x384xbf16>, vector<384x128xbf16>, vector<36x128xf32> -> vector<36x128xf32>
    %5 = vector.broadcast %1 : vector<1x128xf32> to vector<36x128xf32>
    %6 = arith.addf %4, %5 : vector<36x128xf32>
    %cst_7 = arith.constant 0.000000e+00 : f32
    %7 = vector.broadcast %cst_7 : f32 to vector<36x128xf32>
    %8 = arith.maximumf %6, %7 : vector<36x128xf32>
    %c0_8 = arith.constant 0 : index
    %c1 = arith.constant 1 : index
    %c0_9 = arith.constant 0 : index
    %c0_10 = arith.constant 0 : index
    %9 = vector.load %arg1[%c0_8, %c1, %c0_9, %c0_10] : memref<1x4x36x384xbf16, #tpu.memory_space<vmem>>, vector<1x1x36x384xbf16>
    %10 = vector.shape_cast %9 : vector<1x1x36x384xbf16> to vector<36x384xbf16>
    %cst_11 = arith.constant dense<0.000000e+00> : vector<36x128xf32>
    %11 = tpu.matmul %10, %0, %cst_11 {dimension_numbers = #tpu.dot_dimension_numbers<[1], [0], [0], [1], [0, 0, 1, 1], [], []>} : vector<36x384xbf16>, vector<384x128xbf16>, vector<36x128xf32> -> vector<36x128xf32>
    %12 = vector.broadcast %1 : vector<1x128xf32> to vector<36x128xf32>
    %13 = arith.addf %11, %12 : vector<36x128xf32>
    %cst_12 = arith.constant 0.000000e+00 : f32
    %14 = vector.broadcast %cst_12 : f32 to vector<36x128xf32>
    %15 = arith.maximumf %13, %14 : vector<36x128xf32>
    %16 = arith.maximumf %8, %15 : vector<36x128xf32>
    %c0_13 = arith.constant 0 : index
    %c2 = arith.constant 2 : index
    %c0_14 = arith.constant 0 : index
    %c0_15 = arith.constant 0 : index
    %17 = vector.load %arg1[%c0_13, %c2, %c0_14, %c0_15] : memref<1x4x36x384xbf16, #tpu.memory_space<vmem>>, vector<1x1x36x384xbf16>
    %18 = vector.shape_cast %17 : vector<1x1x36x384xbf16> to vector<36x384xbf16>
    %cst_16 = arith.constant dense<0.000000e+00> : vector<36x128xf32>
    %19 = tpu.matmul %18, %0, %cst_16 {dimension_numbers = #tpu.dot_dimension_numbers<[1], [0], [0], [1], [0, 0, 1, 1], [], []>} : vector<36x384xbf16>, vector<384x128xbf16>, vector<36x128xf32> -> vector<36x128xf32>
    %20 = vector.broadcast %1 : vector<1x128xf32> to vector<36x128xf32>
    %21 = arith.addf %19, %20 : vector<36x128xf32>
    %cst_17 = arith.constant 0.000000e+00 : f32
    %22 = vector.broadcast %cst_17 : f32 to vector<36x128xf32>
    %23 = arith.maximumf %21, %22 : vector<36x128xf32>
    %c0_18 = arith.constant 0 : index
    %c3 = arith.constant 3 : index
    %c0_19 = arith.constant 0 : index
    %c0_20 = arith.constant 0 : index
    %24 = vector.load %arg1[%c0_18, %c3, %c0_19, %c0_20] : memref<1x4x36x384xbf16, #tpu.memory_space<vmem>>, vector<1x1x36x384xbf16>
    %25 = vector.shape_cast %24 : vector<1x1x36x384xbf16> to vector<36x384xbf16>
    %cst_21 = arith.constant dense<0.000000e+00> : vector<36x128xf32>
    %26 = tpu.matmul %25, %0, %cst_21 {dimension_numbers = #tpu.dot_dimension_numbers<[1], [0], [0], [1], [0, 0, 1, 1], [], []>} : vector<36x384xbf16>, vector<384x128xbf16>, vector<36x128xf32> -> vector<36x128xf32>
    %27 = vector.broadcast %1 : vector<1x128xf32> to vector<36x128xf32>
    %28 = arith.addf %26, %27 : vector<36x128xf32>
    %cst_22 = arith.constant 0.000000e+00 : f32
    %29 = vector.broadcast %cst_22 : f32 to vector<36x128xf32>
    %30 = arith.maximumf %28, %29 : vector<36x128xf32>
    %31 = arith.maximumf %23, %30 : vector<36x128xf32>
    %32 = arith.maximumf %16, %31 : vector<36x128xf32>
    %33 = arith.truncf %32 : vector<36x128xf32> to vector<36x128xbf16>
    %c0_23 = arith.constant 0 : index
    %c0_24 = arith.constant 0 : index
    %c0_25 = arith.constant 0 : index
    %34 = vector.load %arg4[%c0_23, %c0_24, %c0_25] : memref<1x36x128xbf16, #tpu.memory_space<vmem>>, vector<1x36x128xbf16>
    %35 = vector.shape_cast %34 : vector<1x36x128xbf16> to vector<36x128xbf16>
    %36 = vector.shape_cast %33 : vector<36x128xbf16> to vector<1x36x128xbf16>
    tpu.vector_store %arg4[%c0_23, %c0_24, %c0_25], %36 {strides = array<i32>} : memref<1x36x128xbf16, #tpu.memory_space<vmem>>, vector<1x36x128xbf16>,
    return
  }
  func.func @transform_0(%arg0: i32) -> (i32, i32, i32, i32) {
    %c0_i32 = arith.constant 0 : i32
    %c0_i32_0 = arith.constant 0 : i32
    %c0_i32_1 = arith.constant 0 : i32
    %c0_i32_2 = arith.constant 0 : i32
    return %arg0, %c0_i32, %c0_i32_0, %c0_i32_1 : i32, i32, i32, i32
  }
  func.func @transform_1(%arg0: i32) -> (i32, i32) {
    %c0_i32 = arith.constant 0 : i32
    %c0_i32_0 = arith.constant 0 : i32
    %c0_i32_1 = arith.constant 0 : i32
    return %c0_i32, %c0_i32_0 : i32, i32
  }
  func.func @transform_2(%arg0: i32) -> (i32, i32) {
    %c0_i32 = arith.constant 0 : i32
    %c0_i32_0 = arith.constant 0 : i32
    %c0_i32_1 = arith.constant 0 : i32
    return %c0_i32, %c0_i32_0 : i32, i32
  }
  func.func @transform_3(%arg0: i32) -> (i32, i32, i32) {
    %c0_i32 = arith.constant 0 : i32
    %c0_i32_0 = arith.constant 0 : i32
    %c0_i32_1 = arith.constant 0 : i32
    return %arg0, %c0_i32, %c0_i32_0 : i32, i32, i32
  }
}

module attributes {stable_mosaic.version = 11 : i64} {
  func.func @_tail_kernel(%arg0: i32, %arg1: memref<2x640xbf16, #tpu.memory_space<vmem>>, %arg2: memref<640x128xbf16, #tpu.memory_space<vmem>>, %arg3: memref<1x128xf32, #tpu.memory_space<vmem>>, %arg4: memref<128x128xbf16, #tpu.memory_space<vmem>>, %arg5: memref<1x128xf32, #tpu.memory_space<vmem>>, %arg6: memref<128x128xbf16, #tpu.memory_space<vmem>>, %arg7: memref<1x128xf32, #tpu.memory_space<vmem>>, %arg8: memref<2x128xf32, #tpu.memory_space<vmem>>) attributes {dimension_semantics = [#tpu.dimension_semantics<parallel>], iteration_bounds = array<i64: 1>, scalar_prefetch = 0 : i64, scratch_operands = 0 : i64, tpu.core_type = #tpu.core_type<tc>, window_params = [{transform_indices = @transform_0, window_bounds = array<i64: 2, 640>}, {pipeline_mode = #tpu.pipeline_mode<synchronous>, transform_indices = @transform_1, window_bounds = array<i64: 640, 128>}, {pipeline_mode = #tpu.pipeline_mode<synchronous>, transform_indices = @transform_2, window_bounds = array<i64: 1, 128>}, {pipeline_mode = #tpu.pipeline_mode<synchronous>, transform_indices = @transform_3, window_bounds = array<i64: 128, 128>}, {pipeline_mode = #tpu.pipeline_mode<synchronous>, transform_indices = @transform_4, window_bounds = array<i64: 1, 128>}, {pipeline_mode = #tpu.pipeline_mode<synchronous>, transform_indices = @transform_5, window_bounds = array<i64: 128, 128>}, {pipeline_mode = #tpu.pipeline_mode<synchronous>, transform_indices = @transform_6, window_bounds = array<i64: 1, 128>}, {transform_indices = @transform_7, window_bounds = array<i64: 2, 128>}]} {
    %c0 = arith.constant 0 : index
    %c0_0 = arith.constant 0 : index
    %0 = vector.load %arg1[%c0, %c0_0] : memref<2x640xbf16, #tpu.memory_space<vmem>>, vector<2x640xbf16>
    %c0_1 = arith.constant 0 : index
    %c0_2 = arith.constant 0 : index
    %1 = vector.load %arg2[%c0_1, %c0_2] : memref<640x128xbf16, #tpu.memory_space<vmem>>, vector<640x128xbf16>
    %cst = arith.constant dense<0.000000e+00> : vector<2x128xf32>
    %2 = tpu.matmul %0, %1, %cst {dimension_numbers = #tpu.dot_dimension_numbers<[1], [0], [0], [1], [0, 0, 1, 1], [], []>} : vector<2x640xbf16>, vector<640x128xbf16>, vector<2x128xf32> -> vector<2x128xf32>
    %c0_3 = arith.constant 0 : index
    %c0_4 = arith.constant 0 : index
    %3 = vector.load %arg3[%c0_3, %c0_4] : memref<1x128xf32, #tpu.memory_space<vmem>>, vector<1x128xf32>
    %4 = vector.broadcast %3 : vector<1x128xf32> to vector<2x128xf32>
    %5 = arith.addf %2, %4 : vector<2x128xf32>
    %6 = arith.truncf %5 : vector<2x128xf32> to vector<2x128xbf16>
    %c0_5 = arith.constant 0 : index
    %c0_6 = arith.constant 0 : index
    %7 = vector.load %arg4[%c0_5, %c0_6] : memref<128x128xbf16, #tpu.memory_space<vmem>>, vector<128x128xbf16>
    %cst_7 = arith.constant dense<0.000000e+00> : vector<2x128xf32>
    %8 = tpu.matmul %6, %7, %cst_7 {dimension_numbers = #tpu.dot_dimension_numbers<[1], [0], [0], [1], [0, 0, 1, 1], [], []>} : vector<2x128xbf16>, vector<128x128xbf16>, vector<2x128xf32> -> vector<2x128xf32>
    %c0_8 = arith.constant 0 : index
    %c0_9 = arith.constant 0 : index
    %9 = vector.load %arg5[%c0_8, %c0_9] : memref<1x128xf32, #tpu.memory_space<vmem>>, vector<1x128xf32>
    %10 = vector.broadcast %9 : vector<1x128xf32> to vector<2x128xf32>
    %11 = arith.addf %8, %10 : vector<2x128xf32>
    %cst_10 = arith.constant 0.000000e+00 : f32
    %12 = vector.broadcast %cst_10 : f32 to vector<2x128xf32>
    %13 = arith.maximumf %11, %12 : vector<2x128xf32>
    %14 = arith.truncf %13 : vector<2x128xf32> to vector<2x128xbf16>
    %c0_11 = arith.constant 0 : index
    %c0_12 = arith.constant 0 : index
    %15 = vector.load %arg6[%c0_11, %c0_12] : memref<128x128xbf16, #tpu.memory_space<vmem>>, vector<128x128xbf16>
    %cst_13 = arith.constant dense<0.000000e+00> : vector<2x128xf32>
    %16 = tpu.matmul %14, %15, %cst_13 {dimension_numbers = #tpu.dot_dimension_numbers<[1], [0], [0], [1], [0, 0, 1, 1], [], []>} : vector<2x128xbf16>, vector<128x128xbf16>, vector<2x128xf32> -> vector<2x128xf32>
    %c0_14 = arith.constant 0 : index
    %c0_15 = arith.constant 0 : index
    %17 = vector.load %arg7[%c0_14, %c0_15] : memref<1x128xf32, #tpu.memory_space<vmem>>, vector<1x128xf32>
    %18 = vector.broadcast %17 : vector<1x128xf32> to vector<2x128xf32>
    %19 = arith.addf %16, %18 : vector<2x128xf32>
    %cst_16 = arith.constant 0.000000e+00 : f32
    %20 = vector.broadcast %cst_16 : f32 to vector<2x128xf32>
    %21 = arith.maximumf %19, %20 : vector<2x128xf32>
    %22 = tpu.iota {dimensions = array<i32: 1>} : vector<2x128xi32>
    %c10_i32 = arith.constant 10 : i32
    %23 = vector.broadcast %c10_i32 : i32 to vector<2x128xi32>
    %24 = arith.cmpi slt, %22, %23 : vector<2x128xi32>
    %cst_17 = arith.constant -1.000000e+30 : f32
    %25 = vector.broadcast %cst_17 : f32 to vector<2x128xf32>
    %26 = arith.select %24, %21, %25 : vector<2x128xi1>, vector<2x128xf32>
    %cst_18 = arith.constant dense<0xFF800000> : vector<2xf32>
    %27 = vector.multi_reduction <maximumf>, %26, %cst_18 [1] : vector<2x128xf32> to vector<2xf32>
    %28 = vector.shape_cast %27 : vector<2xf32> to vector<2x1xf32>
    %29 = vector.broadcast %28 : vector<2x1xf32> to vector<2x128xf32>
    %30 = arith.subf %26, %29 : vector<2x128xf32>
    %31 = math.exp %30 : vector<2x128xf32>
    %cst_19 = arith.constant dense<0.000000e+00> : vector<2xf32>
    %32 = vector.multi_reduction <add>, %31, %cst_19 [1] : vector<2x128xf32> to vector<2xf32>
    %33 = vector.shape_cast %32 : vector<2xf32> to vector<2x1xf32>
    %34 = math.log %33 : vector<2x1xf32>
    %35 = vector.broadcast %34 : vector<2x1xf32> to vector<2x128xf32>
    %36 = arith.subf %30, %35 : vector<2x128xf32>
    %c0_20 = arith.constant 0 : index
    %c0_21 = arith.constant 0 : index
    %37 = vector.load %arg8[%c0_20, %c0_21] : memref<2x128xf32, #tpu.memory_space<vmem>>, vector<2x128xf32>
    tpu.vector_store %arg8[%c0_20, %c0_21], %36 {strides = array<i32>} : memref<2x128xf32, #tpu.memory_space<vmem>>, vector<2x128xf32>,
    return
  }
  func.func @transform_0(%arg0: i32) -> (i32, i32) {
    %c0_i32 = arith.constant 0 : i32
    %c0_i32_0 = arith.constant 0 : i32
    return %arg0, %c0_i32 : i32, i32
  }
  func.func @transform_1(%arg0: i32) -> (i32, i32) {
    %c0_i32 = arith.constant 0 : i32
    %c0_i32_0 = arith.constant 0 : i32
    %c0_i32_1 = arith.constant 0 : i32
    return %c0_i32, %c0_i32_0 : i32, i32
  }
  func.func @transform_2(%arg0: i32) -> (i32, i32) {
    %c0_i32 = arith.constant 0 : i32
    %c0_i32_0 = arith.constant 0 : i32
    %c0_i32_1 = arith.constant 0 : i32
    return %c0_i32, %c0_i32_0 : i32, i32
  }
  func.func @transform_3(%arg0: i32) -> (i32, i32) {
    %c0_i32 = arith.constant 0 : i32
    %c0_i32_0 = arith.constant 0 : i32
    %c0_i32_1 = arith.constant 0 : i32
    return %c0_i32, %c0_i32_0 : i32, i32
  }
  func.func @transform_4(%arg0: i32) -> (i32, i32) {
    %c0_i32 = arith.constant 0 : i32
    %c0_i32_0 = arith.constant 0 : i32
    %c0_i32_1 = arith.constant 0 : i32
    return %c0_i32, %c0_i32_0 : i32, i32
  }
  func.func @transform_5(%arg0: i32) -> (i32, i32) {
    %c0_i32 = arith.constant 0 : i32
    %c0_i32_0 = arith.constant 0 : i32
    %c0_i32_1 = arith.constant 0 : i32
    return %c0_i32, %c0_i32_0 : i32, i32
  }
  func.func @transform_6(%arg0: i32) -> (i32, i32) {
    %c0_i32 = arith.constant 0 : i32
    %c0_i32_0 = arith.constant 0 : i32
    %c0_i32_1 = arith.constant 0 : i32
    return %c0_i32, %c0_i32_0 : i32, i32
  }
  func.func @transform_7(%arg0: i32) -> (i32, i32) {
    %c0_i32 = arith.constant 0 : i32
    %c0_i32_0 = arith.constant 0 : i32
    return %arg0, %c0_i32 : i32, i32
  }
}

</mosaic_0001>

<llo_original>
// kernel: lenet_k6_forward.3
$region0: #{lenet_k6_forward.3}
  #allocation0 [shape = 'u32[]', space=smem, size = 0x4, offset = 0x4, fixed_abs, tag = 'smem constant byte address 0x4 - core index']
  #allocation1 [shape = 'u32[144,128]{1,0:T(1,128)}', space=vmem, size = 0x12000, scoped, tag = 'internal scratch']
  %s0 = inlined_call_operand.vmem [shape: bf16[2,4,256,256], index: 0, kind: input, shape index: {}]
  %s1 = inlined_call_operand.vmem [shape: bf16[256,128], index: 1, kind: input, shape index: {}]
  %s2 = inlined_call_operand.vmem [shape: f32[1,128], index: 2, kind: input, shape index: {}]
  %s3 = inlined_call_operand.vmem [shape: bf16[2,256,128], index: 3, kind: output, shape index: {}]
  %s4 = sld [smem:[#allocation0]]
  $region45: #{lenet_k6_forward.3} parent=0
    _
  %s6 = ssub.s32 1, %s4
  %s7 = scalar_select 0, %s6, %s4
  loop: start=0, step=1, limit=4
  $region2: #{lenet_k6_forward.3} parent=0 // loop_pre_header
    _
  $region3: #{lenet_k6_forward.3} parent=0 // loop_header
    %s9 = sphi 0, %s13
    %p10 = scmp.ge.s32.totalorder %s9, 4
    %s19 = sphi 0, %s21
    %s22 = sphi 0, %s19
    %s23 = sphi 0, %s22
    %s39 = sphi 0, %s23
    %s43 = sphi 0, %s43
    %s45 = sphi 0, %s43
    %s46 = sphi 0, %s45
    %s60 = sphi 0, %s46
    %s64 = sphi 0, %s64
    %s66 = sphi 0, %s64
    %s67 = sphi 0, %s66
    %s81 = sphi 0, %s67
    %s87 = sphi 0, %s89
    %s90 = sphi 0, %s87
    %s91 = sphi 0, %s90
    %s107 = sphi 0, %s91
  $region4: #{lenet_k6_forward.3} parent=0 // loop_header_branch
    %12 = sbr.rel (%p10) target = $region8
  $region5: #{lenet_k6_forward.3} parent=0 // loop_body
    %s14 = ssub.s32 %s9, 1
    %s15 = ssub.s32 %s9, 2
    %s16 = sadd.s32 %s9, 1
    %s17 = ssub.s32 %s9, %s16
    %p18 = scmp.eq.s32.totalorder %s17, 0
    %s20 = sadd.s32 %s19, 1
    %s21 = scalar_select %p18, %s19, %s20
    %p24 = pneg %p18
    %p25 = scmp.eq.s32.totalorder %s9, 1
    %p26 = por %p24, %p25
    %p27 = scmp.ne.s32.totalorder %s19, %s22
    %p28 = scmp.eq.s32.totalorder %s9, 0
    %p29 = por %p27, %p28
    %p30 = scmp.ne.s32.totalorder %s19, %s22
    %p31 = scmp.eq.s32.totalorder %s14, 1
    %p32 = por %p30, %p31
    %p33 = scmp.ne.s32.totalorder %s22, %s23
    %p34 = scmp.eq.s32.totalorder %s14, 0
    %p35 = por %p33, %p34
    %p36 = scmp.ne.s32.totalorder %s22, %s23
    %p37 = scmp.eq.s32.totalorder %s15, 1
    %p38 = por %p36, %p37
    %p40 = scmp.ne.s32.totalorder %s23, %s39
    %p41 = scmp.eq.s32.totalorder %s15, 0
    %p42 = por %p40, %p41
    %s44 = sadd.s32 %s43, 1
    %p47 = scmp.eq.s32.totalorder %s9, 1
    %p48 = scmp.ne.s32.totalorder %s43, %s45
    %p49 = scmp.eq.s32.totalorder %s9, 0
    %p50 = por %p48, %p49
    %p51 = scmp.ne.s32.totalorder %s43, %s45
    %p52 = scmp.eq.s32.totalorder %s14, 1
    %p53 = por %p51, %p52
    %p54 = scmp.ne.s32.totalorder %s45, %s46
    %p55 = scmp.eq.s32.totalorder %s14, 0
    %p56 = por %p54, %p55
    %p57 = scmp.ne.s32.totalorder %s45, %s46
    %p58 = scmp.eq.s32.totalorder %s15, 1
    %p59 = por %p57, %p58
    %p61 = scmp.ne.s32.totalorder %s46, %s60
    %p62 = scmp.eq.s32.totalorder %s15, 0
    %p63 = por %p61, %p62
    %s65 = sadd.s32 %s64, 1
    %p68 = scmp.eq.s32.totalorder %s9, 1
    %p69 = scmp.ne.s32.totalorder %s64, %s66
    %p70 = scmp.eq.s32.totalorder %s9, 0
    %p71 = por %p69, %p70
    %p72 = scmp.ne.s32.totalorder %s64, %s66
    %p73 = scmp.eq.s32.totalorder %s14, 1
    %p74 = por %p72, %p73
    %p75 = scmp.ne.s32.totalorder %s66, %s67
    %p76 = scmp.eq.s32.totalorder %s14, 0
    %p77 = por %p75, %p76
    %p78 = scmp.ne.s32.totalorder %s66, %s67
    %p79 = scmp.eq.s32.totalorder %s15, 1
    %p80 = por %p78, %p79
    %p82 = scmp.ne.s32.totalorder %s67, %s81
    %p83 = scmp.eq.s32.totalorder %s15, 0
    %p84 = por %p82, %p83
    %s85 = ssub.s32 %s9, %s16
    %p86 = scmp.eq.s32.totalorder %s85, 0
    %s88 = sadd.s32 %s87, 1
    %s89 = scalar_select %p86, %s87, %s88
    %p92 = pneg %p86
    %p93 = scmp.eq.s32.totalorder %s9, 1
    %p94 = por %p92, %p93
    %p95 = scmp.ne.s32.totalorder %s87, %s90
    %p96 = scmp.eq.s32.totalorder %s9, 0
    %p97 = por %p95, %p96
    %p98 = scmp.ne.s32.totalorder %s87, %s90
    %p99 = scmp.eq.s32.totalorder %s14, 1
    %p100 = por %p98, %p99
    %p101 = scmp.ne.s32.totalorder %s90, %s91
    %p102 = scmp.eq.s32.totalorder %s14, 0
    %p103 = por %p101, %p102
    %p104 = scmp.ne.s32.totalorder %s90, %s91
    %p105 = scmp.eq.s32.totalorder %s15, 1
    %p106 = por %p104, %p105
    %p108 = scmp.ne.s32.totalorder %s91, %s107
    %p109 = scmp.eq.s32.totalorder %s15, 0
    %p110 = por %p108, %p109
    %p111 = scmp.le.s32.totalorder 1, %s9
    %p112 = scmp.lt.s32.totalorder %s9, 3
    %p113 = pnand %p111, %p112
    %p114 = pneg %p113
    // Predicated region
    $region9: #{lenet_k6_forward.3} parent=5 // pred_check
      _
    $region10: #{lenet_k6_forward.3} parent=5 // pred_check_branch
      %116 = sbr.rel (%p113) target = $region12
    $region11: #{lenet_k6_forward.3} parent=5 // pred_region
      %s117 = ssub.s32 %s9, 1
      // Predicated region
      $region13: #{lenet_k6_forward.3} parent=11 // pred_check
        %p118 = pneg %p56
      $region14: #{lenet_k6_forward.3} parent=11 // pred_check_branch
        %120 = sbr.rel (%p118) target = $region16
      $region15: #{lenet_k6_forward.3} parent=11 // pred_region
        _
      $region16: #{lenet_k6_forward.3} parent=11 // pred_fallthru
        _
      // Predicated region
      $region17: #{lenet_k6_forward.3} parent=11 // pred_check
        %p121 = pneg %p77
      $region18: #{lenet_k6_forward.3} parent=11 // pred_check_branch
        %123 = sbr.rel (%p121) target = $region20
      $region19: #{lenet_k6_forward.3} parent=11 // pred_region
        _
      $region20: #{lenet_k6_forward.3} parent=11 // pred_fallthru
        _
    $region12: #{lenet_k6_forward.3} parent=5 // pred_fallthru
      _
    %p124 = scmp.lt.s32.totalorder %s9, 2
    // Predicated region
    $region21: #{lenet_k6_forward.3} parent=5 // pred_check
      %p125 = pneg %p124
    $region22: #{lenet_k6_forward.3} parent=5 // pred_check_branch
      %127 = sbr.rel (%p125) target = $region24
    $region23: #{lenet_k6_forward.3} parent=5 // pred_region
      // Predicated region
      $region25: #{lenet_k6_forward.3} parent=23 // pred_check
        %p128 = pneg %p29
      $region26: #{lenet_k6_forward.3} parent=23 // pred_check_branch
        %130 = sbr.rel (%p128) target = $region28
      $region27: #{lenet_k6_forward.3} parent=23 // pred_region
        %p131 = scmp.lt.s32.totalorder %s9, 1
        %s132 = scalar_select %p131, %s9, 1
        %s133 = smul.addr %s132, 256
        %s134 = smul.addr %s133, 4
        %s135 = scalar_lea.vmem %s0, %s134
      $region28: #{lenet_k6_forward.3} parent=23 // pred_fallthru
        _
    $region24: #{lenet_k6_forward.3} parent=5 // pred_fallthru
      _
    %p136 = scmp.le.s32.totalorder 1, %s9
    %p137 = scmp.lt.s32.totalorder %s9, 3
    %p138 = pnand %p136, %p137
    %p139 = pneg %p138
    // Predicated region
    $region29: #{lenet_k6_forward.3} parent=5 // pred_check
      _
    $region30: #{lenet_k6_forward.3} parent=5 // pred_check_branch
      %141 = sbr.rel (%p138) target = $region32
    $region31: #{lenet_k6_forward.3} parent=5 // pred_region
      %s142 = ssub.s32 %s9, 1
      %p143 = scmp.lt.s32.totalorder %s14, 1
      %s144 = scalar_select %p143, %s14, 1
      %s145 = smul.addr %s144, 256
      %s146 = smul.addr %s145, 4
      %s147 = scalar_lea.vmem %s0, %s146
      %p148 = pneg %p35
      %p149 = pneg %p32
      %p150 = pneg %p56
      %p151 = pneg %p53
      %p152 = pneg %p77
      %p153 = pneg %p74
      %p154 = pneg %p103
      %p155 = pneg %p100
      %p156 = scmp.lt.s32.totalorder %s14, 1
      %s157 = scalar_select %p156, %s14, 1
      %s158 = smul.addr %s157, 32
      %s159 = smul.addr %s158, 4
      %s160 = scalar_lea.vmem %s3, %s159
      %p161 = scmp.lt.s32.totalorder %s14, 1
      %s162 = scalar_select %p161, %s14, 1
      %s163 = smul.addr %s162, 256
      %s164 = smul.addr %s163, 4
      %s165 = scalar_lea.vmem %s0, %s164
      %p166 = scmp.lt.s32.totalorder %s14, 1
      %s167 = scalar_select %p166, %s14, 1
      %s168 = smul.addr %s167, 32
      %s169 = smul.addr %s168, 4
      %s170 = scalar_lea.vmem %s3, %s169
      %v172 = vld [vmem:[%s1] sm:$0xf]
      %v173 = vld [vmem:[%s1 + $0x4] sm:$0xf]
      %v174 = vld [vmem:[%s1 + $0x8] sm:$0xf]
      %v175 = vld [vmem:[%s1 + $0xc] sm:$0xf]
      %v176 = vld [vmem:[%s1 + $0x10] sm:$0xf]
      %v177 = vld [vmem:[%s1 + $0x14] sm:$0xf]
      %v178 = vld [vmem:[%s1 + $0x18] sm:$0xf]
      %v179 = vld [vmem:[%s1 + $0x1c] sm:$0xf]
      %v180 = vld [vmem:[%s1 + $0x20] sm:$0xf]
      %v181 = vld [vmem:[%s1 + $0x24] sm:$0xf]
      %v182 = vld [vmem:[%s1 + $0x28] sm:$0xf]
      %v183 = vld [vmem:[%s1 + $0x2c] sm:$0xf]
      %v184 = vld [vmem:[%s1 + $0x30] sm:$0xf]
      %v185 = vld [vmem:[%s1 + $0x34] sm:$0xf]
      %v186 = vld [vmem:[%s1 + $0x38] sm:$0xf]
      %v187 = vld [vmem:[%s1 + $0x3c] sm:$0xf]
      %v188 = vld [vmem:[%s1 + $0x40] sm:$0xf]
      %v189 = vld [vmem:[%s1 + $0x44] sm:$0xf]
      %v190 = vld [vmem:[%s1 + $0x48] sm:$0xf]
      %v191 = vld [vmem:[%s1 + $0x4c] sm:$0xf]
      %v192 = vld [vmem:[%s1 + $0x50] sm:$0xf]
      %v193 = vld [vmem:[%s1 + $0x54] sm:$0xf]
      %v194 = vld [vmem:[%s1 + $0x58] sm:$0xf]
      %v195 = vld [vmem:[%s1 + $0x5c] sm:$0xf]
      %v196 = vld [vmem:[%s1 + $0x60] sm:$0xf]
      %v197 = vld [vmem:[%s1 + $0x64] sm:$0xf]
      %v198 = vld [vmem:[%s1 + $0x68] sm:$0xf]
      %v199 = vld [vmem:[%s1 + $0x6c] sm:$0xf]
      %v200 = vld [vmem:[%s1 + $0x70] sm:$0xf]
      %v201 = vld [vmem:[%s1 + $0x74] sm:$0xf]
      %v202 = vld [vmem:[%s1 + $0x78] sm:$0xf]
      %v203 = vld [vmem:[%s1 + $0x7c] sm:$0xf]
      %v204 = vld [vmem:[%s2] sm:$0x1]
      %v205 = vld [vmem:[%s165] sm:$0xff]
      %v206 = vld [vmem:[%s165 + $0x8] sm:$0xff]
      %v207 = vld [vmem:[%s165 + $0x10] sm:$0xff]
      %v208 = vld [vmem:[%s165 + $0x18] sm:$0xff]
      %v209 = vld [vmem:[%s165 + $0x20] sm:$0xff]
      %v210 = vld [vmem:[%s165 + $0x28] sm:$0xff]
      %v211 = vld [vmem:[%s165 + $0x30] sm:$0xff]
      %v212 = vld [vmem:[%s165 + $0x38] sm:$0xff]
      %v213 = vld [vmem:[%s165 + $0x40] sm:$0xff]
      %v214 = vld [vmem:[%s165 + $0x48] sm:$0xff]
      %v215 = vld [vmem:[%s165 + $0x50] sm:$0xff]
      %v216 = vld [vmem:[%s165 + $0x58] sm:$0xff]
      %v217 = vld [vmem:[%s165 + $0x60] sm:$0xff]
      %v218 = vld [vmem:[%s165 + $0x68] sm:$0xff]
      %v219 = vld [vmem:[%s165 + $0x70] sm:$0xff]
      %v220 = vld [vmem:[%s165 + $0x78] sm:$0xff]
      %v221 = vld [vmem:[%s165 + $0x80] sm:$0xff]
      %v222 = vld [vmem:[%s165 + $0x88] sm:$0xff]
      %v223 = vld [vmem:[%s165 + $0x90] sm:$0xff]
      %v224 = vld [vmem:[%s165 + $0x98] sm:$0xff]
      %v225 = vld [vmem:[%s165 + $0xa0] sm:$0xff]
      %v226 = vld [vmem:[%s165 + $0xa8] sm:$0xff]
      %v227 = vld [vmem:[%s165 + $0xb0] sm:$0xff]
      %v228 = vld [vmem:[%s165 + $0xb8] sm:$0xff]
      %v229 = vld [vmem:[%s165 + $0xc0] sm:$0xff]
      %v230 = vld [vmem:[%s165 + $0xc8] sm:$0xff]
      %v231 = vld [vmem:[%s165 + $0xd0] sm:$0xff]
      %v232 = vld [vmem:[%s165 + $0xd8] sm:$0xff]
      %v233 = vld [vmem:[%s165 + $0xe0] sm:$0xff]
      %v234 = vld [vmem:[%s165 + $0xe8] sm:$0xff]
      %v235 = vld [vmem:[%s165 + $0xf0] sm:$0xff]
      %v236 = vld [vmem:[%s165 + $0xf8] sm:$0xff]
      %v238 = vlaneseq
      %v239 = vshrl.u32 %v238, 7
      %v240 = vsub.s32 0, %v239
      %v241 = vrot.slane %v204, %v240
      %v275 = vunpack.c.l.b16 %v205
      %v276 = vunpack.c.h.b16 %v205
      %v277 = vunpack.c.l.b16 %v206
      %v278 = vunpack.c.h.b16 %v206
      %v279 = vunpack.c.l.b16 %v207
      %v280 = vunpack.c.h.b16 %v207
      %v281 = vunpack.c.l.b16 %v208
      %v282 = vunpack.c.h.b16 %v208
      %v283 = vunpack.c.l.b16 %v209
      %v284 = vunpack.c.h.b16 %v209
      %v285 = vunpack.c.l.b16 %v210
      %v286 = vunpack.c.h.b16 %v210
      %v287 = vunpack.c.l.b16 %v211
      %v288 = vunpack.c.h.b16 %v211
      %v289 = vunpack.c.l.b16 %v212
      %v290 = vunpack.c.h.b16 %v212
      %v291 = vunpack.c.l.b16 %v213
      %v292 = vunpack.c.h.b16 %v213
      %v293 = vunpack.c.l.b16 %v214
      %v294 = vunpack.c.h.b16 %v214
      %v295 = vunpack.c.l.b16 %v215
      %v296 = vunpack.c.h.b16 %v215
      %v297 = vunpack.c.l.b16 %v216
      %v298 = vunpack.c.h.b16 %v216
      %v299 = vunpack.c.l.b16 %v217
      %v300 = vunpack.c.h.b16 %v217
      %v301 = vunpack.c.l.b16 %v218
      %v302 = vunpack.c.h.b16 %v218
      %v303 = vunpack.c.l.b16 %v219
      %v304 = vunpack.c.h.b16 %v219
      %v305 = vunpack.c.l.b16 %v220
      %v306 = vunpack.c.h.b16 %v220
      %v307 = vunpack.c.l.b16 %v221
      %v308 = vunpack.c.h.b16 %v221
      %v309 = vunpack.c.l.b16 %v222
      %v310 = vunpack.c.h.b16 %v222
      %v311 = vunpack.c.l.b16 %v223
      %v312 = vunpack.c.h.b16 %v223
      %v313 = vunpack.c.l.b16 %v224
      %v314 = vunpack.c.h.b16 %v224
      %v315 = vunpack.c.l.b16 %v225
      %v316 = vunpack.c.h.b16 %v225
      %v317 = vunpack.c.l.b16 %v226
      %v318 = vunpack.c.h.b16 %v226
      %v319 = vunpack.c.l.b16 %v227
      %v320 = vunpack.c.h.b16 %v227
      %v321 = vunpack.c.l.b16 %v228
      %v322 = vunpack.c.h.b16 %v228
      %v323 = vunpack.c.l.b16 %v229
      %v324 = vunpack.c.h.b16 %v229
      %v325 = vunpack.c.l.b16 %v230
      %v326 = vunpack.c.h.b16 %v230
      %v327 = vunpack.c.l.b16 %v231
      %v328 = vunpack.c.h.b16 %v231
      %v329 = vunpack.c.l.b16 %v232
      %v330 = vunpack.c.h.b16 %v232
      %v331 = vunpack.c.l.b16 %v233
      %v332 = vunpack.c.h.b16 %v233
      %v333 = vunpack.c.l.b16 %v234
      %v334 = vunpack.c.h.b16 %v234
      %v335 = vunpack.c.l.b16 %v235
      %v336 = vunpack.c.h.b16 %v235
      %v337 = vunpack.c.l.b16 %v236
      %v338 = vunpack.c.h.b16 %v236
      %v339 = vpack.c.b16 %v277, %v275
      %v340 = vpack.c.b16 %v278, %v276
      %v341 = vpack.c.b16 %v281, %v279
      %v342 = vpack.c.b16 %v282, %v280
      %v343 = vpack.c.b16 %v285, %v283
      %v344 = vpack.c.b16 %v286, %v284
      %v345 = vpack.c.b16 %v289, %v287
      %v346 = vpack.c.b16 %v290, %v288
      %v347 = vpack.c.b16 %v293, %v291
      %v348 = vpack.c.b16 %v294, %v292
      %v349 = vpack.c.b16 %v297, %v295
      %v350 = vpack.c.b16 %v298, %v296
      %v351 = vpack.c.b16 %v301, %v299
      %v352 = vpack.c.b16 %v302, %v300
      %v353 = vpack.c.b16 %v305, %v303
      %v354 = vpack.c.b16 %v306, %v304
      %v355 = vpack.c.b16 %v309, %v307
      %v356 = vpack.c.b16 %v310, %v308
      %v357 = vpack.c.b16 %v313, %v311
      %v358 = vpack.c.b16 %v314, %v312
      %v359 = vpack.c.b16 %v317, %v315
      %v360 = vpack.c.b16 %v318, %v316
      %v361 = vpack.c.b16 %v321, %v319
      %v362 = vpack.c.b16 %v322, %v320
      %v363 = vpack.c.b16 %v325, %v323
      %v364 = vpack.c.b16 %v326, %v324
      %v365 = vpack.c.b16 %v329, %v327
      %v366 = vpack.c.b16 %v330, %v328
      %v367 = vpack.c.b16 %v333, %v331
      %v368 = vpack.c.b16 %v334, %v332
      %v369 = vpack.c.b16 %v337, %v335
      %v370 = vpack.c.b16 %v338, %v336
      %v435 = vunpack.c.l.b16 %v172
      %v436 = vunpack.c.l.b16 %v173
      %v437 = vunpack.c.l.b16 %v174
      %v438 = vunpack.c.l.b16 %v175
      %v439 = vunpack.c.l.b16 %v176
      %v440 = vunpack.c.l.b16 %v177
      %v441 = vunpack.c.l.b16 %v178
      %v442 = vunpack.c.l.b16 %v179
      %v443 = vunpack.c.l.b16 %v180
      %v444 = vunpack.c.l.b16 %v181
      %v445 = vunpack.c.l.b16 %v182
      %v446 = vunpack.c.l.b16 %v183
      %v447 = vunpack.c.l.b16 %v184
      %v448 = vunpack.c.l.b16 %v185
      %v449 = vunpack.c.l.b16 %v186
      %v450 = vunpack.c.l.b16 %v187
      %v451 = vunpack.c.l.b16 %v188
      %v452 = vunpack.c.l.b16 %v189
      %v453 = vunpack.c.l.b16 %v190
      %v454 = vunpack.c.l.b16 %v191
      %v455 = vunpack.c.l.b16 %v192
      %v456 = vunpack.c.l.b16 %v193
      %v457 = vunpack.c.l.b16 %v194
      %v458 = vunpack.c.l.b16 %v195
      %v459 = vunpack.c.l.b16 %v196
      %v460 = vunpack.c.l.b16 %v197
      %v461 = vunpack.c.l.b16 %v198
      %v462 = vunpack.c.l.b16 %v199
      %v463 = vunpack.c.l.b16 %v200
      %v464 = vunpack.c.l.b16 %v201
      %v465 = vunpack.c.l.b16 %v202
      %v466 = vunpack.c.l.b16 %v203
      %v467 = vpack.c.b16 %v436, %v435
      %v468 = vpack.c.b16 %v438, %v437
      %v469 = vpack.c.b16 %v440, %v439
      %v470 = vpack.c.b16 %v442, %v441
      %v471 = vpack.c.b16 %v444, %v443
      %v472 = vpack.c.b16 %v446, %v445
      %v473 = vpack.c.b16 %v448, %v447
      %v474 = vpack.c.b16 %v450, %v449
      %v475 = vpack.c.b16 %v452, %v451
      %v476 = vpack.c.b16 %v454, %v453
      %v477 = vpack.c.b16 %v456, %v455
      %v478 = vpack.c.b16 %v458, %v457
      %v479 = vpack.c.b16 %v460, %v459
      %v480 = vpack.c.b16 %v462, %v461
      %v481 = vpack.c.b16 %v464, %v463
      %v482 = vpack.c.b16 %v466, %v465
      %499 = vmatprep.subr.bf16.mxu0 0
      %500 = vmatpush1.bf16.msra.mxu0 %v474
      %501 = vmatprep.subr.bf16.mxu0 0
      %502 = vmatpush1.bf16.msra.mxu0 %v473
      %503 = vmatprep.subr.bf16.mxu0 0
      %504 = vmatpush1.bf16.msra.mxu0 %v472
      %505 = vmatprep.subr.bf16.mxu0 0
      %506 = vmatpush1.bf16.msra.mxu0 %v471
      %507 = vmatprep.subr.bf16.mxu0 0
      %508 = vmatpush1.bf16.msra.mxu0 %v470
      %509 = vmatprep.subr.bf16.mxu0 0
      %510 = vmatpush1.bf16.msra.mxu0 %v469
      %511 = vmatprep.subr.bf16.mxu0 0
      %512 = vmatpush1.bf16.msra.mxu0 %v468
      %513 = vmatprep.subr.bf16.mxu0 0
      %514 = vmatpush1.bf16.msra.mxu0 %v467
      %515 = vmatprep.subr.bf16.mxu0 0
      %516 = vmatpush2.bf16.msra.mxu0 %v482
      %517 = vmatprep.subr.bf16.mxu0 0
      %518 = vmatpush2.bf16.msra.mxu0 %v481
      %519 = vmatprep.subr.bf16.mxu0 0
      %520 = vmatpush2.bf16.msra.mxu0 %v480
      %521 = vmatprep.subr.bf16.mxu0 0
      %522 = vmatpush2.bf16.msra.mxu0 %v479
      %523 = vmatprep.subr.bf16.mxu0 0
      %524 = vmatpush2.bf16.msra.mxu0 %v478
      %525 = vmatprep.subr.bf16.mxu0 0
      %526 = vmatpush2.bf16.msra.mxu0 %v477
      %527 = vmatprep.subr.bf16.mxu0 0
      %528 = vmatpush2.bf16.msra.mxu0 %v476
      %529 = vmatprep.subr.bf16.mxu0 0
      %530 = vmatpush2.bf16.msra.mxu0 %v475
      %531 = vmatprep.mubr.bf16.mxu0 %v340
      %532 = vmatmul.mubr.bf16.gmra.mxu0 %v339
      %v533 = vpop.f32.mrf.mxu0
      %v534 = vadd.f32 %v241, %v533
      %v535 = vpop.f32.mrf.mxu0
      %v536 = vpop.f32.mrf.mxu0
      %v537 = vadd.f32 %v241, %v536
      %v538 = vpop.f32.mrf.mxu0
      %539 = vmatprep.mubr.bf16.mxu0 %v342
      %540 = vmatmul.mubr.bf16.gmra.mxu0 %v341
      %v541 = vpop.f32.mrf.mxu0
      %v542 = vadd.f32 %v241, %v541
      %v543 = vpop.f32.mrf.mxu0
      %v544 = vpop.f32.mrf.mxu0
      %v545 = vadd.f32 %v241, %v544
      %v546 = vpop.f32.mrf.mxu0
      %547 = vmatprep.mubr.bf16.mxu0 %v344
      %548 = vmatmul.mubr.bf16.gmra.mxu0 %v343
      %v549 = vpop.f32.mrf.mxu0
      %v550 = vadd.f32 %v241, %v549
      %v551 = vpop.f32.mrf.mxu0
      %v552 = vpop.f32.mrf.mxu0
      %v553 = vadd.f32 %v241, %v552
      %v554 = vpop.f32.mrf.mxu0
      %555 = vmatprep.mubr.bf16.mxu0 %v346
      %556 = vmatmul.mubr.bf16.gmra.mxu0 %v345
      %v557 = vpop.f32.mrf.mxu0
      %v558 = vadd.f32 %v241, %v557
      %v559 = vpop.f32.mrf.mxu0
      %v560 = vpop.f32.mrf.mxu0
      %v561 = vadd.f32 %v241, %v560
      %v562 = vpop.f32.mrf.mxu0
      %563 = vmatprep.mubr.bf16.mxu0 %v348
      %564 = vmatmul.mubr.bf16.gmra.mxu0 %v347
      %v565 = vpop.f32.mrf.mxu0
      %v566 = vadd.f32 %v241, %v565
      %v567 = vpop.f32.mrf.mxu0
      %v568 = vpop.f32.mrf.mxu0
      %v569 = vadd.f32 %v241, %v568
      %v570 = vpop.f32.mrf.mxu0
      %571 = vmatprep.mubr.bf16.mxu0 %v350
      %572 = vmatmul.mubr.bf16.gmra.mxu0 %v349
      %v573 = vpop.f32.mrf.mxu0
      %v574 = vadd.f32 %v241, %v573
      %v575 = vpop.f32.mrf.mxu0
      %v576 = vpop.f32.mrf.mxu0
      %v577 = vadd.f32 %v241, %v576
      %v578 = vpop.f32.mrf.mxu0
      %579 = vmatprep.mubr.bf16.mxu0 %v352
      %580 = vmatmul.mubr.bf16.gmra.mxu0 %v351
      %v581 = vpop.f32.mrf.mxu0
      %v582 = vadd.f32 %v241, %v581
      %v583 = vpop.f32.mrf.mxu0
      %v584 = vpop.f32.mrf.mxu0
      %v585 = vadd.f32 %v241, %v584
      %v586 = vpop.f32.mrf.mxu0
      %587 = vmatprep.mubr.bf16.mxu0 %v354
      %588 = vmatmul.mubr.bf16.gmra.mxu0 %v353
      %v589 = vpop.f32.mrf.mxu0
      %v590 = vadd.f32 %v241, %v589
      %v591 = vpop.f32.mrf.mxu0
      %v592 = vpop.f32.mrf.mxu0
      %v593 = vadd.f32 %v241, %v592
      %v594 = vpop.f32.mrf.mxu0
      %595 = vmatprep.mubr.bf16.mxu0 %v356
      %596 = vmatmul.mubr.bf16.gmra.mxu0 %v355
      %v597 = vpop.f32.mrf.mxu0
      %v598 = vadd.f32 %v241, %v597
      %v599 = vpop.f32.mrf.mxu0
      %v600 = vpop.f32.mrf.mxu0
      %v601 = vadd.f32 %v241, %v600
      %v602 = vpop.f32.mrf.mxu0
      %603 = vmatprep.mubr.bf16.mxu0 %v358
      %604 = vmatmul.mubr.bf16.gmra.mxu0 %v357
      %v605 = vpop.f32.mrf.mxu0
      %v606 = vadd.f32 %v241, %v605
      %v607 = vpop.f32.mrf.mxu0
      %v608 = vpop.f32.mrf.mxu0
      %v609 = vadd.f32 %v241, %v608
      %v610 = vpop.f32.mrf.mxu0
      %611 = vmatprep.mubr.bf16.mxu0 %v360
      %612 = vmatmul.mubr.bf16.gmra.mxu0 %v359
      %v613 = vpop.f32.mrf.mxu0
      %v614 = vadd.f32 %v241, %v613
      %v615 = vpop.f32.mrf.mxu0
      %v616 = vpop.f32.mrf.mxu0
      %v617 = vadd.f32 %v241, %v616
      %v618 = vpop.f32.mrf.mxu0
      %619 = vmatprep.mubr.bf16.mxu0 %v362
      %620 = vmatmul.mubr.bf16.gmra.mxu0 %v361
      %v621 = vpop.f32.mrf.mxu0
      %v622 = vadd.f32 %v241, %v621
      %v623 = vpop.f32.mrf.mxu0
      %v624 = vpop.f32.mrf.mxu0
      %v625 = vadd.f32 %v241, %v624
      %v626 = vpop.f32.mrf.mxu0
      %627 = vmatprep.mubr.bf16.mxu0 %v364
      %628 = vmatmul.mubr.bf16.gmra.mxu0 %v363
      %v629 = vpop.f32.mrf.mxu0
      %v630 = vadd.f32 %v241, %v629
      %v631 = vpop.f32.mrf.mxu0
      %v632 = vpop.f32.mrf.mxu0
      %v633 = vadd.f32 %v241, %v632
      %v634 = vpop.f32.mrf.mxu0
      %635 = vmatprep.mubr.bf16.mxu0 %v366
      %636 = vmatmul.mubr.bf16.gmra.mxu0 %v365
      %v637 = vpop.f32.mrf.mxu0
      %v638 = vadd.f32 %v241, %v637
      %v639 = vpop.f32.mrf.mxu0
      %v640 = vpop.f32.mrf.mxu0
      %v641 = vadd.f32 %v241, %v640
      %v642 = vpop.f32.mrf.mxu0
      %643 = vmatprep.mubr.bf16.mxu0 %v368
      %644 = vmatmul.mubr.bf16.gmra.mxu0 %v367
      %v645 = vpop.f32.mrf.mxu0
      %v646 = vadd.f32 %v241, %v645
      %v647 = vpop.f32.mrf.mxu0
      %v648 = vpop.f32.mrf.mxu0
      %v649 = vadd.f32 %v241, %v648
      %v650 = vpop.f32.mrf.mxu0
      %651 = vmatprep.mubr.bf16.mxu0 %v370
      %652 = vmatmul.mubr.bf16.gmra.mxu0 %v369
      %v653 = vpop.f32.mrf.mxu0
      %v654 = vadd.f32 %v241, %v653
      %v655 = vpop.f32.mrf.mxu0
      %v656 = vpop.f32.mrf.mxu0
      %v657 = vadd.f32 %v241, %v656
      %v658 = vpop.f32.mrf.mxu0
      %659 = vdwg.mxu0
      %v660 = vmax.f32 %v534, 0.0
      %v661 = vmax.f32 %v537, 0.0
      %v662 = vmax.f32 %v542, 0.0
      %v663 = vmax.f32 %v545, 0.0
      %v664 = vmax.f32 %v550, 0.0
      %v665 = vmax.f32 %v553, 0.0
      %v666 = vmax.f32 %v558, 0.0
      %v667 = vmax.f32 %v561, 0.0
      %v668 = vmax.f32 %v566, 0.0
      %v669 = vmax.f32 %v569, 0.0
      %v670 = vmax.f32 %v574, 0.0
      %v671 = vmax.f32 %v577, 0.0
      %v672 = vmax.f32 %v582, 0.0
      %v673 = vmax.f32 %v585, 0.0
      %v674 = vmax.f32 %v590, 0.0
      %v675 = vmax.f32 %v593, 0.0
      %v676 = vmax.f32 %v598, 0.0
      %v677 = vmax.f32 %v601, 0.0
      %v678 = vmax.f32 %v606, 0.0
      %v679 = vmax.f32 %v609, 0.0
      %v680 = vmax.f32 %v614, 0.0
      %v681 = vmax.f32 %v617, 0.0
      %v682 = vmax.f32 %v622, 0.0
      %v683 = vmax.f32 %v625, 0.0
      %v684 = vmax.f32 %v630, 0.0
      %v685 = vmax.f32 %v633, 0.0
      %v686 = vmax.f32 %v638, 0.0
      %v687 = vmax.f32 %v641, 0.0
      %v688 = vmax.f32 %v646, 0.0
      %v689 = vmax.f32 %v649, 0.0
      %v690 = vmax.f32 %v654, 0.0
      %v691 = vmax.f32 %v657, 0.0
      %s692 = scalar_lea.vmem %s165, 256
      %v693 = vld [vmem:[%s692] sm:$0xff]
      %v694 = vld [vmem:[%s692 + $0x8] sm:$0xff]
      %v695 = vld [vmem:[%s692 + $0x10] sm:$0xff]
      %v696 = vld [vmem:[%s692 + $0x18] sm:$0xff]
      %v697 = vld [vmem:[%s692 + $0x20] sm:$0xff]
      %v698 = vld [vmem:[%s692 + $0x28] sm:$0xff]
      %v699 = vld [vmem:[%s692 + $0x30] sm:$0xff]
      %v700 = vld [vmem:[%s692 + $0x38] sm:$0xff]
      %v701 = vld [vmem:[%s692 + $0x40] sm:$0xff]
      %v702 = vld [vmem:[%s692 + $0x48] sm:$0xff]
      %v703 = vld [vmem:[%s692 + $0x50] sm:$0xff]
      %v704 = vld [vmem:[%s692 + $0x58] sm:$0xff]
      %v705 = vld [vmem:[%s692 + $0x60] sm:$0xff]
      %v706 = vld [vmem:[%s692 + $0x68] sm:$0xff]
      %v707 = vld [vmem:[%s692 + $0x70] sm:$0xff]
      %v708 = vld [vmem:[%s692 + $0x78] sm:$0xff]
      %v709 = vld [vmem:[%s692 + $0x80] sm:$0xff]
      %v710 = vld [vmem:[%s692 + $0x88] sm:$0xff]
      %v711 = vld [vmem:[%s692 + $0x90] sm:$0xff]
      %v712 = vld [vmem:[%s692 + $0x98] sm:$0xff]
      %v713 = vld [vmem:[%s692 + $0xa0] sm:$0xff]
      %v714 = vld [vmem:[%s692 + $0xa8] sm:$0xff]
      %v715 = vld [vmem:[%s692 + $0xb0] sm:$0xff]
      %v716 = vld [vmem:[%s692 + $0xb8] sm:$0xff]
      %v717 = vld [vmem:[%s692 + $0xc0] sm:$0xff]
      %v718 = vld [vmem:[%s692 + $0xc8] sm:$0xff]
      %v719 = vld [vmem:[%s692 + $0xd0] sm:$0xff]
      %v720 = vld [vmem:[%s692 + $0xd8] sm:$0xff]
      %v721 = vld [vmem:[%s692 + $0xe0] sm:$0xff]
      %v722 = vld [vmem:[%s692 + $0xe8] sm:$0xff]
      %v723 = vld [vmem:[%s692 + $0xf0] sm:$0xff]
      %v724 = vld [vmem:[%s692 + $0xf8] sm:$0xff]
      %v757 = vunpack.c.l.b16 %v693
      %v758 = vunpack.c.h.b16 %v693
      %v759 = vunpack.c.l.b16 %v694
      %v760 = vunpack.c.h.b16 %v694
      %v761 = vunpack.c.l.b16 %v695
      %v762 = vunpack.c.h.b16 %v695
      %v763 = vunpack.c.l.b16 %v696
      %v764 = vunpack.c.h.b16 %v696
      %v765 = vunpack.c.l.b16 %v697
      %v766 = vunpack.c.h.b16 %v697
      %v767 = vunpack.c.l.b16 %v698
      %v768 = vunpack.c.h.b16 %v698
      %v769 = vunpack.c.l.b16 %v699
      %v770 = vunpack.c.h.b16 %v699
      %v771 = vunpack.c.l.b16 %v700
      %v772 = vunpack.c.h.b16 %v700
      %v773 = vunpack.c.l.b16 %v701
      %v774 = vunpack.c.h.b16 %v701
      %v775 = vunpack.c.l.b16 %v702
      %v776 = vunpack.c.h.b16 %v702
      %v777 = vunpack.c.l.b16 %v703
      %v778 = vunpack.c.h.b16 %v703
      %v779 = vunpack.c.l.b16 %v704
      %v780 = vunpack.c.h.b16 %v704
      %v781 = vunpack.c.l.b16 %v705
      %v782 = vunpack.c.h.b16 %v705
      %v783 = vunpack.c.l.b16 %v706
      %v784 = vunpack.c.h.b16 %v706
      %v785 = vunpack.c.l.b16 %v707
      %v786 = vunpack.c.h.b16 %v707
      %v787 = vunpack.c.l.b16 %v708
      %v788 = vunpack.c.h.b16 %v708
      %v789 = vunpack.c.l.b16 %v709
      %v790 = vunpack.c.h.b16 %v709
      %v791 = vunpack.c.l.b16 %v710
      %v792 = vunpack.c.h.b16 %v710
      %v793 = vunpack.c.l.b16 %v711
      %v794 = vunpack.c.h.b16 %v711
      %v795 = vunpack.c.l.b16 %v712
      %v796 = vunpack.c.h.b16 %v712
      %v797 = vunpack.c.l.b16 %v713
      %v798 = vunpack.c.h.b16 %v713
      %v799 = vunpack.c.l.b16 %v714
      %v800 = vunpack.c.h.b16 %v714
      %v801 = vunpack.c.l.b16 %v715
      %v802 = vunpack.c.h.b16 %v715
      %v803 = vunpack.c.l.b16 %v716
      %v804 = vunpack.c.h.b16 %v716
      %v805 = vunpack.c.l.b16 %v717
      %v806 = vunpack.c.h.b16 %v717
      %v807 = vunpack.c.l.b16 %v718
      %v808 = vunpack.c.h.b16 %v718
      %v809 = vunpack.c.l.b16 %v719
      %v810 = vunpack.c.h.b16 %v719
      %v811 = vunpack.c.l.b16 %v720
      %v812 = vunpack.c.h.b16 %v720
      %v813 = vunpack.c.l.b16 %v721
      %v814 = vunpack.c.h.b16 %v721
      %v815 = vunpack.c.l.b16 %v722
      %v816 = vunpack.c.h.b16 %v722
      %v817 = vunpack.c.l.b16 %v723
      %v818 = vunpack.c.h.b16 %v723
      %v819 = vunpack.c.l.b16 %v724
      %v820 = vunpack.c.h.b16 %v724
      %v821 = vpack.c.b16 %v759, %v757
      %v822 = vpack.c.b16 %v760, %v758
      %v823 = vpack.c.b16 %v763, %v761
      %v824 = vpack.c.b16 %v764, %v762
      %v825 = vpack.c.b16 %v767, %v765
      %v826 = vpack.c.b16 %v768, %v766
      %v827 = vpack.c.b16 %v771, %v769
      %v828 = vpack.c.b16 %v772, %v770
      %v829 = vpack.c.b16 %v775, %v773
      %v830 = vpack.c.b16 %v776, %v774
      %v831 = vpack.c.b16 %v779, %v777
      %v832 = vpack.c.b16 %v780, %v778
      %v833 = vpack.c.b16 %v783, %v781
      %v834 = vpack.c.b16 %v784, %v782
      %v835 = vpack.c.b16 %v787, %v785
      %v836 = vpack.c.b16 %v788, %v786
      %v837 = vpack.c.b16 %v791, %v789
      %v838 = vpack.c.b16 %v792, %v790
      %v839 = vpack.c.b16 %v795, %v793
      %v840 = vpack.c.b16 %v796, %v794
      %v841 = vpack.c.b16 %v799, %v797
      %v842 = vpack.c.b16 %v800, %v798
      %v843 = vpack.c.b16 %v803, %v801
      %v844 = vpack.c.b16 %v804, %v802
      %v845 = vpack.c.b16 %v807, %v805
      %v846 = vpack.c.b16 %v808, %v806
      %v847 = vpack.c.b16 %v811, %v809
      %v848 = vpack.c.b16 %v812, %v810
      %v849 = vpack.c.b16 %v815, %v813
      %v850 = vpack.c.b16 %v816, %v814
      %v851 = vpack.c.b16 %v819, %v817
      %v852 = vpack.c.b16 %v820, %v818
      %885 = vmatprep.subr.bf16.mxu0 0
      %886 = vmatpush1.bf16.msra.mxu0 %v474
      %887 = vmatprep.subr.bf16.mxu0 0
      %888 = vmatpush1.bf16.msra.mxu0 %v473
      %889 = vmatprep.subr.bf16.mxu0 0
      %890 = vmatpush1.bf16.msra.mxu0 %v472
      %891 = vmatprep.subr.bf16.mxu0 0
      %892 = vmatpush1.bf16.msra.mxu0 %v471
      %893 = vmatprep.subr.bf16.mxu0 0
      %894 = vmatpush1.bf16.msra.mxu0 %v470
      %895 = vmatprep.subr.bf16.mxu0 0
      %896 = vmatpush1.bf16.msra.mxu0 %v469
      %897 = vmatprep.subr.bf16.mxu0 0
      %898 = vmatpush1.bf16.msra.mxu0 %v468
      %899 = vmatprep.subr.bf16.mxu0 0
      %900 = vmatpush1.bf16.msra.mxu0 %v467
      %901 = vmatprep.subr.bf16.mxu0 0
      %902 = vmatpush2.bf16.msra.mxu0 %v482
      %903 = vmatprep.subr.bf16.mxu0 0
      %904 = vmatpush2.bf16.msra.mxu0 %v481
      %905 = vmatprep.subr.bf16.mxu0 0
      %906 = vmatpush2.bf16.msra.mxu0 %v480
      %907 = vmatprep.subr.bf16.mxu0 0
      %908 = vmatpush2.bf16.msra.mxu0 %v479
      %909 = vmatprep.subr.bf16.mxu0 0
      %910 = vmatpush2.bf16.msra.mxu0 %v478
      %911 = vmatprep.subr.bf16.mxu0 0
      %912 = vmatpush2.bf16.msra.mxu0 %v477
      %913 = vmatprep.subr.bf16.mxu0 0
      %914 = vmatpush2.bf16.msra.mxu0 %v476
      %915 = vmatprep.subr.bf16.mxu0 0
      %916 = vmatpush2.bf16.msra.mxu0 %v475
      %917 = vmatprep.mubr.bf16.mxu0 %v822
      %918 = vmatmul.mubr.bf16.gmra.mxu0 %v821
      %v919 = vpop.f32.mrf.mxu0
      %v920 = vadd.f32 %v241, %v919
      %v921 = vpop.f32.mrf.mxu0
      %v922 = vpop.f32.mrf.mxu0
      %v923 = vadd.f32 %v241, %v922
      %v924 = vpop.f32.mrf.mxu0
      %925 = vmatprep.mubr.bf16.mxu0 %v824
      %926 = vmatmul.mubr.bf16.gmra.mxu0 %v823
      %v927 = vpop.f32.mrf.mxu0
      %v928 = vadd.f32 %v241, %v927
      %v929 = vpop.f32.mrf.mxu0
      %v930 = vpop.f32.mrf.mxu0
      %v931 = vadd.f32 %v241, %v930
      %v932 = vpop.f32.mrf.mxu0
      %933 = vmatprep.mubr.bf16.mxu0 %v826
      %934 = vmatmul.mubr.bf16.gmra.mxu0 %v825
      %v935 = vpop.f32.mrf.mxu0
      %v936 = vadd.f32 %v241, %v935
      %v937 = vpop.f32.mrf.mxu0
      %v938 = vpop.f32.mrf.mxu0
      %v939 = vadd.f32 %v241, %v938
      %v940 = vpop.f32.mrf.mxu0
      %941 = vmatprep.mubr.bf16.mxu0 %v828
      %942 = vmatmul.mubr.bf16.gmra.mxu0 %v827
      %v943 = vpop.f32.mrf.mxu0
      %v944 = vadd.f32 %v241, %v943
      %v945 = vpop.f32.mrf.mxu0
      %v946 = vpop.f32.mrf.mxu0
      %v947 = vadd.f32 %v241, %v946
      %v948 = vpop.f32.mrf.mxu0
      %949 = vmatprep.mubr.bf16.mxu0 %v830
      %950 = vmatmul.mubr.bf16.gmra.mxu0 %v829
      %v951 = vpop.f32.mrf.mxu0
      %v952 = vadd.f32 %v241, %v951
      %v953 = vpop.f32.mrf.mxu0
      %v954 = vpop.f32.mrf.mxu0
      %v955 = vadd.f32 %v241, %v954
      %v956 = vpop.f32.mrf.mxu0
      %957 = vmatprep.mubr.bf16.mxu0 %v832
      %958 = vmatmul.mubr.bf16.gmra.mxu0 %v831
      %v959 = vpop.f32.mrf.mxu0
      %v960 = vadd.f32 %v241, %v959
      %v961 = vpop.f32.mrf.mxu0
      %v962 = vpop.f32.mrf.mxu0
      %v963 = vadd.f32 %v241, %v962
      %v964 = vpop.f32.mrf.mxu0
      %965 = vmatprep.mubr.bf16.mxu0 %v834
      %966 = vmatmul.mubr.bf16.gmra.mxu0 %v833
      %v967 = vpop.f32.mrf.mxu0
      %v968 = vadd.f32 %v241, %v967
      %v969 = vpop.f32.mrf.mxu0
      %v970 = vpop.f32.mrf.mxu0
      %v971 = vadd.f32 %v241, %v970
      %v972 = vpop.f32.mrf.mxu0
      %973 = vmatprep.mubr.bf16.mxu0 %v836
      %974 = vmatmul.mubr.bf16.gmra.mxu0 %v835
      %v975 = vpop.f32.mrf.mxu0
      %v976 = vadd.f32 %v241, %v975
      %v977 = vpop.f32.mrf.mxu0
      %v978 = vpop.f32.mrf.mxu0
      %v979 = vadd.f32 %v241, %v978
      %v980 = vpop.f32.mrf.mxu0
      %981 = vmatprep.mubr.bf16.mxu0 %v838
      %982 = vmatmul.mubr.bf16.gmra.mxu0 %v837
      %v983 = vpop.f32.mrf.mxu0
      %v984 = vadd.f32 %v241, %v983
      %v985 = vpop.f32.mrf.mxu0
      %v986 = vpop.f32.mrf.mxu0
      %v987 = vadd.f32 %v241, %v986
      %v988 = vpop.f32.mrf.mxu0
      %989 = vmatprep.mubr.bf16.mxu0 %v840
      %990 = vmatmul.mubr.bf16.gmra.mxu0 %v839
      %v991 = vpop.f32.mrf.mxu0
      %v992 = vadd.f32 %v241, %v991
      %v993 = vpop.f32.mrf.mxu0
      %v994 = vpop.f32.mrf.mxu0
      %v995 = vadd.f32 %v241, %v994
      %v996 = vpop.f32.mrf.mxu0
      %997 = vmatprep.mubr.bf16.mxu0 %v842
      %998 = vmatmul.mubr.bf16.gmra.mxu0 %v841
      %v999 = vpop.f32.mrf.mxu0
      %v1000 = vadd.f32 %v241, %v999
      %v1001 = vpop.f32.mrf.mxu0
      %v1002 = vpop.f32.mrf.mxu0
      %v1003 = vadd.f32 %v241, %v1002
      %v1004 = vpop.f32.mrf.mxu0
      %1005 = vmatprep.mubr.bf16.mxu0 %v844
      %1006 = vmatmul.mubr.bf16.gmra.mxu0 %v843
      %v1007 = vpop.f32.mrf.mxu0
      %v1008 = vadd.f32 %v241, %v1007
      %v1009 = vpop.f32.mrf.mxu0
      %v1010 = vpop.f32.mrf.mxu0
      %v1011 = vadd.f32 %v241, %v1010
      %v1012 = vpop.f32.mrf.mxu0
      %1013 = vmatprep.mubr.bf16.mxu0 %v846
      %1014 = vmatmul.mubr.bf16.gmra.mxu0 %v845
      %v1015 = vpop.f32.mrf.mxu0
      %v1016 = vadd.f32 %v241, %v1015
      %v1017 = vpop.f32.mrf.mxu0
      %v1018 = vpop.f32.mrf.mxu0
      %v1019 = vadd.f32 %v241, %v1018
      %v1020 = vpop.f32.mrf.mxu0
      %1021 = vmatprep.mubr.bf16.mxu0 %v848
      %1022 = vmatmul.mubr.bf16.gmra.mxu0 %v847
      %v1023 = vpop.f32.mrf.mxu0
      %v1024 = vadd.f32 %v241, %v1023
      %v1025 = vpop.f32.mrf.mxu0
      %v1026 = vpop.f32.mrf.mxu0
      %v1027 = vadd.f32 %v241, %v1026
      %v1028 = vpop.f32.mrf.mxu0
      %1029 = vmatprep.mubr.bf16.mxu0 %v850
      %1030 = vmatmul.mubr.bf16.gmra.mxu0 %v849
      %v1031 = vpop.f32.mrf.mxu0
      %v1032 = vadd.f32 %v241, %v1031
      %v1033 = vpop.f32.mrf.mxu0
      %v1034 = vpop.f32.mrf.mxu0
      %v1035 = vadd.f32 %v241, %v1034
      %v1036 = vpop.f32.mrf.mxu0
      %1037 = vmatprep.mubr.bf16.mxu0 %v852
      %1038 = vmatmul.mubr.bf16.gmra.mxu0 %v851
      %v1039 = vpop.f32.mrf.mxu0
      %v1040 = vadd.f32 %v241, %v1039
      %v1041 = vpop.f32.mrf.mxu0
      %v1042 = vpop.f32.mrf.mxu0
      %v1043 = vadd.f32 %v241, %v1042
      %v1044 = vpop.f32.mrf.mxu0
      %1045 = vdwg.mxu0
      %v1046 = vmax.f32 %v920, 0.0
      %v1047 = vmax.f32 %v923, 0.0
      %v1048 = vmax.f32 %v928, 0.0
      %v1049 = vmax.f32 %v931, 0.0
      %v1050 = vmax.f32 %v936, 0.0
      %v1051 = vmax.f32 %v939, 0.0
      %v1052 = vmax.f32 %v944, 0.0
      %v1053 = vmax.f32 %v947, 0.0
      %v1054 = vmax.f32 %v952, 0.0
      %v1055 = vmax.f32 %v955, 0.0
      %v1056 = vmax.f32 %v960, 0.0
      %v1057 = vmax.f32 %v963, 0.0
      %v1058 = vmax.f32 %v968, 0.0
      %v1059 = vmax.f32 %v971, 0.0
      %v1060 = vmax.f32 %v976, 0.0
      %v1061 = vmax.f32 %v979, 0.0
      %v1062 = vmax.f32 %v984, 0.0
      %v1063 = vmax.f32 %v987, 0.0
      %v1064 = vmax.f32 %v992, 0.0
      %v1065 = vmax.f32 %v995, 0.0
      %v1066 = vmax.f32 %v1000, 0.0
      %v1067 = vmax.f32 %v1003, 0.0
      %v1068 = vmax.f32 %v1008, 0.0
      %v1069 = vmax.f32 %v1011, 0.0
      %v1070 = vmax.f32 %v1016, 0.0
      %v1071 = vmax.f32 %v1019, 0.0
      %v1072 = vmax.f32 %v1024, 0.0
      %v1073 = vmax.f32 %v1027, 0.0
      %v1074 = vmax.f32 %v1032, 0.0
      %v1075 = vmax.f32 %v1035, 0.0
      %v1076 = vmax.f32 %v1040, 0.0
      %v1077 = vmax.f32 %v1043, 0.0
      %v1078 = vmax.f32 %v660, %v1046
      %v1079 = vmax.f32 %v661, %v1047
      %v1080 = vmax.f32 %v662, %v1048
      %v1081 = vmax.f32 %v663, %v1049
      %v1082 = vmax.f32 %v664, %v1050
      %v1083 = vmax.f32 %v665, %v1051
      %v1084 = vmax.f32 %v666, %v1052
      %v1085 = vmax.f32 %v667, %v1053
      %v1086 = vmax.f32 %v668, %v1054
      %v1087 = vmax.f32 %v669, %v1055
      %v1088 = vmax.f32 %v670, %v1056
      %v1089 = vmax.f32 %v671, %v1057
      %v1090 = vmax.f32 %v672, %v1058
      %v1091 = vmax.f32 %v673, %v1059
      %v1092 = vmax.f32 %v674, %v1060
      %v1093 = vmax.f32 %v675, %v1061
      %v1094 = vmax.f32 %v676, %v1062
      %v1095 = vmax.f32 %v677, %v1063
      %v1096 = vmax.f32 %v678, %v1064
      %v1097 = vmax.f32 %v679, %v1065
      %v1098 = vmax.f32 %v680, %v1066
      %v1099 = vmax.f32 %v681, %v1067
      %v1100 = vmax.f32 %v682, %v1068
      %v1101 = vmax.f32 %v683, %v1069
      %v1102 = vmax.f32 %v684, %v1070
      %v1103 = vmax.f32 %v685, %v1071
      %v1104 = vmax.f32 %v686, %v1072
      %v1105 = vmax.f32 %v687, %v1073
      %v1106 = vmax.f32 %v688, %v1074
      %v1107 = vmax.f32 %v689, %v1075
      %v1108 = vmax.f32 %v690, %v1076
      %v1109 = vmax.f32 %v691, %v1077
      %s1110 = scalar_lea.vmem %s165, 512
      %v1111 = vld [vmem:[%s1110] sm:$0xff]
      %v1112 = vld [vmem:[%s1110 + $0x8] sm:$0xff]
      %v1113 = vld [vmem:[%s1110 + $0x10] sm:$0xff]
      %v1114 = vld [vmem:[%s1110 + $0x18] sm:$0xff]
      %v1115 = vld [vmem:[%s1110 + $0x20] sm:$0xff]
      %v1116 = vld [vmem:[%s1110 + $0x28] sm:$0xff]
      %v1117 = vld [vmem:[%s1110 + $0x30] sm:$0xff]
      %v1118 = vld [vmem:[%s1110 + $0x38] sm:$0xff]
      %v1119 = vld [vmem:[%s1110 + $0x40] sm:$0xff]
      %v1120 = vld [vmem:[%s1110 + $0x48] sm:$0xff]
      %v1121 = vld [vmem:[%s1110 + $0x50] sm:$0xff]
      %v1122 = vld [vmem:[%s1110 + $0x58] sm:$0xff]
      %v1123 = vld [vmem:[%s1110 + $0x60] sm:$0xff]
      %v1124 = vld [vmem:[%s1110 + $0x68] sm:$0xff]
      %v1125 = vld [vmem:[%s1110 + $0x70] sm:$0xff]
      %v1126 = vld [vmem:[%s1110 + $0x78] sm:$0xff]
      %v1127 = vld [vmem:[%s1110 + $0x80] sm:$0xff]
      %v1128 = vld [vmem:[%s1110 + $0x88] sm:$0xff]
      %v1129 = vld [vmem:[%s1110 + $0x90] sm:$0xff]
      %v1130 = vld [vmem:[%s1110 + $0x98] sm:$0xff]
      %v1131 = vld [vmem:[%s1110 + $0xa0] sm:$0xff]
      %v1132 = vld [vmem:[%s1110 + $0xa8] sm:$0xff]
      %v1133 = vld [vmem:[%s1110 + $0xb0] sm:$0xff]
      %v1134 = vld [vmem:[%s1110 + $0xb8] sm:$0xff]
      %v1135 = vld [vmem:[%s1110 + $0xc0] sm:$0xff]
      %v1136 = vld [vmem:[%s1110 + $0xc8] sm:$0xff]
      %v1137 = vld [vmem:[%s1110 + $0xd0] sm:$0xff]
      %v1138 = vld [vmem:[%s1110 + $0xd8] sm:$0xff]
      %v1139 = vld [vmem:[%s1110 + $0xe0] sm:$0xff]
      %v1140 = vld [vmem:[%s1110 + $0xe8] sm:$0xff]
      %v1141 = vld [vmem:[%s1110 + $0xf0] sm:$0xff]
      %v1142 = vld [vmem:[%s1110 + $0xf8] sm:$0xff]
      %v1175 = vunpack.c.l.b16 %v1111
      %v1176 = vunpack.c.h.b16 %v1111
      %v1177 = vunpack.c.l.b16 %v1112
      %v1178 = vunpack.c.h.b16 %v1112
      %v1179 = vunpack.c.l.b16 %v1113
      %v1180 = vunpack.c.h.b16 %v1113
      %v1181 = vunpack.c.l.b16 %v1114
      %v1182 = vunpack.c.h.b16 %v1114
      %v1183 = vunpack.c.l.b16 %v1115
      %v1184 = vunpack.c.h.b16 %v1115
      %v1185 = vunpack.c.l.b16 %v1116
      %v1186 = vunpack.c.h.b16 %v1116
      %v1187 = vunpack.c.l.b16 %v1117
      %v1188 = vunpack.c.h.b16 %v1117
      %v1189 = vunpack.c.l.b16 %v1118
      %v1190 = vunpack.c.h.b16 %v1118
      %v1191 = vunpack.c.l.b16 %v1119
      %v1192 = vunpack.c.h.b16 %v1119
      %v1193 = vunpack.c.l.b16 %v1120
      %v1194 = vunpack.c.h.b16 %v1120
      %v1195 = vunpack.c.l.b16 %v1121
      %v1196 = vunpack.c.h.b16 %v1121
      %v1197 = vunpack.c.l.b16 %v1122
      %v1198 = vunpack.c.h.b16 %v1122
      %v1199 = vunpack.c.l.b16 %v1123
      %v1200 = vunpack.c.h.b16 %v1123
      %v1201 = vunpack.c.l.b16 %v1124
      %v1202 = vunpack.c.h.b16 %v1124
      %v1203 = vunpack.c.l.b16 %v1125
      %v1204 = vunpack.c.h.b16 %v1125
      %v1205 = vunpack.c.l.b16 %v1126
      %v1206 = vunpack.c.h.b16 %v1126
      %v1207 = vunpack.c.l.b16 %v1127
      %v1208 = vunpack.c.h.b16 %v1127
      %v1209 = vunpack.c.l.b16 %v1128
      %v1210 = vunpack.c.h.b16 %v1128
      %v1211 = vunpack.c.l.b16 %v1129
      %v1212 = vunpack.c.h.b16 %v1129
      %v1213 = vunpack.c.l.b16 %v1130
      %v1214 = vunpack.c.h.b16 %v1130
      %v1215 = vunpack.c.l.b16 %v1131
      %v1216 = vunpack.c.h.b16 %v1131
      %v1217 = vunpack.c.l.b16 %v1132
      %v1218 = vunpack.c.h.b16 %v1132
      %v1219 = vunpack.c.l.b16 %v1133
      %v1220 = vunpack.c.h.b16 %v1133
      %v1221 = vunpack.c.l.b16 %v1134
      %v1222 = vunpack.c.h.b16 %v1134
      %v1223 = vunpack.c.l.b16 %v1135
      %v1224 = vunpack.c.h.b16 %v1135
      %v1225 = vunpack.c.l.b16 %v1136
      %v1226 = vunpack.c.h.b16 %v1136
      %v1227 = vunpack.c.l.b16 %v1137
      %v1228 = vunpack.c.h.b16 %v1137
      %v1229 = vunpack.c.l.b16 %v1138
      %v1230 = vunpack.c.h.b16 %v1138
      %v1231 = vunpack.c.l.b16 %v1139
      %v1232 = vunpack.c.h.b16 %v1139
      %v1233 = vunpack.c.l.b16 %v1140
      %v1234 = vunpack.c.h.b16 %v1140
      %v1235 = vunpack.c.l.b16 %v1141
      %v1236 = vunpack.c.h.b16 %v1141
      %v1237 = vunpack.c.l.b16 %v1142
      %v1238 = vunpack.c.h.b16 %v1142
      %v1239 = vpack.c.b16 %v1177, %v1175
      %v1240 = vpack.c.b16 %v1178, %v1176
      %v1241 = vpack.c.b16 %v1181, %v1179
      %v1242 = vpack.c.b16 %v1182, %v1180
      %v1243 = vpack.c.b16 %v1185, %v1183
      %v1244 = vpack.c.b16 %v1186, %v1184
      %v1245 = vpack.c.b16 %v1189, %v1187
      %v1246 = vpack.c.b16 %v1190, %v1188
      %v1247 = vpack.c.b16 %v1193, %v1191
      %v1248 = vpack.c.b16 %v1194, %v1192
      %v1249 = vpack.c.b16 %v1197, %v1195
      %v1250 = vpack.c.b16 %v1198, %v1196
      %v1251 = vpack.c.b16 %v1201, %v1199
      %v1252 = vpack.c.b16 %v1202, %v1200
      %v1253 = vpack.c.b16 %v1205, %v1203
      %v1254 = vpack.c.b16 %v1206, %v1204
      %v1255 = vpack.c.b16 %v1209, %v1207
      %v1256 = vpack.c.b16 %v1210, %v1208
      %v1257 = vpack.c.b16 %v1213, %v1211
      %v1258 = vpack.c.b16 %v1214, %v1212
      %v1259 = vpack.c.b16 %v1217, %v1215
      %v1260 = vpack.c.b16 %v1218, %v1216
      %v1261 = vpack.c.b16 %v1221, %v1219
      %v1262 = vpack.c.b16 %v1222, %v1220
      %v1263 = vpack.c.b16 %v1225, %v1223
      %v1264 = vpack.c.b16 %v1226, %v1224
      %v1265 = vpack.c.b16 %v1229, %v1227
      %v1266 = vpack.c.b16 %v1230, %v1228
      %v1267 = vpack.c.b16 %v1233, %v1231
      %v1268 = vpack.c.b16 %v1234, %v1232
      %v1269 = vpack.c.b16 %v1237, %v1235
      %v1270 = vpack.c.b16 %v1238, %v1236
      %1303 = vmatprep.subr.bf16.mxu0 0
      %1304 = vmatpush1.bf16.msra.mxu0 %v474
      %1305 = vmatprep.subr.bf16.mxu0 0
      %1306 = vmatpush1.bf16.msra.mxu0 %v473
      %1307 = vmatprep.subr.bf16.mxu0 0
      %1308 = vmatpush1.bf16.msra.mxu0 %v472
      %1309 = vmatprep.subr.bf16.mxu0 0
      %1310 = vmatpush1.bf16.msra.mxu0 %v471
      %1311 = vmatprep.subr.bf16.mxu0 0
      %1312 = vmatpush1.bf16.msra.mxu0 %v470
      %1313 = vmatprep.subr.bf16.mxu0 0
      %1314 = vmatpush1.bf16.msra.mxu0 %v469
      %1315 = vmatprep.subr.bf16.mxu0 0
      %1316 = vmatpush1.bf16.msra.mxu0 %v468
      %1317 = vmatprep.subr.bf16.mxu0 0
      %1318 = vmatpush1.bf16.msra.mxu0 %v467
      %1319 = vmatprep.subr.bf16.mxu0 0
      %1320 = vmatpush2.bf16.msra.mxu0 %v482
      %1321 = vmatprep.subr.bf16.mxu0 0
      %1322 = vmatpush2.bf16.msra.mxu0 %v481
      %1323 = vmatprep.subr.bf16.mxu0 0
      %1324 = vmatpush2.bf16.msra.mxu0 %v480
      %1325 = vmatprep.subr.bf16.mxu0 0
      %1326 = vmatpush2.bf16.msra.mxu0 %v479
      %1327 = vmatprep.subr.bf16.mxu0 0
      %1328 = vmatpush2.bf16.msra.mxu0 %v478
      %1329 = vmatprep.subr.bf16.mxu0 0
      %1330 = vmatpush2.bf16.msra.mxu0 %v477
      %1331 = vmatprep.subr.bf16.mxu0 0
      %1332 = vmatpush2.bf16.msra.mxu0 %v476
      %1333 = vmatprep.subr.bf16.mxu0 0
      %1334 = vmatpush2.bf16.msra.mxu0 %v475
      %1335 = vmatprep.mubr.bf16.mxu0 %v1240
      %1336 = vmatmul.mubr.bf16.gmra.mxu0 %v1239
      %v1337 = vpop.f32.mrf.mxu0
      %v1338 = vadd.f32 %v241, %v1337
      %v1339 = vpop.f32.mrf.mxu0
      %v1340 = vpop.f32.mrf.mxu0
      %v1341 = vadd.f32 %v241, %v1340
      %v1342 = vpop.f32.mrf.mxu0
      %1343 = vmatprep.mubr.bf16.mxu0 %v1242
      %1344 = vmatmul.mubr.bf16.gmra.mxu0 %v1241
      %v1345 = vpop.f32.mrf.mxu0
      %v1346 = vadd.f32 %v241, %v1345
      %v1347 = vpop.f32.mrf.mxu0
      %v1348 = vpop.f32.mrf.mxu0
      %v1349 = vadd.f32 %v241, %v1348
      %v1350 = vpop.f32.mrf.mxu0
      %1351 = vmatprep.mubr.bf16.mxu0 %v1244
      %1352 = vmatmul.mubr.bf16.gmra.mxu0 %v1243
      %v1353 = vpop.f32.mrf.mxu0
      %v1354 = vadd.f32 %v241, %v1353
      %v1355 = vpop.f32.mrf.mxu0
      %v1356 = vpop.f32.mrf.mxu0
      %v1357 = vadd.f32 %v241, %v1356
      %v1358 = vpop.f32.mrf.mxu0
      %1359 = vmatprep.mubr.bf16.mxu0 %v1246
      %1360 = vmatmul.mubr.bf16.gmra.mxu0 %v1245
      %v1361 = vpop.f32.mrf.mxu0
      %v1362 = vadd.f32 %v241, %v1361
      %v1363 = vpop.f32.mrf.mxu0
      %v1364 = vpop.f32.mrf.mxu0
      %v1365 = vadd.f32 %v241, %v1364
      %v1366 = vpop.f32.mrf.mxu0
      %1367 = vmatprep.mubr.bf16.mxu0 %v1248
      %1368 = vmatmul.mubr.bf16.gmra.mxu0 %v1247
      %v1369 = vpop.f32.mrf.mxu0
      %v1370 = vadd.f32 %v241, %v1369
      %v1371 = vpop.f32.mrf.mxu0
      %v1372 = vpop.f32.mrf.mxu0
      %v1373 = vadd.f32 %v241, %v1372
      %v1374 = vpop.f32.mrf.mxu0
      %1375 = vmatprep.mubr.bf16.mxu0 %v1250
      %1376 = vmatmul.mubr.bf16.gmra.mxu0 %v1249
      %v1377 = vpop.f32.mrf.mxu0
      %v1378 = vadd.f32 %v241, %v1377
      %v1379 = vpop.f32.mrf.mxu0
      %v1380 = vpop.f32.mrf.mxu0
      %v1381 = vadd.f32 %v241, %v1380
      %v1382 = vpop.f32.mrf.mxu0
      %1383 = vmatprep.mubr.bf16.mxu0 %v1252
      %1384 = vmatmul.mubr.bf16.gmra.mxu0 %v1251
      %v1385 = vpop.f32.mrf.mxu0
      %v1386 = vadd.f32 %v241, %v1385
      %v1387 = vpop.f32.mrf.mxu0
      %v1388 = vpop.f32.mrf.mxu0
      %v1389 = vadd.f32 %v241, %v1388
      %v1390 = vpop.f32.mrf.mxu0
      %1391 = vmatprep.mubr.bf16.mxu0 %v1254
      %1392 = vmatmul.mubr.bf16.gmra.mxu0 %v1253
      %v1393 = vpop.f32.mrf.mxu0
      %v1394 = vadd.f32 %v241, %v1393
      %v1395 = vpop.f32.mrf.mxu0
      %v1396 = vpop.f32.mrf.mxu0
      %v1397 = vadd.f32 %v241, %v1396
      %v1398 = vpop.f32.mrf.mxu0
      %1399 = vmatprep.mubr.bf16.mxu0 %v1256
      %1400 = vmatmul.mubr.bf16.gmra.mxu0 %v1255
      %v1401 = vpop.f32.mrf.mxu0
      %v1402 = vadd.f32 %v241, %v1401
      %v1403 = vpop.f32.mrf.mxu0
      %v1404 = vpop.f32.mrf.mxu0
      %v1405 = vadd.f32 %v241, %v1404
      %v1406 = vpop.f32.mrf.mxu0
      %1407 = vmatprep.mubr.bf16.mxu0 %v1258
      %1408 = vmatmul.mubr.bf16.gmra.mxu0 %v1257
      %v1409 = vpop.f32.mrf.mxu0
      %v1410 = vadd.f32 %v241, %v1409
      %v1411 = vpop.f32.mrf.mxu0
      %v1412 = vpop.f32.mrf.mxu0
      %v1413 = vadd.f32 %v241, %v1412
      %v1414 = vpop.f32.mrf.mxu0
      %1415 = vmatprep.mubr.bf16.mxu0 %v1260
      %1416 = vmatmul.mubr.bf16.gmra.mxu0 %v1259
      %v1417 = vpop.f32.mrf.mxu0
      %v1418 = vadd.f32 %v241, %v1417
      %v1419 = vpop.f32.mrf.mxu0
      %v1420 = vpop.f32.mrf.mxu0
      %v1421 = vadd.f32 %v241, %v1420
      %v1422 = vpop.f32.mrf.mxu0
      %1423 = vmatprep.mubr.bf16.mxu0 %v1262
      %1424 = vmatmul.mubr.bf16.gmra.mxu0 %v1261
      %v1425 = vpop.f32.mrf.mxu0
      %v1426 = vadd.f32 %v241, %v1425
      %v1427 = vpop.f32.mrf.mxu0
      %v1428 = vpop.f32.mrf.mxu0
      %v1429 = vadd.f32 %v241, %v1428
      %v1430 = vpop.f32.mrf.mxu0
      %1431 = vmatprep.mubr.bf16.mxu0 %v1264
      %1432 = vmatmul.mubr.bf16.gmra.mxu0 %v1263
      %v1433 = vpop.f32.mrf.mxu0
      %v1434 = vadd.f32 %v241, %v1433
      %v1435 = vpop.f32.mrf.mxu0
      %v1436 = vpop.f32.mrf.mxu0
      %v1437 = vadd.f32 %v241, %v1436
      %v1438 = vpop.f32.mrf.mxu0
      %1439 = vmatprep.mubr.bf16.mxu0 %v1266
      %1440 = vmatmul.mubr.bf16.gmra.mxu0 %v1265
      %v1441 = vpop.f32.mrf.mxu0
      %v1442 = vadd.f32 %v241, %v1441
      %v1443 = vpop.f32.mrf.mxu0
      %v1444 = vpop.f32.mrf.mxu0
      %v1445 = vadd.f32 %v241, %v1444
      %v1446 = vpop.f32.mrf.mxu0
      %1447 = vmatprep.mubr.bf16.mxu0 %v1268
      %1448 = vmatmul.mubr.bf16.gmra.mxu0 %v1267
      %v1449 = vpop.f32.mrf.mxu0
      %v1450 = vadd.f32 %v241, %v1449
      %v1451 = vpop.f32.mrf.mxu0
      %v1452 = vpop.f32.mrf.mxu0
      %v1453 = vadd.f32 %v241, %v1452
      %v1454 = vpop.f32.mrf.mxu0
      %1455 = vmatprep.mubr.bf16.mxu0 %v1270
      %1456 = vmatmul.mubr.bf16.gmra.mxu0 %v1269
      %v1457 = vpop.f32.mrf.mxu0
      %v1458 = vadd.f32 %v241, %v1457
      %v1459 = vpop.f32.mrf.mxu0
      %v1460 = vpop.f32.mrf.mxu0
      %v1461 = vadd.f32 %v241, %v1460
      %v1462 = vpop.f32.mrf.mxu0
      %1463 = vdwg.mxu0
      %v1464 = vmax.f32 %v1338, 0.0
      %v1465 = vmax.f32 %v1341, 0.0
      %v1466 = vmax.f32 %v1346, 0.0
      %v1467 = vmax.f32 %v1349, 0.0
      %v1468 = vmax.f32 %v1354, 0.0
      %v1469 = vmax.f32 %v1357, 0.0
      %v1470 = vmax.f32 %v1362, 0.0
      %v1471 = vmax.f32 %v1365, 0.0
      %v1472 = vmax.f32 %v1370, 0.0
      %v1473 = vmax.f32 %v1373, 0.0
      %v1474 = vmax.f32 %v1378, 0.0
      %v1475 = vmax.f32 %v1381, 0.0
      %v1476 = vmax.f32 %v1386, 0.0
      %v1477 = vmax.f32 %v1389, 0.0
      %v1478 = vmax.f32 %v1394, 0.0
      %v1479 = vmax.f32 %v1397, 0.0
      %v1480 = vmax.f32 %v1402, 0.0
      %v1481 = vmax.f32 %v1405, 0.0
      %v1482 = vmax.f32 %v1410, 0.0
      %v1483 = vmax.f32 %v1413, 0.0
      %v1484 = vmax.f32 %v1418, 0.0
      %v1485 = vmax.f32 %v1421, 0.0
      %v1486 = vmax.f32 %v1426, 0.0
      %v1487 = vmax.f32 %v1429, 0.0
      %v1488 = vmax.f32 %v1434, 0.0
      %v1489 = vmax.f32 %v1437, 0.0
      %v1490 = vmax.f32 %v1442, 0.0
      %v1491 = vmax.f32 %v1445, 0.0
      %v1492 = vmax.f32 %v1450, 0.0
      %v1493 = vmax.f32 %v1453, 0.0
      %v1494 = vmax.f32 %v1458, 0.0
      %v1495 = vmax.f32 %v1461, 0.0
      %s1496 = scalar_lea.vmem %s165, 768
      %v1497 = vld [vmem:[%s1496] sm:$0xff]
      %v1498 = vld [vmem:[%s1496 + $0x8] sm:$0xff]
      %v1499 = vld [vmem:[%s1496 + $0x10] sm:$0xff]
      %v1500 = vld [vmem:[%s1496 + $0x18] sm:$0xff]
      %v1501 = vld [vmem:[%s1496 + $0x20] sm:$0xff]
      %v1502 = vld [vmem:[%s1496 + $0x28] sm:$0xff]
      %v1503 = vld [vmem:[%s1496 + $0x30] sm:$0xff]
      %v1504 = vld [vmem:[%s1496 + $0x38] sm:$0xff]
      %v1505 = vld [vmem:[%s1496 + $0x40] sm:$0xff]
      %v1506 = vld [vmem:[%s1496 + $0x48] sm:$0xff]
      %v1507 = vld [vmem:[%s1496 + $0x50] sm:$0xff]
      %v1508 = vld [vmem:[%s1496 + $0x58] sm:$0xff]
      %v1509 = vld [vmem:[%s1496 + $0x60] sm:$0xff]
      %v1510 = vld [vmem:[%s1496 + $0x68] sm:$0xff]
      %v1511 = vld [vmem:[%s1496 + $0x70] sm:$0xff]
      %v1512 = vld [vmem:[%s1496 + $0x78] sm:$0xff]
      %v1513 = vld [vmem:[%s1496 + $0x80] sm:$0xff]
      %v1514 = vld [vmem:[%s1496 + $0x88] sm:$0xff]
      %v1515 = vld [vmem:[%s1496 + $0x90] sm:$0xff]
      %v1516 = vld [vmem:[%s1496 + $0x98] sm:$0xff]
      %v1517 = vld [vmem:[%s1496 + $0xa0] sm:$0xff]
      %v1518 = vld [vmem:[%s1496 + $0xa8] sm:$0xff]
      %v1519 = vld [vmem:[%s1496 + $0xb0] sm:$0xff]
      %v1520 = vld [vmem:[%s1496 + $0xb8] sm:$0xff]
      %v1521 = vld [vmem:[%s1496 + $0xc0] sm:$0xff]
      %v1522 = vld [vmem:[%s1496 + $0xc8] sm:$0xff]
      %v1523 = vld [vmem:[%s1496 + $0xd0] sm:$0xff]
      %v1524 = vld [vmem:[%s1496 + $0xd8] sm:$0xff]
      %v1525 = vld [vmem:[%s1496 + $0xe0] sm:$0xff]
      %v1526 = vld [vmem:[%s1496 + $0xe8] sm:$0xff]
      %v1527 = vld [vmem:[%s1496 + $0xf0] sm:$0xff]
      %v1528 = vld [vmem:[%s1496 + $0xf8] sm:$0xff]
      %v1561 = vunpack.c.l.b16 %v1497
      %v1562 = vunpack.c.h.b16 %v1497
      %v1563 = vunpack.c.l.b16 %v1498
      %v1564 = vunpack.c.h.b16 %v1498
      %v1565 = vunpack.c.l.b16 %v1499
      %v1566 = vunpack.c.h.b16 %v1499
      %v1567 = vunpack.c.l.b16 %v1500
      %v1568 = vunpack.c.h.b16 %v1500
      %v1569 = vunpack.c.l.b16 %v1501
      %v1570 = vunpack.c.h.b16 %v1501
      %v1571 = vunpack.c.l.b16 %v1502
      %v1572 = vunpack.c.h.b16 %v1502
      %v1573 = vunpack.c.l.b16 %v1503
      %v1574 = vunpack.c.h.b16 %v1503
      %v1575 = vunpack.c.l.b16 %v1504
      %v1576 = vunpack.c.h.b16 %v1504
      %v1577 = vunpack.c.l.b16 %v1505
      %v1578 = vunpack.c.h.b16 %v1505
      %v1579 = vunpack.c.l.b16 %v1506
      %v1580 = vunpack.c.h.b16 %v1506
      %v1581 = vunpack.c.l.b16 %v1507
      %v1582 = vunpack.c.h.b16 %v1507
      %v1583 = vunpack.c.l.b16 %v1508
      %v1584 = vunpack.c.h.b16 %v1508
      %v1585 = vunpack.c.l.b16 %v1509
      %v1586 = vunpack.c.h.b16 %v1509
      %v1587 = vunpack.c.l.b16 %v1510
      %v1588 = vunpack.c.h.b16 %v1510
      %v1589 = vunpack.c.l.b16 %v1511
      %v1590 = vunpack.c.h.b16 %v1511
      %v1591 = vunpack.c.l.b16 %v1512
      %v1592 = vunpack.c.h.b16 %v1512
      %v1593 = vunpack.c.l.b16 %v1513
      %v1594 = vunpack.c.h.b16 %v1513
      %v1595 = vunpack.c.l.b16 %v1514
      %v1596 = vunpack.c.h.b16 %v1514
      %v1597 = vunpack.c.l.b16 %v1515
      %v1598 = vunpack.c.h.b16 %v1515
      %v1599 = vunpack.c.l.b16 %v1516
      %v1600 = vunpack.c.h.b16 %v1516
      %v1601 = vunpack.c.l.b16 %v1517
      %v1602 = vunpack.c.h.b16 %v1517
      %v1603 = vunpack.c.l.b16 %v1518
      %v1604 = vunpack.c.h.b16 %v1518
      %v1605 = vunpack.c.l.b16 %v1519
      %v1606 = vunpack.c.h.b16 %v1519
      %v1607 = vunpack.c.l.b16 %v1520
      %v1608 = vunpack.c.h.b16 %v1520
      %v1609 = vunpack.c.l.b16 %v1521
      %v1610 = vunpack.c.h.b16 %v1521
      %v1611 = vunpack.c.l.b16 %v1522
      %v1612 = vunpack.c.h.b16 %v1522
      %v1613 = vunpack.c.l.b16 %v1523
      %v1614 = vunpack.c.h.b16 %v1523
      %v1615 = vunpack.c.l.b16 %v1524
      %v1616 = vunpack.c.h.b16 %v1524
      %v1617 = vunpack.c.l.b16 %v1525
      %v1618 = vunpack.c.h.b16 %v1525
      %v1619 = vunpack.c.l.b16 %v1526
      %v1620 = vunpack.c.h.b16 %v1526
      %v1621 = vunpack.c.l.b16 %v1527
      %v1622 = vunpack.c.h.b16 %v1527
      %v1623 = vunpack.c.l.b16 %v1528
      %v1624 = vunpack.c.h.b16 %v1528
      %v1625 = vpack.c.b16 %v1563, %v1561
      %v1626 = vpack.c.b16 %v1564, %v1562
      %v1627 = vpack.c.b16 %v1567, %v1565
      %v1628 = vpack.c.b16 %v1568, %v1566
      %v1629 = vpack.c.b16 %v1571, %v1569
      %v1630 = vpack.c.b16 %v1572, %v1570
      %v1631 = vpack.c.b16 %v1575, %v1573
      %v1632 = vpack.c.b16 %v1576, %v1574
      %v1633 = vpack.c.b16 %v1579, %v1577
      %v1634 = vpack.c.b16 %v1580, %v1578
      %v1635 = vpack.c.b16 %v1583, %v1581
      %v1636 = vpack.c.b16 %v1584, %v1582
      %v1637 = vpack.c.b16 %v1587, %v1585
      %v1638 = vpack.c.b16 %v1588, %v1586
      %v1639 = vpack.c.b16 %v1591, %v1589
      %v1640 = vpack.c.b16 %v1592, %v1590
      %v1641 = vpack.c.b16 %v1595, %v1593
      %v1642 = vpack.c.b16 %v1596, %v1594
      %v1643 = vpack.c.b16 %v1599, %v1597
      %v1644 = vpack.c.b16 %v1600, %v1598
      %v1645 = vpack.c.b16 %v1603, %v1601
      %v1646 = vpack.c.b16 %v1604, %v1602
      %v1647 = vpack.c.b16 %v1607, %v1605
      %v1648 = vpack.c.b16 %v1608, %v1606
      %v1649 = vpack.c.b16 %v1611, %v1609
      %v1650 = vpack.c.b16 %v1612, %v1610
      %v1651 = vpack.c.b16 %v1615, %v1613
      %v1652 = vpack.c.b16 %v1616, %v1614
      %v1653 = vpack.c.b16 %v1619, %v1617
      %v1654 = vpack.c.b16 %v1620, %v1618
      %v1655 = vpack.c.b16 %v1623, %v1621
      %v1656 = vpack.c.b16 %v1624, %v1622
      %1689 = vmatprep.subr.bf16.mxu0 0
      %1690 = vmatpush1.bf16.msra.mxu0 %v474
      %1691 = vmatprep.subr.bf16.mxu0 0
      %1692 = vmatpush1.bf16.msra.mxu0 %v473
      %1693 = vmatprep.subr.bf16.mxu0 0
      %1694 = vmatpush1.bf16.msra.mxu0 %v472
      %1695 = vmatprep.subr.bf16.mxu0 0
      %1696 = vmatpush1.bf16.msra.mxu0 %v471
      %1697 = vmatprep.subr.bf16.mxu0 0
      %1698 = vmatpush1.bf16.msra.mxu0 %v470
      %1699 = vmatprep.subr.bf16.mxu0 0
      %1700 = vmatpush1.bf16.msra.mxu0 %v469
      %1701 = vmatprep.subr.bf16.mxu0 0
      %1702 = vmatpush1.bf16.msra.mxu0 %v468
      %1703 = vmatprep.subr.bf16.mxu0 0
      %1704 = vmatpush1.bf16.msra.mxu0 %v467
      %1705 = vmatprep.subr.bf16.mxu0 0
      %1706 = vmatpush2.bf16.msra.mxu0 %v482
      %1707 = vmatprep.subr.bf16.mxu0 0
      %1708 = vmatpush2.bf16.msra.mxu0 %v481
      %1709 = vmatprep.subr.bf16.mxu0 0
      %1710 = vmatpush2.bf16.msra.mxu0 %v480
      %1711 = vmatprep.subr.bf16.mxu0 0
      %1712 = vmatpush2.bf16.msra.mxu0 %v479
      %1713 = vmatprep.subr.bf16.mxu0 0
      %1714 = vmatpush2.bf16.msra.mxu0 %v478
      %1715 = vmatprep.subr.bf16.mxu0 0
      %1716 = vmatpush2.bf16.msra.mxu0 %v477
      %1717 = vmatprep.subr.bf16.mxu0 0
      %1718 = vmatpush2.bf16.msra.mxu0 %v476
      %1719 = vmatprep.subr.bf16.mxu0 0
      %1720 = vmatpush2.bf16.msra.mxu0 %v475
      %1721 = vmatprep.mubr.bf16.mxu0 %v1626
      %1722 = vmatmul.mubr.bf16.gmra.mxu0 %v1625
      %v1723 = vpop.f32.mrf.mxu0
      %v1724 = vadd.f32 %v241, %v1723
      %v1725 = vpop.f32.mrf.mxu0
      %v1726 = vpop.f32.mrf.mxu0
      %v1727 = vadd.f32 %v241, %v1726
      %v1728 = vpop.f32.mrf.mxu0
      %1729 = vmatprep.mubr.bf16.mxu0 %v1628
      %1730 = vmatmul.mubr.bf16.gmra.mxu0 %v1627
      %v1731 = vpop.f32.mrf.mxu0
      %v1732 = vadd.f32 %v241, %v1731
      %v1733 = vpop.f32.mrf.mxu0
      %v1734 = vpop.f32.mrf.mxu0
      %v1735 = vadd.f32 %v241, %v1734
      %v1736 = vpop.f32.mrf.mxu0
      %1737 = vmatprep.mubr.bf16.mxu0 %v1630
      %1738 = vmatmul.mubr.bf16.gmra.mxu0 %v1629
      %v1739 = vpop.f32.mrf.mxu0
      %v1740 = vadd.f32 %v241, %v1739
      %v1741 = vpop.f32.mrf.mxu0
      %v1742 = vpop.f32.mrf.mxu0
      %v1743 = vadd.f32 %v241, %v1742
      %v1744 = vpop.f32.mrf.mxu0
      %1745 = vmatprep.mubr.bf16.mxu0 %v1632
      %1746 = vmatmul.mubr.bf16.gmra.mxu0 %v1631
      %v1747 = vpop.f32.mrf.mxu0
      %v1748 = vadd.f32 %v241, %v1747
      %v1749 = vpop.f32.mrf.mxu0
      %v1750 = vpop.f32.mrf.mxu0
      %v1751 = vadd.f32 %v241, %v1750
      %v1752 = vpop.f32.mrf.mxu0
      %1753 = vmatprep.mubr.bf16.mxu0 %v1634
      %1754 = vmatmul.mubr.bf16.gmra.mxu0 %v1633
      %v1755 = vpop.f32.mrf.mxu0
      %v1756 = vadd.f32 %v241, %v1755
      %v1757 = vpop.f32.mrf.mxu0
      %v1758 = vpop.f32.mrf.mxu0
      %v1759 = vadd.f32 %v241, %v1758
      %v1760 = vpop.f32.mrf.mxu0
      %1761 = vmatprep.mubr.bf16.mxu0 %v1636
      %1762 = vmatmul.mubr.bf16.gmra.mxu0 %v1635
      %v1763 = vpop.f32.mrf.mxu0
      %v1764 = vadd.f32 %v241, %v1763
      %v1765 = vpop.f32.mrf.mxu0
      %v1766 = vpop.f32.mrf.mxu0
      %v1767 = vadd.f32 %v241, %v1766
      %v1768 = vpop.f32.mrf.mxu0
      %1769 = vmatprep.mubr.bf16.mxu0 %v1638
      %1770 = vmatmul.mubr.bf16.gmra.mxu0 %v1637
      %v1771 = vpop.f32.mrf.mxu0
      %v1772 = vadd.f32 %v241, %v1771
      %v1773 = vpop.f32.mrf.mxu0
      %v1774 = vpop.f32.mrf.mxu0
      %v1775 = vadd.f32 %v241, %v1774
      %v1776 = vpop.f32.mrf.mxu0
      %1777 = vmatprep.mubr.bf16.mxu0 %v1640
      %1778 = vmatmul.mubr.bf16.gmra.mxu0 %v1639
      %v1779 = vpop.f32.mrf.mxu0
      %v1780 = vadd.f32 %v241, %v1779
      %v1781 = vpop.f32.mrf.mxu0
      %v1782 = vpop.f32.mrf.mxu0
      %v1783 = vadd.f32 %v241, %v1782
      %v1784 = vpop.f32.mrf.mxu0
      %1785 = vmatprep.mubr.bf16.mxu0 %v1642
      %1786 = vmatmul.mubr.bf16.gmra.mxu0 %v1641
      %v1787 = vpop.f32.mrf.mxu0
      %v1788 = vadd.f32 %v241, %v1787
      %v1789 = vpop.f32.mrf.mxu0
      %v1790 = vpop.f32.mrf.mxu0
      %v1791 = vadd.f32 %v241, %v1790
      %v1792 = vpop.f32.mrf.mxu0
      %1793 = vmatprep.mubr.bf16.mxu0 %v1644
      %1794 = vmatmul.mubr.bf16.gmra.mxu0 %v1643
      %v1795 = vpop.f32.mrf.mxu0
      %v1796 = vadd.f32 %v241, %v1795
      %v1797 = vpop.f32.mrf.mxu0
      %v1798 = vpop.f32.mrf.mxu0
      %v1799 = vadd.f32 %v241, %v1798
      %v1800 = vpop.f32.mrf.mxu0
      %1801 = vmatprep.mubr.bf16.mxu0 %v1646
      %1802 = vmatmul.mubr.bf16.gmra.mxu0 %v1645
      %v1803 = vpop.f32.mrf.mxu0
      %v1804 = vadd.f32 %v241, %v1803
      %v1805 = vpop.f32.mrf.mxu0
      %v1806 = vpop.f32.mrf.mxu0
      %v1807 = vadd.f32 %v241, %v1806
      %v1808 = vpop.f32.mrf.mxu0
      %1809 = vmatprep.mubr.bf16.mxu0 %v1648
      %1810 = vmatmul.mubr.bf16.gmra.mxu0 %v1647
      %v1811 = vpop.f32.mrf.mxu0
      %v1812 = vadd.f32 %v241, %v1811
      %v1813 = vpop.f32.mrf.mxu0
      %v1814 = vpop.f32.mrf.mxu0
      %v1815 = vadd.f32 %v241, %v1814
      %v1816 = vpop.f32.mrf.mxu0
      %1817 = vmatprep.mubr.bf16.mxu0 %v1650
      %1818 = vmatmul.mubr.bf16.gmra.mxu0 %v1649
      %v1819 = vpop.f32.mrf.mxu0
      %v1820 = vadd.f32 %v241, %v1819
      %v1821 = vpop.f32.mrf.mxu0
      %v1822 = vpop.f32.mrf.mxu0
      %v1823 = vadd.f32 %v241, %v1822
      %v1824 = vpop.f32.mrf.mxu0
      %1825 = vmatprep.mubr.bf16.mxu0 %v1652
      %1826 = vmatmul.mubr.bf16.gmra.mxu0 %v1651
      %v1827 = vpop.f32.mrf.mxu0
      %v1828 = vadd.f32 %v241, %v1827
      %v1829 = vpop.f32.mrf.mxu0
      %v1830 = vpop.f32.mrf.mxu0
      %v1831 = vadd.f32 %v241, %v1830
      %v1832 = vpop.f32.mrf.mxu0
      %1833 = vmatprep.mubr.bf16.mxu0 %v1654
      %1834 = vmatmul.mubr.bf16.gmra.mxu0 %v1653
      %v1835 = vpop.f32.mrf.mxu0
      %v1836 = vadd.f32 %v241, %v1835
      %v1837 = vpop.f32.mrf.mxu0
      %v1838 = vpop.f32.mrf.mxu0
      %v1839 = vadd.f32 %v241, %v1838
      %v1840 = vpop.f32.mrf.mxu0
      %1841 = vmatprep.mubr.bf16.mxu0 %v1656
      %1842 = vmatmul.mubr.bf16.gmra.mxu0 %v1655
      %v1843 = vpop.f32.mrf.mxu0
      %v1844 = vadd.f32 %v241, %v1843
      %v1845 = vpop.f32.mrf.mxu0
      %v1846 = vpop.f32.mrf.mxu0
      %v1847 = vadd.f32 %v241, %v1846
      %v1848 = vpop.f32.mrf.mxu0
      %1849 = vdwg.mxu0
      %v1850 = vmax.f32 %v1724, 0.0
      %v1851 = vmax.f32 %v1727, 0.0
      %v1852 = vmax.f32 %v1732, 0.0
      %v1853 = vmax.f32 %v1735, 0.0
      %v1854 = vmax.f32 %v1740, 0.0
      %v1855 = vmax.f32 %v1743, 0.0
      %v1856 = vmax.f32 %v1748, 0.0
      %v1857 = vmax.f32 %v1751, 0.0
      %v1858 = vmax.f32 %v1756, 0.0
      %v1859 = vmax.f32 %v1759, 0.0
      %v1860 = vmax.f32 %v1764, 0.0
      %v1861 = vmax.f32 %v1767, 0.0
      %v1862 = vmax.f32 %v1772, 0.0
      %v1863 = vmax.f32 %v1775, 0.0
      %v1864 = vmax.f32 %v1780, 0.0
      %v1865 = vmax.f32 %v1783, 0.0
      %v1866 = vmax.f32 %v1788, 0.0
      %v1867 = vmax.f32 %v1791, 0.0
      %v1868 = vmax.f32 %v1796, 0.0
      %v1869 = vmax.f32 %v1799, 0.0
      %v1870 = vmax.f32 %v1804, 0.0
      %v1871 = vmax.f32 %v1807, 0.0
      %v1872 = vmax.f32 %v1812, 0.0
      %v1873 = vmax.f32 %v1815, 0.0
      %v1874 = vmax.f32 %v1820, 0.0
      %v1875 = vmax.f32 %v1823, 0.0
      %v1876 = vmax.f32 %v1828, 0.0
      %v1877 = vmax.f32 %v1831, 0.0
      %v1878 = vmax.f32 %v1836, 0.0
      %v1879 = vmax.f32 %v1839, 0.0
      %v1880 = vmax.f32 %v1844, 0.0
      %v1881 = vmax.f32 %v1847, 0.0
      %v1882 = vmax.f32 %v1464, %v1850
      %v1883 = vmax.f32 %v1465, %v1851
      %v1884 = vmax.f32 %v1466, %v1852
      %v1885 = vmax.f32 %v1467, %v1853
      %v1886 = vmax.f32 %v1468, %v1854
      %v1887 = vmax.f32 %v1469, %v1855
      %v1888 = vmax.f32 %v1470, %v1856
      %v1889 = vmax.f32 %v1471, %v1857
      %v1890 = vmax.f32 %v1472, %v1858
      %v1891 = vmax.f32 %v1473, %v1859
      %v1892 = vmax.f32 %v1474, %v1860
      %v1893 = vmax.f32 %v1475, %v1861
      %v1894 = vmax.f32 %v1476, %v1862
      %v1895 = vmax.f32 %v1477, %v1863
      %v1896 = vmax.f32 %v1478, %v1864
      %v1897 = vmax.f32 %v1479, %v1865
      %v1898 = vmax.f32 %v1480, %v1866
      %v1899 = vmax.f32 %v1481, %v1867
      %v1900 = vmax.f32 %v1482, %v1868
      %v1901 = vmax.f32 %v1483, %v1869
      %v1902 = vmax.f32 %v1484, %v1870
      %v1903 = vmax.f32 %v1485, %v1871
      %v1904 = vmax.f32 %v1486, %v1872
      %v1905 = vmax.f32 %v1487, %v1873
      %v1906 = vmax.f32 %v1488, %v1874
      %v1907 = vmax.f32 %v1489, %v1875
      %v1908 = vmax.f32 %v1490, %v1876
      %v1909 = vmax.f32 %v1491, %v1877
      %v1910 = vmax.f32 %v1492, %v1878
      %v1911 = vmax.f32 %v1493, %v1879
      %v1912 = vmax.f32 %v1494, %v1880
      %v1913 = vmax.f32 %v1495, %v1881
      %v1914 = vmax.f32 %v1078, %v1882
      %v1915 = vmax.f32 %v1079, %v1883
      %v1916 = vmax.f32 %v1080, %v1884
      %v1917 = vmax.f32 %v1081, %v1885
      %v1918 = vmax.f32 %v1082, %v1886
      %v1919 = vmax.f32 %v1083, %v1887
      %v1920 = vmax.f32 %v1084, %v1888
      %v1921 = vmax.f32 %v1085, %v1889
      %v1922 = vmax.f32 %v1086, %v1890
      %v1923 = vmax.f32 %v1087, %v1891
      %v1924 = vmax.f32 %v1088, %v1892
      %v1925 = vmax.f32 %v1089, %v1893
      %v1926 = vmax.f32 %v1090, %v1894
      %v1927 = vmax.f32 %v1091, %v1895
      %v1928 = vmax.f32 %v1092, %v1896
      %v1929 = vmax.f32 %v1093, %v1897
      %v1930 = vmax.f32 %v1094, %v1898
      %v1931 = vmax.f32 %v1095, %v1899
      %v1932 = vmax.f32 %v1096, %v1900
      %v1933 = vmax.f32 %v1097, %v1901
      %v1934 = vmax.f32 %v1098, %v1902
      %v1935 = vmax.f32 %v1099, %v1903
      %v1936 = vmax.f32 %v1100, %v1904
      %v1937 = vmax.f32 %v1101, %v1905
      %v1938 = vmax.f32 %v1102, %v1906
      %v1939 = vmax.f32 %v1103, %v1907
      %v1940 = vmax.f32 %v1104, %v1908
      %v1941 = vmax.f32 %v1105, %v1909
      %v1942 = vmax.f32 %v1106, %v1910
      %v1943 = vmax.f32 %v1107, %v1911
      %v1944 = vmax.f32 %v1108, %v1912
      %v1945 = vmax.f32 %v1109, %v1913
      %v1946 = vpack.c.bf16 %v1915, %v1914
      %v1947 = vpack.c.bf16 %v1917, %v1916
      %v1948 = vpack.c.bf16 %v1919, %v1918
      %v1949 = vpack.c.bf16 %v1921, %v1920
      %v1950 = vpack.c.bf16 %v1923, %v1922
      %v1951 = vpack.c.bf16 %v1925, %v1924
      %v1952 = vpack.c.bf16 %v1927, %v1926
      %v1953 = vpack.c.bf16 %v1929, %v1928
      %v1954 = vpack.c.bf16 %v1931, %v1930
      %v1955 = vpack.c.bf16 %v1933, %v1932
      %v1956 = vpack.c.bf16 %v1935, %v1934
      %v1957 = vpack.c.bf16 %v1937, %v1936
      %v1958 = vpack.c.bf16 %v1939, %v1938
      %v1959 = vpack.c.bf16 %v1941, %v1940
      %v1960 = vpack.c.bf16 %v1943, %v1942
      %v1961 = vpack.c.bf16 %v1945, %v1944
      %v1978 = vunpack.c.l.b16 %v1946
      %v1979 = vunpack.c.h.b16 %v1946
      %v1980 = vunpack.c.l.b16 %v1947
      %v1981 = vunpack.c.h.b16 %v1947
      %v1982 = vunpack.c.l.b16 %v1948
      %v1983 = vunpack.c.h.b16 %v1948
      %v1984 = vunpack.c.l.b16 %v1949
      %v1985 = vunpack.c.h.b16 %v1949
      %v1986 = vunpack.c.l.b16 %v1950
      %v1987 = vunpack.c.h.b16 %v1950
      %v1988 = vunpack.c.l.b16 %v1951
      %v1989 = vunpack.c.h.b16 %v1951
      %v1990 = vunpack.c.l.b16 %v1952
      %v1991 = vunpack.c.h.b16 %v1952
      %v1992 = vunpack.c.l.b16 %v1953
      %v1993 = vunpack.c.h.b16 %v1953
      %v1994 = vunpack.c.l.b16 %v1954
      %v1995 = vunpack.c.h.b16 %v1954
      %v1996 = vunpack.c.l.b16 %v1955
      %v1997 = vunpack.c.h.b16 %v1955
      %v1998 = vunpack.c.l.b16 %v1956
      %v1999 = vunpack.c.h.b16 %v1956
      %v2000 = vunpack.c.l.b16 %v1957
      %v2001 = vunpack.c.h.b16 %v1957
      %v2002 = vunpack.c.l.b16 %v1958
      %v2003 = vunpack.c.h.b16 %v1958
      %v2004 = vunpack.c.l.b16 %v1959
      %v2005 = vunpack.c.h.b16 %v1959
      %v2006 = vunpack.c.l.b16 %v1960
      %v2007 = vunpack.c.h.b16 %v1960
      %v2008 = vunpack.c.l.b16 %v1961
      %v2009 = vunpack.c.h.b16 %v1961
      %v2010 = vpack.c.b16 %v1978, %v1978
      %v2011 = vpack.c.b16 %v1979, %v1979
      %v2012 = vpack.c.b16 %v1980, %v1980
      %v2013 = vpack.c.b16 %v1981, %v1981
      %v2014 = vpack.c.b16 %v1982, %v1982
      %v2015 = vpack.c.b16 %v1983, %v1983
      %v2016 = vpack.c.b16 %v1984, %v1984
      %v2017 = vpack.c.b16 %v1985, %v1985
      %v2018 = vpack.c.b16 %v1986, %v1986
      %v2019 = vpack.c.b16 %v1987, %v1987
      %v2020 = vpack.c.b16 %v1988, %v1988
      %v2021 = vpack.c.b16 %v1989, %v1989
      %v2022 = vpack.c.b16 %v1990, %v1990
      %v2023 = vpack.c.b16 %v1991, %v1991
      %v2024 = vpack.c.b16 %v1992, %v1992
      %v2025 = vpack.c.b16 %v1993, %v1993
      %v2026 = vpack.c.b16 %v1994, %v1994
      %v2027 = vpack.c.b16 %v1995, %v1995
      %v2028 = vpack.c.b16 %v1996, %v1996
      %v2029 = vpack.c.b16 %v1997, %v1997
      %v2030 = vpack.c.b16 %v1998, %v1998
      %v2031 = vpack.c.b16 %v1999, %v1999
      %v2032 = vpack.c.b16 %v2000, %v2000
      %v2033 = vpack.c.b16 %v2001, %v2001
      %v2034 = vpack.c.b16 %v2002, %v2002
      %v2035 = vpack.c.b16 %v2003, %v2003
      %v2036 = vpack.c.b16 %v2004, %v2004
      %v2037 = vpack.c.b16 %v2005, %v2005
      %v2038 = vpack.c.b16 %v2006, %v2006
      %v2039 = vpack.c.b16 %v2007, %v2007
      %v2040 = vpack.c.b16 %v2008, %v2008
      %v2041 = vpack.c.b16 %v2009, %v2009
      %2074 = vst [vmem:[%s170] sm:$0xf] %v2010
      %2075 = vst [vmem:[%s170 + $0x4] sm:$0xf] %v2011
      %2076 = vst [vmem:[%s170 + $0x8] sm:$0xf] %v2012
      %2077 = vst [vmem:[%s170 + $0xc] sm:$0xf] %v2013
      %2078 = vst [vmem:[%s170 + $0x10] sm:$0xf] %v2014
      %2079 = vst [vmem:[%s170 + $0x14] sm:$0xf] %v2015
      %2080 = vst [vmem:[%s170 + $0x18] sm:$0xf] %v2016
      %2081 = vst [vmem:[%s170 + $0x1c] sm:$0xf] %v2017
      %2082 = vst [vmem:[%s170 + $0x20] sm:$0xf] %v2018
      %2083 = vst [vmem:[%s170 + $0x24] sm:$0xf] %v2019
      %2084 = vst [vmem:[%s170 + $0x28] sm:$0xf] %v2020
      %2085 = vst [vmem:[%s170 + $0x2c] sm:$0xf] %v2021
      %2086 = vst [vmem:[%s170 + $0x30] sm:$0xf] %v2022
      %2087 = vst [vmem:[%s170 + $0x34] sm:$0xf] %v2023
      %2088 = vst [vmem:[%s170 + $0x38] sm:$0xf] %v2024
      %2089 = vst [vmem:[%s170 + $0x3c] sm:$0xf] %v2025
      %2090 = vst [vmem:[%s170 + $0x40] sm:$0xf] %v2026
      %2091 = vst [vmem:[%s170 + $0x44] sm:$0xf] %v2027
      %2092 = vst [vmem:[%s170 + $0x48] sm:$0xf] %v2028
      %2093 = vst [vmem:[%s170 + $0x4c] sm:$0xf] %v2029
      %2094 = vst [vmem:[%s170 + $0x50] sm:$0xf] %v2030
      %2095 = vst [vmem:[%s170 + $0x54] sm:$0xf] %v2031
      %2096 = vst [vmem:[%s170 + $0x58] sm:$0xf] %v2032
      %2097 = vst [vmem:[%s170 + $0x5c] sm:$0xf] %v2033
      %2098 = vst [vmem:[%s170 + $0x60] sm:$0xf] %v2034
      %2099 = vst [vmem:[%s170 + $0x64] sm:$0xf] %v2035
      %2100 = vst [vmem:[%s170 + $0x68] sm:$0xf] %v2036
      %2101 = vst [vmem:[%s170 + $0x6c] sm:$0xf] %v2037
      %2102 = vst [vmem:[%s170 + $0x70] sm:$0xf] %v2038
      %2103 = vst [vmem:[%s170 + $0x74] sm:$0xf] %v2039
      %2104 = vst [vmem:[%s170 + $0x78] sm:$0xf] %v2040
      %2105 = vst [vmem:[%s170 + $0x7c] sm:$0xf] %v2041
      %p2106 = scmp.lt.s32.totalorder %s14, 1
      %s2107 = scalar_select %p2106, %s14, 1
      %s2108 = smul.addr %s2107, 32
      %s2109 = smul.addr %s2108, 4
      %s2110 = scalar_lea.vmem %s3, %s2109
      // Predicated region
      $region33: #{lenet_k6_forward.3} parent=31 // pred_check
        %p2111 = pneg %p100
      $region34: #{lenet_k6_forward.3} parent=31 // pred_check_branch
        %2113 = sbr.rel (%p2111) target = $region36
      $region35: #{lenet_k6_forward.3} parent=31 // pred_region
        _
      $region36: #{lenet_k6_forward.3} parent=31 // pred_fallthru
        _
    $region32: #{lenet_k6_forward.3} parent=5 // pred_fallthru
      _
    %p2114 = scmp.le.s32.totalorder 2, %s9
    // Predicated region
    $region37: #{lenet_k6_forward.3} parent=5 // pred_check
      %p2115 = pneg %p2114
    $region38: #{lenet_k6_forward.3} parent=5 // pred_check_branch
      %2117 = sbr.rel (%p2115) target = $region40
    $region39: #{lenet_k6_forward.3} parent=5 // pred_region
      %s2118 = ssub.s32 %s9, 2
      // Predicated region
      $region41: #{lenet_k6_forward.3} parent=39 // pred_check
        %p2119 = pneg %p106
      $region42: #{lenet_k6_forward.3} parent=39 // pred_check_branch
        %2121 = sbr.rel (%p2119) target = $region44
      $region43: #{lenet_k6_forward.3} parent=39 // pred_region
        %p2122 = scmp.lt.s32.totalorder %s15, 1
        %s2123 = scalar_select %p2122, %s15, 1
        %s2124 = smul.addr %s2123, 32
        %s2125 = smul.addr %s2124, 4
        %s2126 = scalar_lea.vmem %s3, %s2125
      $region44: #{lenet_k6_forward.3} parent=39 // pred_fallthru
        _
    $region40: #{lenet_k6_forward.3} parent=5 // pred_fallthru
      _
  $region6: #{lenet_k6_forward.3} parent=0 // loop_footer
    %s13 = sadd.s32 1, %s9
  $region7: #{lenet_k6_forward.3} parent=0 // loop_footer_branch
    %8 = sbr.rel target = $region3
  $region8: #{lenet_k6_forward.3} parent=0 // loop_exit
    _

// kernel: lenet_k6_forward.4
$region0: #{lenet_k6_forward.4}
  #allocation0 [shape = 'u32[]', space=smem, size = 0x4, offset = 0x4, fixed_abs, tag = 'smem constant byte address 0x4 - core index']
  #allocation1 [shape = 'u32[144,128]{1,0:T(1,128)}', space=vmem, size = 0x12000, scoped, tag = 'internal scratch']
  %s0 = inlined_call_operand.vmem [shape: bf16[2,4,36,384], index: 0, kind: input, shape index: {}]
  %s1 = inlined_call_operand.vmem [shape: bf16[384,128], index: 1, kind: input, shape index: {}]
  %s2 = inlined_call_operand.vmem [shape: f32[1,128], index: 2, kind: input, shape index: {}]
  %s3 = inlined_call_operand.vmem [shape: bf16[2,36,128], index: 3, kind: output, shape index: {}]
  %s4 = sld [smem:[#allocation0]]
  $region45: #{lenet_k6_forward.4} parent=0
    _
  %s6 = ssub.s32 1, %s4
  %s7 = scalar_select 0, %s6, %s4
  loop: start=0, step=1, limit=4
  $region2: #{lenet_k6_forward.4} parent=0 // loop_pre_header
    _
  $region3: #{lenet_k6_forward.4} parent=0 // loop_header
    %s9 = sphi 0, %s13
    %p10 = scmp.ge.s32.totalorder %s9, 4
    %s19 = sphi 0, %s21
    %s22 = sphi 0, %s19
    %s23 = sphi 0, %s22
    %s39 = sphi 0, %s23
    %s43 = sphi 0, %s43
    %s45 = sphi 0, %s43
    %s46 = sphi 0, %s45
    %s60 = sphi 0, %s46
    %s64 = sphi 0, %s64
    %s66 = sphi 0, %s64
    %s67 = sphi 0, %s66
    %s81 = sphi 0, %s67
    %s87 = sphi 0, %s89
    %s90 = sphi 0, %s87
    %s91 = sphi 0, %s90
    %s107 = sphi 0, %s91
  $region4: #{lenet_k6_forward.4} parent=0 // loop_header_branch
    %12 = sbr.rel (%p10) target = $region8
  $region5: #{lenet_k6_forward.4} parent=0 // loop_body
    %s14 = ssub.s32 %s9, 1
    %s15 = ssub.s32 %s9, 2
    %s16 = sadd.s32 %s9, 1
    %s17 = ssub.s32 %s9, %s16
    %p18 = scmp.eq.s32.totalorder %s17, 0
    %s20 = sadd.s32 %s19, 1
    %s21 = scalar_select %p18, %s19, %s20
    %p24 = pneg %p18
    %p25 = scmp.eq.s32.totalorder %s9, 1
    %p26 = por %p24, %p25
    %p27 = scmp.ne.s32.totalorder %s19, %s22
    %p28 = scmp.eq.s32.totalorder %s9, 0
    %p29 = por %p27, %p28
    %p30 = scmp.ne.s32.totalorder %s19, %s22
    %p31 = scmp.eq.s32.totalorder %s14, 1
    %p32 = por %p30, %p31
    %p33 = scmp.ne.s32.totalorder %s22, %s23
    %p34 = scmp.eq.s32.totalorder %s14, 0
    %p35 = por %p33, %p34
    %p36 = scmp.ne.s32.totalorder %s22, %s23
    %p37 = scmp.eq.s32.totalorder %s15, 1
    %p38 = por %p36, %p37
    %p40 = scmp.ne.s32.totalorder %s23, %s39
    %p41 = scmp.eq.s32.totalorder %s15, 0
    %p42 = por %p40, %p41
    %s44 = sadd.s32 %s43, 1
    %p47 = scmp.eq.s32.totalorder %s9, 1
    %p48 = scmp.ne.s32.totalorder %s43, %s45
    %p49 = scmp.eq.s32.totalorder %s9, 0
    %p50 = por %p48, %p49
    %p51 = scmp.ne.s32.totalorder %s43, %s45
    %p52 = scmp.eq.s32.totalorder %s14, 1
    %p53 = por %p51, %p52
    %p54 = scmp.ne.s32.totalorder %s45, %s46
    %p55 = scmp.eq.s32.totalorder %s14, 0
    %p56 = por %p54, %p55
    %p57 = scmp.ne.s32.totalorder %s45, %s46
    %p58 = scmp.eq.s32.totalorder %s15, 1
    %p59 = por %p57, %p58
    %p61 = scmp.ne.s32.totalorder %s46, %s60
    %p62 = scmp.eq.s32.totalorder %s15, 0
    %p63 = por %p61, %p62
    %s65 = sadd.s32 %s64, 1
    %p68 = scmp.eq.s32.totalorder %s9, 1
    %p69 = scmp.ne.s32.totalorder %s64, %s66
    %p70 = scmp.eq.s32.totalorder %s9, 0
    %p71 = por %p69, %p70
    %p72 = scmp.ne.s32.totalorder %s64, %s66
    %p73 = scmp.eq.s32.totalorder %s14, 1
    %p74 = por %p72, %p73
    %p75 = scmp.ne.s32.totalorder %s66, %s67
    %p76 = scmp.eq.s32.totalorder %s14, 0
    %p77 = por %p75, %p76
    %p78 = scmp.ne.s32.totalorder %s66, %s67
    %p79 = scmp.eq.s32.totalorder %s15, 1
    %p80 = por %p78, %p79
    %p82 = scmp.ne.s32.totalorder %s67, %s81
    %p83 = scmp.eq.s32.totalorder %s15, 0
    %p84 = por %p82, %p83
    %s85 = ssub.s32 %s9, %s16
    %p86 = scmp.eq.s32.totalorder %s85, 0
    %s88 = sadd.s32 %s87, 1
    %s89 = scalar_select %p86, %s87, %s88
    %p92 = pneg %p86
    %p93 = scmp.eq.s32.totalorder %s9, 1
    %p94 = por %p92, %p93
    %p95 = scmp.ne.s32.totalorder %s87, %s90
    %p96 = scmp.eq.s32.totalorder %s9, 0
    %p97 = por %p95, %p96
    %p98 = scmp.ne.s32.totalorder %s87, %s90
    %p99 = scmp.eq.s32.totalorder %s14, 1
    %p100 = por %p98, %p99
    %p101 = scmp.ne.s32.totalorder %s90, %s91
    %p102 = scmp.eq.s32.totalorder %s14, 0
    %p103 = por %p101, %p102
    %p104 = scmp.ne.s32.totalorder %s90, %s91
    %p105 = scmp.eq.s32.totalorder %s15, 1
    %p106 = por %p104, %p105
    %p108 = scmp.ne.s32.totalorder %s91, %s107
    %p109 = scmp.eq.s32.totalorder %s15, 0
    %p110 = por %p108, %p109
    %p111 = scmp.le.s32.totalorder 1, %s9
    %p112 = scmp.lt.s32.totalorder %s9, 3
    %p113 = pnand %p111, %p112
    %p114 = pneg %p113
    // Predicated region
    $region9: #{lenet_k6_forward.4} parent=5 // pred_check
      _
    $region10: #{lenet_k6_forward.4} parent=5 // pred_check_branch
      %116 = sbr.rel (%p113) target = $region12
    $region11: #{lenet_k6_forward.4} parent=5 // pred_region
      %s117 = ssub.s32 %s9, 1
      // Predicated region
      $region13: #{lenet_k6_forward.4} parent=11 // pred_check
        %p118 = pneg %p56
      $region14: #{lenet_k6_forward.4} parent=11 // pred_check_branch
        %120 = sbr.rel (%p118) target = $region16
      $region15: #{lenet_k6_forward.4} parent=11 // pred_region
        _
      $region16: #{lenet_k6_forward.4} parent=11 // pred_fallthru
        _
      // Predicated region
      $region17: #{lenet_k6_forward.4} parent=11 // pred_check
        %p121 = pneg %p77
      $region18: #{lenet_k6_forward.4} parent=11 // pred_check_branch
        %123 = sbr.rel (%p121) target = $region20
      $region19: #{lenet_k6_forward.4} parent=11 // pred_region
        _
      $region20: #{lenet_k6_forward.4} parent=11 // pred_fallthru
        _
    $region12: #{lenet_k6_forward.4} parent=5 // pred_fallthru
      _
    %p124 = scmp.lt.s32.totalorder %s9, 2
    // Predicated region
    $region21: #{lenet_k6_forward.4} parent=5 // pred_check
      %p125 = pneg %p124
    $region22: #{lenet_k6_forward.4} parent=5 // pred_check_branch
      %127 = sbr.rel (%p125) target = $region24
    $region23: #{lenet_k6_forward.4} parent=5 // pred_region
      // Predicated region
      $region25: #{lenet_k6_forward.4} parent=23 // pred_check
        %p128 = pneg %p29
      $region26: #{lenet_k6_forward.4} parent=23 // pred_check_branch
        %130 = sbr.rel (%p128) target = $region28
      $region27: #{lenet_k6_forward.4} parent=23 // pred_region
        %p131 = scmp.lt.s32.totalorder %s9, 1
        %s132 = scalar_select %p131, %s9, 1
        %s133 = smul.addr %s132, 60
        %s134 = smul.addr %s133, 4
        %s135 = scalar_lea.vmem %s0, %s134
      $region28: #{lenet_k6_forward.4} parent=23 // pred_fallthru
        _
    $region24: #{lenet_k6_forward.4} parent=5 // pred_fallthru
      _
    %p136 = scmp.le.s32.totalorder 1, %s9
    %p137 = scmp.lt.s32.totalorder %s9, 3
    %p138 = pnand %p136, %p137
    %p139 = pneg %p138
    // Predicated region
    $region29: #{lenet_k6_forward.4} parent=5 // pred_check
      _
    $region30: #{lenet_k6_forward.4} parent=5 // pred_check_branch
      %141 = sbr.rel (%p138) target = $region32
    $region31: #{lenet_k6_forward.4} parent=5 // pred_region
      %s142 = ssub.s32 %s9, 1
      %p143 = scmp.lt.s32.totalorder %s14, 1
      %s144 = scalar_select %p143, %s14, 1
      %s145 = smul.addr %s144, 60
      %s146 = smul.addr %s145, 4
      %s147 = scalar_lea.vmem %s0, %s146
      %p148 = pneg %p35
      %p149 = pneg %p32
      %p150 = pneg %p56
      %p151 = pneg %p53
      %p152 = pneg %p77
      %p153 = pneg %p74
      %p154 = pneg %p103
      %p155 = pneg %p100
      %p156 = scmp.lt.s32.totalorder %s14, 1
      %s157 = scalar_select %p156, %s14, 1
      %s158 = smul.addr %s157, 5
      %s159 = smul.addr %s158, 4
      %s160 = scalar_lea.vmem %s3, %s159
      %p161 = scmp.lt.s32.totalorder %s14, 1
      %s162 = scalar_select %p161, %s14, 1
      %s163 = smul.addr %s162, 60
      %s164 = smul.addr %s163, 4
      %s165 = scalar_lea.vmem %s0, %s164
      %p166 = scmp.lt.s32.totalorder %s14, 1
      %s167 = scalar_select %p166, %s14, 1
      %s168 = smul.addr %s167, 5
      %s169 = smul.addr %s168, 4
      %s170 = scalar_lea.vmem %s3, %s169
      %v172 = vld [vmem:[%s1] sm:$0xf]
      %v173 = vld [vmem:[%s1 + $0x4] sm:$0xf]
      %v174 = vld [vmem:[%s1 + $0x8] sm:$0xf]
      %v175 = vld [vmem:[%s1 + $0xc] sm:$0xf]
      %v176 = vld [vmem:[%s1 + $0x10] sm:$0xf]
      %v177 = vld [vmem:[%s1 + $0x14] sm:$0xf]
      %v178 = vld [vmem:[%s1 + $0x18] sm:$0xf]
      %v179 = vld [vmem:[%s1 + $0x1c] sm:$0xf]
      %v180 = vld [vmem:[%s1 + $0x20] sm:$0xf]
      %v181 = vld [vmem:[%s1 + $0x24] sm:$0xf]
      %v182 = vld [vmem:[%s1 + $0x28] sm:$0xf]
      %v183 = vld [vmem:[%s1 + $0x2c] sm:$0xf]
      %v184 = vld [vmem:[%s1 + $0x30] sm:$0xf]
      %v185 = vld [vmem:[%s1 + $0x34] sm:$0xf]
      %v186 = vld [vmem:[%s1 + $0x38] sm:$0xf]
      %v187 = vld [vmem:[%s1 + $0x3c] sm:$0xf]
      %v188 = vld [vmem:[%s1 + $0x40] sm:$0xf]
      %v189 = vld [vmem:[%s1 + $0x44] sm:$0xf]
      %v190 = vld [vmem:[%s1 + $0x48] sm:$0xf]
      %v191 = vld [vmem:[%s1 + $0x4c] sm:$0xf]
      %v192 = vld [vmem:[%s1 + $0x50] sm:$0xf]
      %v193 = vld [vmem:[%s1 + $0x54] sm:$0xf]
      %v194 = vld [vmem:[%s1 + $0x58] sm:$0xf]
      %v195 = vld [vmem:[%s1 + $0x5c] sm:$0xf]
      %v196 = vld [vmem:[%s1 + $0x60] sm:$0xf]
      %v197 = vld [vmem:[%s1 + $0x64] sm:$0xf]
      %v198 = vld [vmem:[%s1 + $0x68] sm:$0xf]
      %v199 = vld [vmem:[%s1 + $0x6c] sm:$0xf]
      %v200 = vld [vmem:[%s1 + $0x70] sm:$0xf]
      %v201 = vld [vmem:[%s1 + $0x74] sm:$0xf]
      %v202 = vld [vmem:[%s1 + $0x78] sm:$0xf]
      %v203 = vld [vmem:[%s1 + $0x7c] sm:$0xf]
      %v204 = vld [vmem:[%s1 + $0x80] sm:$0xf]
      %v205 = vld [vmem:[%s1 + $0x84] sm:$0xf]
      %v206 = vld [vmem:[%s1 + $0x88] sm:$0xf]
      %v207 = vld [vmem:[%s1 + $0x8c] sm:$0xf]
      %v208 = vld [vmem:[%s1 + $0x90] sm:$0xf]
      %v209 = vld [vmem:[%s1 + $0x94] sm:$0xf]
      %v210 = vld [vmem:[%s1 + $0x98] sm:$0xf]
      %v211 = vld [vmem:[%s1 + $0x9c] sm:$0xf]
      %v212 = vld [vmem:[%s1 + $0xa0] sm:$0xf]
      %v213 = vld [vmem:[%s1 + $0xa4] sm:$0xf]
      %v214 = vld [vmem:[%s1 + $0xa8] sm:$0xf]
      %v215 = vld [vmem:[%s1 + $0xac] sm:$0xf]
      %v216 = vld [vmem:[%s1 + $0xb0] sm:$0xf]
      %v217 = vld [vmem:[%s1 + $0xb4] sm:$0xf]
      %v218 = vld [vmem:[%s1 + $0xb8] sm:$0xf]
      %v219 = vld [vmem:[%s1 + $0xbc] sm:$0xf]
      %v220 = vld [vmem:[%s2] sm:$0x1]
      %v221 = vld [vmem:[%s165] sm:$0xff]
      %v222 = vld [vmem:[%s165 + $0x8] sm:$0xf]
      %v223 = vld [vmem:[%s165 + $0xc] sm:$0xff]
      %v224 = vld [vmem:[%s165 + $0x14] sm:$0xf]
      %v225 = vld [vmem:[%s165 + $0x18] sm:$0xff]
      %v226 = vld [vmem:[%s165 + $0x20] sm:$0xf]
      %v227 = vld [vmem:[%s165 + $0x24] sm:$0xff]
      %v228 = vld [vmem:[%s165 + $0x2c] sm:$0xf]
      %v229 = vld [vmem:[%s165 + $0x30] sm:$0x33]
      %v230 = vld [vmem:[%s165 + $0x38] sm:$0x3]
      %v232 = vlaneseq
      %v233 = vshrl.u32 %v232, 7
      %v234 = vsub.s32 0, %v233
      %v235 = vrot.slane %v220, %v234
      %v247 = vunpack.c.l.b16 %v221
      %v248 = vunpack.c.h.b16 %v221
      %v249 = vunpack.c.l.b16 %v222
      %v250 = vunpack.c.l.b16 %v223
      %v251 = vunpack.c.h.b16 %v223
      %v252 = vunpack.c.l.b16 %v224
      %v253 = vunpack.c.l.b16 %v225
      %v254 = vunpack.c.h.b16 %v225
      %v255 = vunpack.c.l.b16 %v226
      %v256 = vunpack.c.l.b16 %v227
      %v257 = vunpack.c.h.b16 %v227
      %v258 = vunpack.c.l.b16 %v228
      %v259 = vunpack.c.l.b16 %v229
      %v260 = vunpack.c.h.b16 %v229
      %v261 = vunpack.c.l.b16 %v230
      %v262 = vpack.c.b16 %v250, %v247
      %v263 = vpack.c.b16 %v251, %v248
      %v264 = vpack.c.b16 %v252, %v249
      %v265 = vpack.c.b16 %v256, %v253
      %v266 = vpack.c.b16 %v257, %v254
      %v267 = vpack.c.b16 %v258, %v255
      %v268 = vpack.c.b16 %v259, %v259
      %v269 = vpack.c.b16 %v260, %v260
      %v270 = vpack.c.b16 %v261, %v261
      %v328 = vunpack.c.l.b16 %v172
      %v329 = vunpack.c.l.b16 %v173
      %v330 = vunpack.c.l.b16 %v174
      %v331 = vunpack.c.l.b16 %v175
      %v332 = vunpack.c.l.b16 %v176
      %v333 = vunpack.c.l.b16 %v177
      %v334 = vunpack.c.l.b16 %v178
      %v335 = vunpack.c.l.b16 %v179
      %v336 = vunpack.c.l.b16 %v180
      %v337 = vunpack.c.l.b16 %v181
      %v338 = vunpack.c.l.b16 %v182
      %v339 = vunpack.c.l.b16 %v183
      %v340 = vunpack.c.l.b16 %v184
      %v341 = vunpack.c.l.b16 %v185
      %v342 = vunpack.c.l.b16 %v186
      %v343 = vunpack.c.l.b16 %v187
      %v344 = vunpack.c.l.b16 %v188
      %v345 = vunpack.c.l.b16 %v189
      %v346 = vunpack.c.l.b16 %v190
      %v347 = vunpack.c.l.b16 %v191
      %v348 = vunpack.c.l.b16 %v192
      %v349 = vunpack.c.l.b16 %v193
      %v350 = vunpack.c.l.b16 %v194
      %v351 = vunpack.c.l.b16 %v195
      %v352 = vunpack.c.l.b16 %v196
      %v353 = vunpack.c.l.b16 %v197
      %v354 = vunpack.c.l.b16 %v198
      %v355 = vunpack.c.l.b16 %v199
      %v356 = vunpack.c.l.b16 %v200
      %v357 = vunpack.c.l.b16 %v201
      %v358 = vunpack.c.l.b16 %v202
      %v359 = vunpack.c.l.b16 %v203
      %v360 = vunpack.c.l.b16 %v204
      %v361 = vunpack.c.l.b16 %v205
      %v362 = vunpack.c.l.b16 %v206
      %v363 = vunpack.c.l.b16 %v207
      %v364 = vunpack.c.l.b16 %v208
      %v365 = vunpack.c.l.b16 %v209
      %v366 = vunpack.c.l.b16 %v210
      %v367 = vunpack.c.l.b16 %v211
      %v368 = vunpack.c.l.b16 %v212
      %v369 = vunpack.c.l.b16 %v213
      %v370 = vunpack.c.l.b16 %v214
      %v371 = vunpack.c.l.b16 %v215
      %v372 = vunpack.c.l.b16 %v216
      %v373 = vunpack.c.l.b16 %v217
      %v374 = vunpack.c.l.b16 %v218
      %v375 = vunpack.c.l.b16 %v219
      %v376 = vpack.c.b16 %v329, %v328
      %v377 = vpack.c.b16 %v331, %v330
      %v378 = vpack.c.b16 %v333, %v332
      %v379 = vpack.c.b16 %v335, %v334
      %v380 = vpack.c.b16 %v337, %v336
      %v381 = vpack.c.b16 %v339, %v338
      %v382 = vpack.c.b16 %v341, %v340
      %v383 = vpack.c.b16 %v343, %v342
      %v384 = vpack.c.b16 %v345, %v344
      %v385 = vpack.c.b16 %v347, %v346
      %v386 = vpack.c.b16 %v349, %v348
      %v387 = vpack.c.b16 %v351, %v350
      %v388 = vpack.c.b16 %v353, %v352
      %v389 = vpack.c.b16 %v355, %v354
      %v390 = vpack.c.b16 %v357, %v356
      %v391 = vpack.c.b16 %v359, %v358
      %v392 = vpack.c.b16 %v361, %v360
      %v393 = vpack.c.b16 %v363, %v362
      %v394 = vpack.c.b16 %v365, %v364
      %v395 = vpack.c.b16 %v367, %v366
      %v396 = vpack.c.b16 %v369, %v368
      %v397 = vpack.c.b16 %v371, %v370
      %v398 = vpack.c.b16 %v373, %v372
      %v399 = vpack.c.b16 %v375, %v374
      %424 = vmatprep.subr.bf16.mxu0 0
      %425 = vmatpush1.bf16.msra.mxu0 %v383
      %426 = vmatprep.subr.bf16.mxu0 0
      %427 = vmatpush1.bf16.msra.mxu0 %v382
      %428 = vmatprep.subr.bf16.mxu0 0
      %429 = vmatpush1.bf16.msra.mxu0 %v381
      %430 = vmatprep.subr.bf16.mxu0 0
      %431 = vmatpush1.bf16.msra.mxu0 %v380
      %432 = vmatprep.subr.bf16.mxu0 0
      %433 = vmatpush1.bf16.msra.mxu0 %v379
      %434 = vmatprep.subr.bf16.mxu0 0
      %435 = vmatpush1.bf16.msra.mxu0 %v378
      %436 = vmatprep.subr.bf16.mxu0 0
      %437 = vmatpush1.bf16.msra.mxu0 %v377
      %438 = vmatprep.subr.bf16.mxu0 0
      %439 = vmatpush1.bf16.msra.mxu0 %v376
      %440 = vmatprep.subr.bf16.mxu0 0
      %441 = vmatpush2.bf16.msra.mxu0 %v391
      %442 = vmatprep.subr.bf16.mxu0 0
      %443 = vmatpush2.bf16.msra.mxu0 %v390
      %444 = vmatprep.subr.bf16.mxu0 0
      %445 = vmatpush2.bf16.msra.mxu0 %v389
      %446 = vmatprep.subr.bf16.mxu0 0
      %447 = vmatpush2.bf16.msra.mxu0 %v388
      %448 = vmatprep.subr.bf16.mxu0 0
      %449 = vmatpush2.bf16.msra.mxu0 %v387
      %450 = vmatprep.subr.bf16.mxu0 0
      %451 = vmatpush2.bf16.msra.mxu0 %v386
      %452 = vmatprep.subr.bf16.mxu0 0
      %453 = vmatpush2.bf16.msra.mxu0 %v385
      %454 = vmatprep.subr.bf16.mxu0 0
      %455 = vmatpush2.bf16.msra.mxu0 %v384
      %456 = vmatprep.mubr.bf16.mxu0 %v263
      %457 = vmatmul.mubr.bf16.gmra.mxu0 %v262
      %v458 = vpop.f32.mrf.mxu0
      %v459 = vadd.f32 %v235, %v458
      %v460 = vpop.f32.mrf.mxu0
      %v461 = vpop.f32.mrf.mxu0
      %v462 = vadd.f32 %v235, %v461
      %v463 = vpop.f32.mrf.mxu0
      %464 = vmatprep.mubr.bf16.mxu0 %v266
      %465 = vmatmul.mubr.bf16.gmra.mxu0 %v265
      %v466 = vpop.f32.mrf.mxu0
      %v467 = vadd.f32 %v235, %v466
      %v468 = vpop.f32.mrf.mxu0
      %v469 = vpop.f32.mrf.mxu0
      %v470 = vadd.f32 %v235, %v469
      %v471 = vpop.f32.mrf.mxu0
      %472 = vmatprep.mubr.bf16.mxu0 %v269
      %473 = vmatmul.mubr.bf16.gmra.mxu0 %v268
      %v474 = vpop.f32.mrf.mxu0
      %v475 = vadd.f32 %v235, %v474
      %v476 = vpop.f32.mrf.mxu0
      %v477 = vpop.f32.mrf.mxu0
      %v478 = vpop.f32.mrf.mxu0
      %479 = vdwg.mxu0
      %480 = vmatprep.subr.bf16.mxu0 0
      %481 = vmatpush1.bf16.msra.mxu0 %v399
      %482 = vmatprep.subr.bf16.mxu0 0
      %483 = vmatpush1.bf16.msra.mxu0 %v398
      %484 = vmatprep.subr.bf16.mxu0 0
      %485 = vmatpush1.bf16.msra.mxu0 %v397
      %486 = vmatprep.subr.bf16.mxu0 0
      %487 = vmatpush1.bf16.msra.mxu0 %v396
      %488 = vmatprep.subr.bf16.mxu0 0
      %489 = vmatpush1.bf16.msra.mxu0 %v395
      %490 = vmatprep.subr.bf16.mxu0 0
      %491 = vmatpush1.bf16.msra.mxu0 %v394
      %492 = vmatprep.subr.bf16.mxu0 0
      %493 = vmatpush1.bf16.msra.mxu0 %v393
      %494 = vmatprep.subr.bf16.mxu0 0
      %495 = vmatpush1.bf16.msra.mxu0 %v392
      %496 = vmatprep.subr.bf16.mxu0 0
      %497 = vmatpush2.bf16.msra.mxu0 0
      %498 = vmatprep.subr.bf16.mxu0 0
      %499 = vmatpush2.bf16.msra.mxu0 0
      %500 = vmatprep.subr.bf16.mxu0 0
      %501 = vmatpush2.bf16.msra.mxu0 0
      %502 = vmatprep.subr.bf16.mxu0 0
      %503 = vmatpush2.bf16.msra.mxu0 0
      %504 = vmatprep.subr.bf16.mxu0 0
      %505 = vmatpush2.bf16.msra.mxu0 0
      %506 = vmatprep.subr.bf16.mxu0 0
      %507 = vmatpush2.bf16.msra.mxu0 0
      %508 = vmatprep.subr.bf16.mxu0 0
      %509 = vmatpush2.bf16.msra.mxu0 0
      %510 = vmatprep.subr.bf16.mxu0 0
      %511 = vmatpush2.bf16.msra.mxu0 0
      %512 = vmatprep.mubr.bf16.mxu0 0
      %513 = vmatmul.mubr.bf16.gmra.mxu0 %v264
      %v514 = vpop.f32.mrf.mxu0
      %v515 = vadd.f32 %v459, %v514
      %v516 = vpop.f32.mrf.mxu0
      %v517 = vpop.f32.mrf.mxu0
      %v518 = vadd.f32 %v462, %v517
      %v519 = vpop.f32.mrf.mxu0
      %520 = vmatprep.mubr.bf16.mxu0 0
      %521 = vmatmul.mubr.bf16.gmra.mxu0 %v267
      %v522 = vpop.f32.mrf.mxu0
      %v523 = vadd.f32 %v467, %v522
      %v524 = vpop.f32.mrf.mxu0
      %v525 = vpop.f32.mrf.mxu0
      %v526 = vadd.f32 %v470, %v525
      %v527 = vpop.f32.mrf.mxu0
      %528 = vmatprep.mubr.bf16.mxu0 0
      %529 = vmatmul.mubr.bf16.gmra.mxu0 %v270
      %v530 = vpop.f32.mrf.mxu0
      %v531 = vadd.f32 %v475, %v530
      %v532 = vpop.f32.mrf.mxu0
      %v533 = vpop.f32.mrf.mxu0
      %v534 = vpop.f32.mrf.mxu0
      %535 = vdwg.mxu0
      %v536 = vmax.f32 %v515, 0.0
      %v537 = vmax.f32 %v518, 0.0
      %v538 = vmax.f32 %v523, 0.0
      %v539 = vmax.f32 %v526, 0.0
      %v540 = vmax.f32 %v531, 0.0
      %s541 = scalar_lea.vmem %s165, 60
      %v542 = vld [vmem:[%s541] sm:$0xff]
      %v543 = vld [vmem:[%s541 + $0x8] sm:$0xf]
      %v544 = vld [vmem:[%s541 + $0xc] sm:$0xff]
      %v545 = vld [vmem:[%s541 + $0x14] sm:$0xf]
      %v546 = vld [vmem:[%s541 + $0x18] sm:$0xff]
      %v547 = vld [vmem:[%s541 + $0x20] sm:$0xf]
      %v548 = vld [vmem:[%s541 + $0x24] sm:$0xff]
      %v549 = vld [vmem:[%s541 + $0x2c] sm:$0xf]
      %v550 = vld [vmem:[%s541 + $0x30] sm:$0x33]
      %v551 = vld [vmem:[%s541 + $0x38] sm:$0x3]
      %v562 = vunpack.c.l.b16 %v542
      %v563 = vunpack.c.h.b16 %v542
      %v564 = vunpack.c.l.b16 %v543
      %v565 = vunpack.c.l.b16 %v544
      %v566 = vunpack.c.h.b16 %v544
      %v567 = vunpack.c.l.b16 %v545
      %v568 = vunpack.c.l.b16 %v546
      %v569 = vunpack.c.h.b16 %v546
      %v570 = vunpack.c.l.b16 %v547
      %v571 = vunpack.c.l.b16 %v548
      %v572 = vunpack.c.h.b16 %v548
      %v573 = vunpack.c.l.b16 %v549
      %v574 = vunpack.c.l.b16 %v550
      %v575 = vunpack.c.h.b16 %v550
      %v576 = vunpack.c.l.b16 %v551
      %v577 = vpack.c.b16 %v565, %v562
      %v578 = vpack.c.b16 %v566, %v563
      %v579 = vpack.c.b16 %v567, %v564
      %v580 = vpack.c.b16 %v571, %v568
      %v581 = vpack.c.b16 %v572, %v569
      %v582 = vpack.c.b16 %v573, %v570
      %v583 = vpack.c.b16 %v574, %v574
      %v584 = vpack.c.b16 %v575, %v575
      %v585 = vpack.c.b16 %v576, %v576
      %595 = vmatprep.subr.bf16.mxu0 0
      %596 = vmatpush1.bf16.msra.mxu0 %v383
      %597 = vmatprep.subr.bf16.mxu0 0
      %598 = vmatpush1.bf16.msra.mxu0 %v382
      %599 = vmatprep.subr.bf16.mxu0 0
      %600 = vmatpush1.bf16.msra.mxu0 %v381
      %601 = vmatprep.subr.bf16.mxu0 0
      %602 = vmatpush1.bf16.msra.mxu0 %v380
      %603 = vmatprep.subr.bf16.mxu0 0
      %604 = vmatpush1.bf16.msra.mxu0 %v379
      %605 = vmatprep.subr.bf16.mxu0 0
      %606 = vmatpush1.bf16.msra.mxu0 %v378
      %607 = vmatprep.subr.bf16.mxu0 0
      %608 = vmatpush1.bf16.msra.mxu0 %v377
      %609 = vmatprep.subr.bf16.mxu0 0
      %610 = vmatpush1.bf16.msra.mxu0 %v376
      %611 = vmatprep.subr.bf16.mxu0 0
      %612 = vmatpush2.bf16.msra.mxu0 %v391
      %613 = vmatprep.subr.bf16.mxu0 0
      %614 = vmatpush2.bf16.msra.mxu0 %v390
      %615 = vmatprep.subr.bf16.mxu0 0
      %616 = vmatpush2.bf16.msra.mxu0 %v389
      %617 = vmatprep.subr.bf16.mxu0 0
      %618 = vmatpush2.bf16.msra.mxu0 %v388
      %619 = vmatprep.subr.bf16.mxu0 0
      %620 = vmatpush2.bf16.msra.mxu0 %v387
      %621 = vmatprep.subr.bf16.mxu0 0
      %622 = vmatpush2.bf16.msra.mxu0 %v386
      %623 = vmatprep.subr.bf16.mxu0 0
      %624 = vmatpush2.bf16.msra.mxu0 %v385
      %625 = vmatprep.subr.bf16.mxu0 0
      %626 = vmatpush2.bf16.msra.mxu0 %v384
      %627 = vmatprep.mubr.bf16.mxu0 %v578
      %628 = vmatmul.mubr.bf16.gmra.mxu0 %v577
      %v629 = vpop.f32.mrf.mxu0
      %v630 = vadd.f32 %v235, %v629
      %v631 = vpop.f32.mrf.mxu0
      %v632 = vpop.f32.mrf.mxu0
      %v633 = vadd.f32 %v235, %v632
      %v634 = vpop.f32.mrf.mxu0
      %635 = vmatprep.mubr.bf16.mxu0 %v581
      %636 = vmatmul.mubr.bf16.gmra.mxu0 %v580
      %v637 = vpop.f32.mrf.mxu0
      %v638 = vadd.f32 %v235, %v637
      %v639 = vpop.f32.mrf.mxu0
      %v640 = vpop.f32.mrf.mxu0
      %v641 = vadd.f32 %v235, %v640
      %v642 = vpop.f32.mrf.mxu0
      %643 = vmatprep.mubr.bf16.mxu0 %v584
      %644 = vmatmul.mubr.bf16.gmra.mxu0 %v583
      %v645 = vpop.f32.mrf.mxu0
      %v646 = vadd.f32 %v235, %v645
      %v647 = vpop.f32.mrf.mxu0
      %v648 = vpop.f32.mrf.mxu0
      %v649 = vpop.f32.mrf.mxu0
      %650 = vdwg.mxu0
      %651 = vmatprep.subr.bf16.mxu0 0
      %652 = vmatpush1.bf16.msra.mxu0 %v399
      %653 = vmatprep.subr.bf16.mxu0 0
      %654 = vmatpush1.bf16.msra.mxu0 %v398
      %655 = vmatprep.subr.bf16.mxu0 0
      %656 = vmatpush1.bf16.msra.mxu0 %v397
      %657 = vmatprep.subr.bf16.mxu0 0
      %658 = vmatpush1.bf16.msra.mxu0 %v396
      %659 = vmatprep.subr.bf16.mxu0 0
      %660 = vmatpush1.bf16.msra.mxu0 %v395
      %661 = vmatprep.subr.bf16.mxu0 0
      %662 = vmatpush1.bf16.msra.mxu0 %v394
      %663 = vmatprep.subr.bf16.mxu0 0
      %664 = vmatpush1.bf16.msra.mxu0 %v393
      %665 = vmatprep.subr.bf16.mxu0 0
      %666 = vmatpush1.bf16.msra.mxu0 %v392
      %667 = vmatprep.subr.bf16.mxu0 0
      %668 = vmatpush2.bf16.msra.mxu0 0
      %669 = vmatprep.subr.bf16.mxu0 0
      %670 = vmatpush2.bf16.msra.mxu0 0
      %671 = vmatprep.subr.bf16.mxu0 0
      %672 = vmatpush2.bf16.msra.mxu0 0
      %673 = vmatprep.subr.bf16.mxu0 0
      %674 = vmatpush2.bf16.msra.mxu0 0
      %675 = vmatprep.subr.bf16.mxu0 0
      %676 = vmatpush2.bf16.msra.mxu0 0
      %677 = vmatprep.subr.bf16.mxu0 0
      %678 = vmatpush2.bf16.msra.mxu0 0
      %679 = vmatprep.subr.bf16.mxu0 0
      %680 = vmatpush2.bf16.msra.mxu0 0
      %681 = vmatprep.subr.bf16.mxu0 0
      %682 = vmatpush2.bf16.msra.mxu0 0
      %683 = vmatprep.mubr.bf16.mxu0 0
      %684 = vmatmul.mubr.bf16.gmra.mxu0 %v579
      %v685 = vpop.f32.mrf.mxu0
      %v686 = vadd.f32 %v630, %v685
      %v687 = vpop.f32.mrf.mxu0
      %v688 = vpop.f32.mrf.mxu0
      %v689 = vadd.f32 %v633, %v688
      %v690 = vpop.f32.mrf.mxu0
      %691 = vmatprep.mubr.bf16.mxu0 0
      %692 = vmatmul.mubr.bf16.gmra.mxu0 %v582
      %v693 = vpop.f32.mrf.mxu0
      %v694 = vadd.f32 %v638, %v693
      %v695 = vpop.f32.mrf.mxu0
      %v696 = vpop.f32.mrf.mxu0
      %v697 = vadd.f32 %v641, %v696
      %v698 = vpop.f32.mrf.mxu0
      %699 = vmatprep.mubr.bf16.mxu0 0
      %700 = vmatmul.mubr.bf16.gmra.mxu0 %v585
      %v701 = vpop.f32.mrf.mxu0
      %v702 = vadd.f32 %v646, %v701
      %v703 = vpop.f32.mrf.mxu0
      %v704 = vpop.f32.mrf.mxu0
      %v705 = vpop.f32.mrf.mxu0
      %706 = vdwg.mxu0
      %v707 = vmax.f32 %v686, 0.0
      %v708 = vmax.f32 %v689, 0.0
      %v709 = vmax.f32 %v694, 0.0
      %v710 = vmax.f32 %v697, 0.0
      %v711 = vmax.f32 %v702, 0.0
      %v712 = vmax.f32 %v536, %v707
      %v713 = vmax.f32 %v537, %v708
      %v714 = vmax.f32 %v538, %v709
      %v715 = vmax.f32 %v539, %v710
      %v716 = vmax.f32 %v540, %v711
      %s717 = scalar_lea.vmem %s165, 120
      %v718 = vld [vmem:[%s717] sm:$0xff]
      %v719 = vld [vmem:[%s717 + $0x8] sm:$0xf]
      %v720 = vld [vmem:[%s717 + $0xc] sm:$0xff]
      %v721 = vld [vmem:[%s717 + $0x14] sm:$0xf]
      %v722 = vld [vmem:[%s717 + $0x18] sm:$0xff]
      %v723 = vld [vmem:[%s717 + $0x20] sm:$0xf]
      %v724 = vld [vmem:[%s717 + $0x24] sm:$0xff]
      %v725 = vld [vmem:[%s717 + $0x2c] sm:$0xf]
      %v726 = vld [vmem:[%s717 + $0x30] sm:$0x33]
      %v727 = vld [vmem:[%s717 + $0x38] sm:$0x3]
      %v738 = vunpack.c.l.b16 %v718
      %v739 = vunpack.c.h.b16 %v718
      %v740 = vunpack.c.l.b16 %v719
      %v741 = vunpack.c.l.b16 %v720
      %v742 = vunpack.c.h.b16 %v720
      %v743 = vunpack.c.l.b16 %v721
      %v744 = vunpack.c.l.b16 %v722
      %v745 = vunpack.c.h.b16 %v722
      %v746 = vunpack.c.l.b16 %v723
      %v747 = vunpack.c.l.b16 %v724
      %v748 = vunpack.c.h.b16 %v724
      %v749 = vunpack.c.l.b16 %v725
      %v750 = vunpack.c.l.b16 %v726
      %v751 = vunpack.c.h.b16 %v726
      %v752 = vunpack.c.l.b16 %v727
      %v753 = vpack.c.b16 %v741, %v738
      %v754 = vpack.c.b16 %v742, %v739
      %v755 = vpack.c.b16 %v743, %v740
      %v756 = vpack.c.b16 %v747, %v744
      %v757 = vpack.c.b16 %v748, %v745
      %v758 = vpack.c.b16 %v749, %v746
      %v759 = vpack.c.b16 %v750, %v750
      %v760 = vpack.c.b16 %v751, %v751
      %v761 = vpack.c.b16 %v752, %v752
      %771 = vmatprep.subr.bf16.mxu0 0
      %772 = vmatpush1.bf16.msra.mxu0 %v383
      %773 = vmatprep.subr.bf16.mxu0 0
      %774 = vmatpush1.bf16.msra.mxu0 %v382
      %775 = vmatprep.subr.bf16.mxu0 0
      %776 = vmatpush1.bf16.msra.mxu0 %v381
      %777 = vmatprep.subr.bf16.mxu0 0
      %778 = vmatpush1.bf16.msra.mxu0 %v380
      %779 = vmatprep.subr.bf16.mxu0 0
      %780 = vmatpush1.bf16.msra.mxu0 %v379
      %781 = vmatprep.subr.bf16.mxu0 0
      %782 = vmatpush1.bf16.msra.mxu0 %v378
      %783 = vmatprep.subr.bf16.mxu0 0
      %784 = vmatpush1.bf16.msra.mxu0 %v377
      %785 = vmatprep.subr.bf16.mxu0 0
      %786 = vmatpush1.bf16.msra.mxu0 %v376
      %787 = vmatprep.subr.bf16.mxu0 0
      %788 = vmatpush2.bf16.msra.mxu0 %v391
      %789 = vmatprep.subr.bf16.mxu0 0
      %790 = vmatpush2.bf16.msra.mxu0 %v390
      %791 = vmatprep.subr.bf16.mxu0 0
      %792 = vmatpush2.bf16.msra.mxu0 %v389
      %793 = vmatprep.subr.bf16.mxu0 0
      %794 = vmatpush2.bf16.msra.mxu0 %v388
      %795 = vmatprep.subr.bf16.mxu0 0
      %796 = vmatpush2.bf16.msra.mxu0 %v387
      %797 = vmatprep.subr.bf16.mxu0 0
      %798 = vmatpush2.bf16.msra.mxu0 %v386
      %799 = vmatprep.subr.bf16.mxu0 0
      %800 = vmatpush2.bf16.msra.mxu0 %v385
      %801 = vmatprep.subr.bf16.mxu0 0
      %802 = vmatpush2.bf16.msra.mxu0 %v384
      %803 = vmatprep.mubr.bf16.mxu0 %v754
      %804 = vmatmul.mubr.bf16.gmra.mxu0 %v753
      %v805 = vpop.f32.mrf.mxu0
      %v806 = vadd.f32 %v235, %v805
      %v807 = vpop.f32.mrf.mxu0
      %v808 = vpop.f32.mrf.mxu0
      %v809 = vadd.f32 %v235, %v808
      %v810 = vpop.f32.mrf.mxu0
      %811 = vmatprep.mubr.bf16.mxu0 %v757
      %812 = vmatmul.mubr.bf16.gmra.mxu0 %v756
      %v813 = vpop.f32.mrf.mxu0
      %v814 = vadd.f32 %v235, %v813
      %v815 = vpop.f32.mrf.mxu0
      %v816 = vpop.f32.mrf.mxu0
      %v817 = vadd.f32 %v235, %v816
      %v818 = vpop.f32.mrf.mxu0
      %819 = vmatprep.mubr.bf16.mxu0 %v760
      %820 = vmatmul.mubr.bf16.gmra.mxu0 %v759
      %v821 = vpop.f32.mrf.mxu0
      %v822 = vadd.f32 %v235, %v821
      %v823 = vpop.f32.mrf.mxu0
      %v824 = vpop.f32.mrf.mxu0
      %v825 = vpop.f32.mrf.mxu0
      %826 = vdwg.mxu0
      %827 = vmatprep.subr.bf16.mxu0 0
      %828 = vmatpush1.bf16.msra.mxu0 %v399
      %829 = vmatprep.subr.bf16.mxu0 0
      %830 = vmatpush1.bf16.msra.mxu0 %v398
      %831 = vmatprep.subr.bf16.mxu0 0
      %832 = vmatpush1.bf16.msra.mxu0 %v397
      %833 = vmatprep.subr.bf16.mxu0 0
      %834 = vmatpush1.bf16.msra.mxu0 %v396
      %835 = vmatprep.subr.bf16.mxu0 0
      %836 = vmatpush1.bf16.msra.mxu0 %v395
      %837 = vmatprep.subr.bf16.mxu0 0
      %838 = vmatpush1.bf16.msra.mxu0 %v394
      %839 = vmatprep.subr.bf16.mxu0 0
      %840 = vmatpush1.bf16.msra.mxu0 %v393
      %841 = vmatprep.subr.bf16.mxu0 0
      %842 = vmatpush1.bf16.msra.mxu0 %v392
      %843 = vmatprep.subr.bf16.mxu0 0
      %844 = vmatpush2.bf16.msra.mxu0 0
      %845 = vmatprep.subr.bf16.mxu0 0
      %846 = vmatpush2.bf16.msra.mxu0 0
      %847 = vmatprep.subr.bf16.mxu0 0
      %848 = vmatpush2.bf16.msra.mxu0 0
      %849 = vmatprep.subr.bf16.mxu0 0
      %850 = vmatpush2.bf16.msra.mxu0 0
      %851 = vmatprep.subr.bf16.mxu0 0
      %852 = vmatpush2.bf16.msra.mxu0 0
      %853 = vmatprep.subr.bf16.mxu0 0
      %854 = vmatpush2.bf16.msra.mxu0 0
      %855 = vmatprep.subr.bf16.mxu0 0
      %856 = vmatpush2.bf16.msra.mxu0 0
      %857 = vmatprep.subr.bf16.mxu0 0
      %858 = vmatpush2.bf16.msra.mxu0 0
      %859 = vmatprep.mubr.bf16.mxu0 0
      %860 = vmatmul.mubr.bf16.gmra.mxu0 %v755
      %v861 = vpop.f32.mrf.mxu0
      %v862 = vadd.f32 %v806, %v861
      %v863 = vpop.f32.mrf.mxu0
      %v864 = vpop.f32.mrf.mxu0
      %v865 = vadd.f32 %v809, %v864
      %v866 = vpop.f32.mrf.mxu0
      %867 = vmatprep.mubr.bf16.mxu0 0
      %868 = vmatmul.mubr.bf16.gmra.mxu0 %v758
      %v869 = vpop.f32.mrf.mxu0
      %v870 = vadd.f32 %v814, %v869
      %v871 = vpop.f32.mrf.mxu0
      %v872 = vpop.f32.mrf.mxu0
      %v873 = vadd.f32 %v817, %v872
      %v874 = vpop.f32.mrf.mxu0
      %875 = vmatprep.mubr.bf16.mxu0 0
      %876 = vmatmul.mubr.bf16.gmra.mxu0 %v761
      %v877 = vpop.f32.mrf.mxu0
      %v878 = vadd.f32 %v822, %v877
      %v879 = vpop.f32.mrf.mxu0
      %v880 = vpop.f32.mrf.mxu0
      %v881 = vpop.f32.mrf.mxu0
      %882 = vdwg.mxu0
      %v883 = vmax.f32 %v862, 0.0
      %v884 = vmax.f32 %v865, 0.0
      %v885 = vmax.f32 %v870, 0.0
      %v886 = vmax.f32 %v873, 0.0
      %v887 = vmax.f32 %v878, 0.0
      %s888 = scalar_lea.vmem %s165, 180
      %v889 = vld [vmem:[%s888] sm:$0xff]
      %v890 = vld [vmem:[%s888 + $0x8] sm:$0xf]
      %v891 = vld [vmem:[%s888 + $0xc] sm:$0xff]
      %v892 = vld [vmem:[%s888 + $0x14] sm:$0xf]
      %v893 = vld [vmem:[%s888 + $0x18] sm:$0xff]
      %v894 = vld [vmem:[%s888 + $0x20] sm:$0xf]
      %v895 = vld [vmem:[%s888 + $0x24] sm:$0xff]
      %v896 = vld [vmem:[%s888 + $0x2c] sm:$0xf]
      %v897 = vld [vmem:[%s888 + $0x30] sm:$0x33]
      %v898 = vld [vmem:[%s888 + $0x38] sm:$0x3]
      %v909 = vunpack.c.l.b16 %v889
      %v910 = vunpack.c.h.b16 %v889
      %v911 = vunpack.c.l.b16 %v890
      %v912 = vunpack.c.l.b16 %v891
      %v913 = vunpack.c.h.b16 %v891
      %v914 = vunpack.c.l.b16 %v892
      %v915 = vunpack.c.l.b16 %v893
      %v916 = vunpack.c.h.b16 %v893
      %v917 = vunpack.c.l.b16 %v894
      %v918 = vunpack.c.l.b16 %v895
      %v919 = vunpack.c.h.b16 %v895
      %v920 = vunpack.c.l.b16 %v896
      %v921 = vunpack.c.l.b16 %v897
      %v922 = vunpack.c.h.b16 %v897
      %v923 = vunpack.c.l.b16 %v898
      %v924 = vpack.c.b16 %v912, %v909
      %v925 = vpack.c.b16 %v913, %v910
      %v926 = vpack.c.b16 %v914, %v911
      %v927 = vpack.c.b16 %v918, %v915
      %v928 = vpack.c.b16 %v919, %v916
      %v929 = vpack.c.b16 %v920, %v917
      %v930 = vpack.c.b16 %v921, %v921
      %v931 = vpack.c.b16 %v922, %v922
      %v932 = vpack.c.b16 %v923, %v923
      %942 = vmatprep.subr.bf16.mxu0 0
      %943 = vmatpush1.bf16.msra.mxu0 %v383
      %944 = vmatprep.subr.bf16.mxu0 0
      %945 = vmatpush1.bf16.msra.mxu0 %v382
      %946 = vmatprep.subr.bf16.mxu0 0
      %947 = vmatpush1.bf16.msra.mxu0 %v381
      %948 = vmatprep.subr.bf16.mxu0 0
      %949 = vmatpush1.bf16.msra.mxu0 %v380
      %950 = vmatprep.subr.bf16.mxu0 0
      %951 = vmatpush1.bf16.msra.mxu0 %v379
      %952 = vmatprep.subr.bf16.mxu0 0
      %953 = vmatpush1.bf16.msra.mxu0 %v378
      %954 = vmatprep.subr.bf16.mxu0 0
      %955 = vmatpush1.bf16.msra.mxu0 %v377
      %956 = vmatprep.subr.bf16.mxu0 0
      %957 = vmatpush1.bf16.msra.mxu0 %v376
      %958 = vmatprep.subr.bf16.mxu0 0
      %959 = vmatpush2.bf16.msra.mxu0 %v391
      %960 = vmatprep.subr.bf16.mxu0 0
      %961 = vmatpush2.bf16.msra.mxu0 %v390
      %962 = vmatprep.subr.bf16.mxu0 0
      %963 = vmatpush2.bf16.msra.mxu0 %v389
      %964 = vmatprep.subr.bf16.mxu0 0
      %965 = vmatpush2.bf16.msra.mxu0 %v388
      %966 = vmatprep.subr.bf16.mxu0 0
      %967 = vmatpush2.bf16.msra.mxu0 %v387
      %968 = vmatprep.subr.bf16.mxu0 0
      %969 = vmatpush2.bf16.msra.mxu0 %v386
      %970 = vmatprep.subr.bf16.mxu0 0
      %971 = vmatpush2.bf16.msra.mxu0 %v385
      %972 = vmatprep.subr.bf16.mxu0 0
      %973 = vmatpush2.bf16.msra.mxu0 %v384
      %974 = vmatprep.mubr.bf16.mxu0 %v925
      %975 = vmatmul.mubr.bf16.gmra.mxu0 %v924
      %v976 = vpop.f32.mrf.mxu0
      %v977 = vadd.f32 %v235, %v976
      %v978 = vpop.f32.mrf.mxu0
      %v979 = vpop.f32.mrf.mxu0
      %v980 = vadd.f32 %v235, %v979
      %v981 = vpop.f32.mrf.mxu0
      %982 = vmatprep.mubr.bf16.mxu0 %v928
      %983 = vmatmul.mubr.bf16.gmra.mxu0 %v927
      %v984 = vpop.f32.mrf.mxu0
      %v985 = vadd.f32 %v235, %v984
      %v986 = vpop.f32.mrf.mxu0
      %v987 = vpop.f32.mrf.mxu0
      %v988 = vadd.f32 %v235, %v987
      %v989 = vpop.f32.mrf.mxu0
      %990 = vmatprep.mubr.bf16.mxu0 %v931
      %991 = vmatmul.mubr.bf16.gmra.mxu0 %v930
      %v992 = vpop.f32.mrf.mxu0
      %v993 = vadd.f32 %v235, %v992
      %v994 = vpop.f32.mrf.mxu0
      %v995 = vpop.f32.mrf.mxu0
      %v996 = vpop.f32.mrf.mxu0
      %997 = vdwg.mxu0
      %998 = vmatprep.subr.bf16.mxu0 0
      %999 = vmatpush1.bf16.msra.mxu0 %v399
      %1000 = vmatprep.subr.bf16.mxu0 0
      %1001 = vmatpush1.bf16.msra.mxu0 %v398
      %1002 = vmatprep.subr.bf16.mxu0 0
      %1003 = vmatpush1.bf16.msra.mxu0 %v397
      %1004 = vmatprep.subr.bf16.mxu0 0
      %1005 = vmatpush1.bf16.msra.mxu0 %v396
      %1006 = vmatprep.subr.bf16.mxu0 0
      %1007 = vmatpush1.bf16.msra.mxu0 %v395
      %1008 = vmatprep.subr.bf16.mxu0 0
      %1009 = vmatpush1.bf16.msra.mxu0 %v394
      %1010 = vmatprep.subr.bf16.mxu0 0
      %1011 = vmatpush1.bf16.msra.mxu0 %v393
      %1012 = vmatprep.subr.bf16.mxu0 0
      %1013 = vmatpush1.bf16.msra.mxu0 %v392
      %1014 = vmatprep.subr.bf16.mxu0 0
      %1015 = vmatpush2.bf16.msra.mxu0 0
      %1016 = vmatprep.subr.bf16.mxu0 0
      %1017 = vmatpush2.bf16.msra.mxu0 0
      %1018 = vmatprep.subr.bf16.mxu0 0
      %1019 = vmatpush2.bf16.msra.mxu0 0
      %1020 = vmatprep.subr.bf16.mxu0 0
      %1021 = vmatpush2.bf16.msra.mxu0 0
      %1022 = vmatprep.subr.bf16.mxu0 0
      %1023 = vmatpush2.bf16.msra.mxu0 0
      %1024 = vmatprep.subr.bf16.mxu0 0
      %1025 = vmatpush2.bf16.msra.mxu0 0
      %1026 = vmatprep.subr.bf16.mxu0 0
      %1027 = vmatpush2.bf16.msra.mxu0 0
      %1028 = vmatprep.subr.bf16.mxu0 0
      %1029 = vmatpush2.bf16.msra.mxu0 0
      %1030 = vmatprep.mubr.bf16.mxu0 0
      %1031 = vmatmul.mubr.bf16.gmra.mxu0 %v926
      %v1032 = vpop.f32.mrf.mxu0
      %v1033 = vadd.f32 %v977, %v1032
      %v1034 = vpop.f32.mrf.mxu0
      %v1035 = vpop.f32.mrf.mxu0
      %v1036 = vadd.f32 %v980, %v1035
      %v1037 = vpop.f32.mrf.mxu0
      %1038 = vmatprep.mubr.bf16.mxu0 0
      %1039 = vmatmul.mubr.bf16.gmra.mxu0 %v929
      %v1040 = vpop.f32.mrf.mxu0
      %v1041 = vadd.f32 %v985, %v1040
      %v1042 = vpop.f32.mrf.mxu0
      %v1043 = vpop.f32.mrf.mxu0
      %v1044 = vadd.f32 %v988, %v1043
      %v1045 = vpop.f32.mrf.mxu0
      %1046 = vmatprep.mubr.bf16.mxu0 0
      %1047 = vmatmul.mubr.bf16.gmra.mxu0 %v932
      %v1048 = vpop.f32.mrf.mxu0
      %v1049 = vadd.f32 %v993, %v1048
      %v1050 = vpop.f32.mrf.mxu0
      %v1051 = vpop.f32.mrf.mxu0
      %v1052 = vpop.f32.mrf.mxu0
      %1053 = vdwg.mxu0
      %v1054 = vmax.f32 %v1033, 0.0
      %v1055 = vmax.f32 %v1036, 0.0
      %v1056 = vmax.f32 %v1041, 0.0
      %v1057 = vmax.f32 %v1044, 0.0
      %v1058 = vmax.f32 %v1049, 0.0
      %v1059 = vmax.f32 %v883, %v1054
      %v1060 = vmax.f32 %v884, %v1055
      %v1061 = vmax.f32 %v885, %v1056
      %v1062 = vmax.f32 %v886, %v1057
      %v1063 = vmax.f32 %v887, %v1058
      %v1064 = vmax.f32 %v712, %v1059
      %v1065 = vmax.f32 %v713, %v1060
      %v1066 = vmax.f32 %v714, %v1061
      %v1067 = vmax.f32 %v715, %v1062
      %v1068 = vmax.f32 %v716, %v1063
      %v1069 = vpack.c.bf16 %v1065, %v1064
      %v1070 = vpack.c.bf16 %v1067, %v1066
      %v1071 = vpack.c.bf16 %v1068, %v1068
      %v1075 = vunpack.c.l.b16 %v1069
      %v1076 = vunpack.c.h.b16 %v1069
      %v1077 = vunpack.c.l.b16 %v1070
      %v1078 = vunpack.c.h.b16 %v1070
      %v1079 = vunpack.c.l.b16 %v1071
      %v1080 = vpack.c.b16 %v1075, %v1075
      %v1081 = vpack.c.b16 %v1076, %v1076
      %v1082 = vpack.c.b16 %v1077, %v1077
      %v1083 = vpack.c.b16 %v1078, %v1078
      %v1084 = vpack.c.b16 %v1079, %v1079
      %1090 = vst [vmem:[%s170] sm:$0xf] %v1080
      %1091 = vst [vmem:[%s170 + $0x4] sm:$0xf] %v1081
      %1092 = vst [vmem:[%s170 + $0x8] sm:$0xf] %v1082
      %1093 = vst [vmem:[%s170 + $0xc] sm:$0xf] %v1083
      %1094 = vst [vmem:[%s170 + $0x10] sm:$0x3] %v1084
      %p1095 = scmp.lt.s32.totalorder %s14, 1
      %s1096 = scalar_select %p1095, %s14, 1
      %s1097 = smul.addr %s1096, 5
      %s1098 = smul.addr %s1097, 4
      %s1099 = scalar_lea.vmem %s3, %s1098
      // Predicated region
      $region33: #{lenet_k6_forward.4} parent=31 // pred_check
        %p1100 = pneg %p100
      $region34: #{lenet_k6_forward.4} parent=31 // pred_check_branch
        %1102 = sbr.rel (%p1100) target = $region36
      $region35: #{lenet_k6_forward.4} parent=31 // pred_region
        _
      $region36: #{lenet_k6_forward.4} parent=31 // pred_fallthru
        _
    $region32: #{lenet_k6_forward.4} parent=5 // pred_fallthru
      _
    %p1103 = scmp.le.s32.totalorder 2, %s9
    // Predicated region
    $region37: #{lenet_k6_forward.4} parent=5 // pred_check
      %p1104 = pneg %p1103
    $region38: #{lenet_k6_forward.4} parent=5 // pred_check_branch
      %1106 = sbr.rel (%p1104) target = $region40
    $region39: #{lenet_k6_forward.4} parent=5 // pred_region
      %s1107 = ssub.s32 %s9, 2
      // Predicated region
      $region41: #{lenet_k6_forward.4} parent=39 // pred_check
        %p1108 = pneg %p106
      $region42: #{lenet_k6_forward.4} parent=39 // pred_check_branch
        %1110 = sbr.rel (%p1108) target = $region44
      $region43: #{lenet_k6_forward.4} parent=39 // pred_region
        %p1111 = scmp.lt.s32.totalorder %s15, 1
        %s1112 = scalar_select %p1111, %s15, 1
        %s1113 = smul.addr %s1112, 5
        %s1114 = smul.addr %s1113, 4
        %s1115 = scalar_lea.vmem %s3, %s1114
      $region44: #{lenet_k6_forward.4} parent=39 // pred_fallthru
        _
    $region40: #{lenet_k6_forward.4} parent=5 // pred_fallthru
      _
  $region6: #{lenet_k6_forward.4} parent=0 // loop_footer
    %s13 = sadd.s32 1, %s9
  $region7: #{lenet_k6_forward.4} parent=0 // loop_footer_branch
    %8 = sbr.rel target = $region3
  $region8: #{lenet_k6_forward.4} parent=0 // loop_exit
    _

// kernel: lenet_k6_forward.5
$region0: #{lenet_k6_forward.5}
  #allocation0 [shape = 'u32[]', space=smem, size = 0x4, offset = 0x4, fixed_abs, tag = 'smem constant byte address 0x4 - core index']
  #allocation1 [shape = 'u32[144,128]{1,0:T(1,128)}', space=vmem, size = 0x12000, scoped, tag = 'internal scratch']
  %s0 = inlined_call_operand.vmem [shape: bf16[2,640], index: 0, kind: input, shape index: {}]
  %s1 = inlined_call_operand.vmem [shape: bf16[640,128], index: 1, kind: input, shape index: {}]
  %s2 = inlined_call_operand.vmem [shape: f32[1,128], index: 2, kind: input, shape index: {}]
  %s3 = inlined_call_operand.vmem [shape: bf16[128,128], index: 3, kind: input, shape index: {}]
  %s4 = inlined_call_operand.vmem [shape: f32[1,128], index: 4, kind: input, shape index: {}]
  %s5 = inlined_call_operand.vmem [shape: bf16[128,128], index: 5, kind: input, shape index: {}]
  %s6 = inlined_call_operand.vmem [shape: f32[1,128], index: 6, kind: input, shape index: {}]
  %s7 = inlined_call_operand.hbm [shape: f32[2,128], index: 7, kind: output, shape index: {}]
  %s8 = sld [smem:[#allocation0]]
  $region38: #{lenet_k6_forward.5} parent=0
    _
  %s10 = ssub.s32 1, %s8
  %s11 = scalar_select 0, %s10, %s8
  $region1: #{lenet_k6_forward.5} parent=0
    #allocation2 [shape = 'u8[1024]{0}', space=vmem, size = 0x400, scoped, tag = 'output window, operand 0, single buffered']
    #allocation3 [shape = 's32[1]{0}', space=sflag, size = 0x4, scoped, tag = 'scoped memory for lenet_k6_forward.5']
    %12 = vsyncpa [#allocation3], 0
    // Predicated region
    $region2: #{lenet_k6_forward.5} parent=1 // pred_check
      _
    $region3: #{lenet_k6_forward.5} parent=1 // pred_check_branch
      %14 = sbr.rel (0) target = $region5
    $region4: #{lenet_k6_forward.5} parent=1 // pred_region
      _
    $region5: #{lenet_k6_forward.5} parent=1 // pred_fallthru
      _
    // Predicated region
    $region6: #{lenet_k6_forward.5} parent=1 // pred_check
      _
    $region7: #{lenet_k6_forward.5} parent=1 // pred_check_branch
      %16 = sbr.rel (0) target = $region9
    $region8: #{lenet_k6_forward.5} parent=1 // pred_region
      _
    $region9: #{lenet_k6_forward.5} parent=1 // pred_fallthru
      _
    // Predicated region
    $region10: #{lenet_k6_forward.5} parent=1 // pred_check
      _
    $region11: #{lenet_k6_forward.5} parent=1 // pred_check_branch
      %18 = sbr.rel (0) target = $region13
    $region12: #{lenet_k6_forward.5} parent=1 // pred_region
      _
    $region13: #{lenet_k6_forward.5} parent=1 // pred_fallthru
      _
    // Predicated region
    $region14: #{lenet_k6_forward.5} parent=1 // pred_check
      _
    $region15: #{lenet_k6_forward.5} parent=1 // pred_check_branch
      %20 = sbr.rel (0) target = $region17
    $region16: #{lenet_k6_forward.5} parent=1 // pred_region
      _
    $region17: #{lenet_k6_forward.5} parent=1 // pred_fallthru
      _
    // Predicated region
    $region18: #{lenet_k6_forward.5} parent=1 // pred_check
      _
    $region19: #{lenet_k6_forward.5} parent=1 // pred_check_branch
      %22 = sbr.rel (0) target = $region21
    $region20: #{lenet_k6_forward.5} parent=1 // pred_region
      _
    $region21: #{lenet_k6_forward.5} parent=1 // pred_fallthru
      _
    // Predicated region
    $region22: #{lenet_k6_forward.5} parent=1 // pred_check
      _
    $region23: #{lenet_k6_forward.5} parent=1 // pred_check_branch
      %24 = sbr.rel (0) target = $region25
    $region24: #{lenet_k6_forward.5} parent=1 // pred_region
      _
    $region25: #{lenet_k6_forward.5} parent=1 // pred_fallthru
      _
    // Predicated region
    $region26: #{lenet_k6_forward.5} parent=1 // pred_check
      _
    $region27: #{lenet_k6_forward.5} parent=1 // pred_check_branch
      %26 = sbr.rel (0) target = $region29
    $region28: #{lenet_k6_forward.5} parent=1 // pred_region
      _
    $region29: #{lenet_k6_forward.5} parent=1 // pred_fallthru
      _
    %v28 = vld [vmem:[%s0] sm:$0x1f]
    %v29 = vld [vmem:[%s1] sm:$0xf]
    %v30 = vld [vmem:[%s1 + $0x4] sm:$0xf]
    %v31 = vld [vmem:[%s1 + $0x8] sm:$0xf]
    %v32 = vld [vmem:[%s1 + $0xc] sm:$0xf]
    %v33 = vld [vmem:[%s1 + $0x10] sm:$0xf]
    %v34 = vld [vmem:[%s1 + $0x14] sm:$0xf]
    %v35 = vld [vmem:[%s1 + $0x18] sm:$0xf]
    %v36 = vld [vmem:[%s1 + $0x1c] sm:$0xf]
    %v37 = vld [vmem:[%s1 + $0x20] sm:$0xf]
    %v38 = vld [vmem:[%s1 + $0x24] sm:$0xf]
    %v39 = vld [vmem:[%s1 + $0x28] sm:$0xf]
    %v40 = vld [vmem:[%s1 + $0x2c] sm:$0xf]
    %v41 = vld [vmem:[%s1 + $0x30] sm:$0xf]
    %v42 = vld [vmem:[%s1 + $0x34] sm:$0xf]
    %v43 = vld [vmem:[%s1 + $0x38] sm:$0xf]
    %v44 = vld [vmem:[%s1 + $0x3c] sm:$0xf]
    %v45 = vld [vmem:[%s1 + $0x40] sm:$0xf]
    %v46 = vld [vmem:[%s1 + $0x44] sm:$0xf]
    %v47 = vld [vmem:[%s1 + $0x48] sm:$0xf]
    %v48 = vld [vmem:[%s1 + $0x4c] sm:$0xf]
    %v49 = vld [vmem:[%s1 + $0x50] sm:$0xf]
    %v50 = vld [vmem:[%s1 + $0x54] sm:$0xf]
    %v51 = vld [vmem:[%s1 + $0x58] sm:$0xf]
    %v52 = vld [vmem:[%s1 + $0x5c] sm:$0xf]
    %v53 = vld [vmem:[%s1 + $0x60] sm:$0xf]
    %v54 = vld [vmem:[%s1 + $0x64] sm:$0xf]
    %v55 = vld [vmem:[%s1 + $0x68] sm:$0xf]
    %v56 = vld [vmem:[%s1 + $0x6c] sm:$0xf]
    %v57 = vld [vmem:[%s1 + $0x70] sm:$0xf]
    %v58 = vld [vmem:[%s1 + $0x74] sm:$0xf]
    %v59 = vld [vmem:[%s1 + $0x78] sm:$0xf]
    %v60 = vld [vmem:[%s1 + $0x7c] sm:$0xf]
    %v61 = vld [vmem:[%s1 + $0x80] sm:$0xf]
    %v62 = vld [vmem:[%s1 + $0x84] sm:$0xf]
    %v63 = vld [vmem:[%s1 + $0x88] sm:$0xf]
    %v64 = vld [vmem:[%s1 + $0x8c] sm:$0xf]
    %v65 = vld [vmem:[%s1 + $0x90] sm:$0xf]
    %v66 = vld [vmem:[%s1 + $0x94] sm:$0xf]
    %v67 = vld [vmem:[%s1 + $0x98] sm:$0xf]
    %v68 = vld [vmem:[%s1 + $0x9c] sm:$0xf]
    %v69 = vld [vmem:[%s1 + $0xa0] sm:$0xf]
    %v70 = vld [vmem:[%s1 + $0xa4] sm:$0xf]
    %v71 = vld [vmem:[%s1 + $0xa8] sm:$0xf]
    %v72 = vld [vmem:[%s1 + $0xac] sm:$0xf]
    %v73 = vld [vmem:[%s1 + $0xb0] sm:$0xf]
    %v74 = vld [vmem:[%s1 + $0xb4] sm:$0xf]
    %v75 = vld [vmem:[%s1 + $0xb8] sm:$0xf]
    %v76 = vld [vmem:[%s1 + $0xbc] sm:$0xf]
    %v77 = vld [vmem:[%s1 + $0xc0] sm:$0xf]
    %v78 = vld [vmem:[%s1 + $0xc4] sm:$0xf]
    %v79 = vld [vmem:[%s1 + $0xc8] sm:$0xf]
    %v80 = vld [vmem:[%s1 + $0xcc] sm:$0xf]
    %v81 = vld [vmem:[%s1 + $0xd0] sm:$0xf]
    %v82 = vld [vmem:[%s1 + $0xd4] sm:$0xf]
    %v83 = vld [vmem:[%s1 + $0xd8] sm:$0xf]
    %v84 = vld [vmem:[%s1 + $0xdc] sm:$0xf]
    %v85 = vld [vmem:[%s1 + $0xe0] sm:$0xf]
    %v86 = vld [vmem:[%s1 + $0xe4] sm:$0xf]
    %v87 = vld [vmem:[%s1 + $0xe8] sm:$0xf]
    %v88 = vld [vmem:[%s1 + $0xec] sm:$0xf]
    %v89 = vld [vmem:[%s1 + $0xf0] sm:$0xf]
    %v90 = vld [vmem:[%s1 + $0xf4] sm:$0xf]
    %v91 = vld [vmem:[%s1 + $0xf8] sm:$0xf]
    %v92 = vld [vmem:[%s1 + $0xfc] sm:$0xf]
    %v93 = vld [vmem:[%s1 + $0x100] sm:$0xf]
    %v94 = vld [vmem:[%s1 + $0x104] sm:$0xf]
    %v95 = vld [vmem:[%s1 + $0x108] sm:$0xf]
    %v96 = vld [vmem:[%s1 + $0x10c] sm:$0xf]
    %v97 = vld [vmem:[%s1 + $0x110] sm:$0xf]
    %v98 = vld [vmem:[%s1 + $0x114] sm:$0xf]
    %v99 = vld [vmem:[%s1 + $0x118] sm:$0xf]
    %v100 = vld [vmem:[%s1 + $0x11c] sm:$0xf]
    %v101 = vld [vmem:[%s1 + $0x120] sm:$0xf]
    %v102 = vld [vmem:[%s1 + $0x124] sm:$0xf]
    %v103 = vld [vmem:[%s1 + $0x128] sm:$0xf]
    %v104 = vld [vmem:[%s1 + $0x12c] sm:$0xf]
    %v105 = vld [vmem:[%s1 + $0x130] sm:$0xf]
    %v106 = vld [vmem:[%s1 + $0x134] sm:$0xf]
    %v107 = vld [vmem:[%s1 + $0x138] sm:$0xf]
    %v108 = vld [vmem:[%s1 + $0x13c] sm:$0xf]
    %v109 = vld [vmem:[%s2] sm:$0x1]
    %v111 = vlaneseq
    %v112 = vshrl.u32 %v111, 7
    %v113 = vsub.s32 0, %v112
    %v114 = vrot.slane %v109, %v113
    %v117 = vcombine.high %v28, %v28
    %v119 = vunpack.c.l.s4 1966171168
    %v120 = vunpack.c.0.s8 %v119
    %v121 = vlaneseq
    %v122 = vshrl.u32 %v121, 7
    %v123 = vsub.s32 %v120, %v122
    %v124 = vrot.slane %v28, %v123
    %v126 = vunpack.c.l.s4 1966171168
    %v127 = vunpack.c.0.s8 %v126
    %v128 = vlaneseq
    %v129 = vshrl.u32 %v128, 7
    %v130 = vsub.s32 %v127, %v129
    %v131 = vrot.slane %v117, %v130
    %v132 = vcombine.high %v124, %v124
    %v134 = vunpack.c.l.s4 1966171168
    %v135 = vunpack.c.0.s8 %v134
    %v136 = vlaneseq
    %v137 = vshrl.u32 %v136, 7
    %v138 = vsub.s32 %v135, %v137
    %v139 = vrot.slane %v124, %v138
    %v141 = vunpack.c.l.s4 1966171168
    %v142 = vunpack.c.0.s8 %v141
    %v143 = vlaneseq
    %v144 = vshrl.u32 %v143, 7
    %v145 = vsub.s32 %v142, %v144
    %v146 = vrot.slane %v131, %v145
    %v148 = vunpack.c.l.s4 1966171168
    %v149 = vunpack.c.0.s8 %v148
    %v150 = vlaneseq
    %v151 = vshrl.u32 %v150, 7
    %v152 = vsub.s32 %v149, %v151
    %v153 = vrot.slane %v132, %v152
    %v154 = vcombine.high %v139, %v139
    %v155 = vcombine.high %v153, %v153
    %v241 = vunpack.c.l.b16 %v29
    %v242 = vunpack.c.l.b16 %v30
    %v243 = vunpack.c.l.b16 %v31
    %v244 = vunpack.c.l.b16 %v32
    %v245 = vunpack.c.l.b16 %v33
    %v246 = vunpack.c.l.b16 %v34
    %v247 = vunpack.c.l.b16 %v35
    %v248 = vunpack.c.l.b16 %v36
    %v249 = vunpack.c.l.b16 %v37
    %v250 = vunpack.c.l.b16 %v38
    %v251 = vunpack.c.l.b16 %v39
    %v252 = vunpack.c.l.b16 %v40
    %v253 = vunpack.c.l.b16 %v41
    %v254 = vunpack.c.l.b16 %v42
    %v255 = vunpack.c.l.b16 %v43
    %v256 = vunpack.c.l.b16 %v44
    %v257 = vunpack.c.l.b16 %v45
    %v258 = vunpack.c.l.b16 %v46
    %v259 = vunpack.c.l.b16 %v47
    %v260 = vunpack.c.l.b16 %v48
    %v261 = vunpack.c.l.b16 %v49
    %v262 = vunpack.c.l.b16 %v50
    %v263 = vunpack.c.l.b16 %v51
    %v264 = vunpack.c.l.b16 %v52
    %v265 = vunpack.c.l.b16 %v53
    %v266 = vunpack.c.l.b16 %v54
    %v267 = vunpack.c.l.b16 %v55
    %v268 = vunpack.c.l.b16 %v56
    %v269 = vunpack.c.l.b16 %v57
    %v270 = vunpack.c.l.b16 %v58
    %v271 = vunpack.c.l.b16 %v59
    %v272 = vunpack.c.l.b16 %v60
    %v273 = vunpack.c.l.b16 %v61
    %v274 = vunpack.c.l.b16 %v62
    %v275 = vunpack.c.l.b16 %v63
    %v276 = vunpack.c.l.b16 %v64
    %v277 = vunpack.c.l.b16 %v65
    %v278 = vunpack.c.l.b16 %v66
    %v279 = vunpack.c.l.b16 %v67
    %v280 = vunpack.c.l.b16 %v68
    %v281 = vunpack.c.l.b16 %v69
    %v282 = vunpack.c.l.b16 %v70
    %v283 = vunpack.c.l.b16 %v71
    %v284 = vunpack.c.l.b16 %v72
    %v285 = vunpack.c.l.b16 %v73
    %v286 = vunpack.c.l.b16 %v74
    %v287 = vunpack.c.l.b16 %v75
    %v288 = vunpack.c.l.b16 %v76
    %v289 = vunpack.c.l.b16 %v77
    %v290 = vunpack.c.l.b16 %v78
    %v291 = vunpack.c.l.b16 %v79
    %v292 = vunpack.c.l.b16 %v80
    %v293 = vunpack.c.l.b16 %v81
    %v294 = vunpack.c.l.b16 %v82
    %v295 = vunpack.c.l.b16 %v83
    %v296 = vunpack.c.l.b16 %v84
    %v297 = vunpack.c.l.b16 %v85
    %v298 = vunpack.c.l.b16 %v86
    %v299 = vunpack.c.l.b16 %v87
    %v300 = vunpack.c.l.b16 %v88
    %v301 = vunpack.c.l.b16 %v89
    %v302 = vunpack.c.l.b16 %v90
    %v303 = vunpack.c.l.b16 %v91
    %v304 = vunpack.c.l.b16 %v92
    %v305 = vunpack.c.l.b16 %v93
    %v306 = vunpack.c.l.b16 %v94
    %v307 = vunpack.c.l.b16 %v95
    %v308 = vunpack.c.l.b16 %v96
    %v309 = vunpack.c.l.b16 %v97
    %v310 = vunpack.c.l.b16 %v98
    %v311 = vunpack.c.l.b16 %v99
    %v312 = vunpack.c.l.b16 %v100
    %v313 = vunpack.c.l.b16 %v101
    %v314 = vunpack.c.l.b16 %v102
    %v315 = vunpack.c.l.b16 %v103
    %v316 = vunpack.c.l.b16 %v104
    %v317 = vunpack.c.l.b16 %v105
    %v318 = vunpack.c.l.b16 %v106
    %v319 = vunpack.c.l.b16 %v107
    %v320 = vunpack.c.l.b16 %v108
    %v321 = vpack.c.b16 %v242, %v241
    %v322 = vpack.c.b16 %v244, %v243
    %v323 = vpack.c.b16 %v246, %v245
    %v324 = vpack.c.b16 %v248, %v247
    %v325 = vpack.c.b16 %v250, %v249
    %v326 = vpack.c.b16 %v252, %v251
    %v327 = vpack.c.b16 %v254, %v253
    %v328 = vpack.c.b16 %v256, %v255
    %v329 = vpack.c.b16 %v258, %v257
    %v330 = vpack.c.b16 %v260, %v259
    %v331 = vpack.c.b16 %v262, %v261
    %v332 = vpack.c.b16 %v264, %v263
    %v333 = vpack.c.b16 %v266, %v265
    %v334 = vpack.c.b16 %v268, %v267
    %v335 = vpack.c.b16 %v270, %v269
    %v336 = vpack.c.b16 %v272, %v271
    %v337 = vpack.c.b16 %v274, %v273
    %v338 = vpack.c.b16 %v276, %v275
    %v339 = vpack.c.b16 %v278, %v277
    %v340 = vpack.c.b16 %v280, %v279
    %v341 = vpack.c.b16 %v282, %v281
    %v342 = vpack.c.b16 %v284, %v283
    %v343 = vpack.c.b16 %v286, %v285
    %v344 = vpack.c.b16 %v288, %v287
    %v345 = vpack.c.b16 %v290, %v289
    %v346 = vpack.c.b16 %v292, %v291
    %v347 = vpack.c.b16 %v294, %v293
    %v348 = vpack.c.b16 %v296, %v295
    %v349 = vpack.c.b16 %v298, %v297
    %v350 = vpack.c.b16 %v300, %v299
    %v351 = vpack.c.b16 %v302, %v301
    %v352 = vpack.c.b16 %v304, %v303
    %v353 = vpack.c.b16 %v306, %v305
    %v354 = vpack.c.b16 %v308, %v307
    %v355 = vpack.c.b16 %v310, %v309
    %v356 = vpack.c.b16 %v312, %v311
    %v357 = vpack.c.b16 %v314, %v313
    %v358 = vpack.c.b16 %v316, %v315
    %v359 = vpack.c.b16 %v318, %v317
    %v360 = vpack.c.b16 %v320, %v319
    %401 = vmatprep.subr.bf16.mxu0 0
    %402 = vmatpush1.bf16.msra.mxu0 %v328
    %403 = vmatprep.subr.bf16.mxu0 0
    %404 = vmatpush1.bf16.msra.mxu0 %v327
    %405 = vmatprep.subr.bf16.mxu0 0
    %406 = vmatpush1.bf16.msra.mxu0 %v326
    %407 = vmatprep.subr.bf16.mxu0 0
    %408 = vmatpush1.bf16.msra.mxu0 %v325
    %409 = vmatprep.subr.bf16.mxu0 0
    %410 = vmatpush1.bf16.msra.mxu0 %v324
    %411 = vmatprep.subr.bf16.mxu0 0
    %412 = vmatpush1.bf16.msra.mxu0 %v323
    %413 = vmatprep.subr.bf16.mxu0 0
    %414 = vmatpush1.bf16.msra.mxu0 %v322
    %415 = vmatprep.subr.bf16.mxu0 0
    %416 = vmatpush1.bf16.msra.mxu0 %v321
    %417 = vmatprep.subr.bf16.mxu0 0
    %418 = vmatpush2.bf16.msra.mxu0 %v336
    %419 = vmatprep.subr.bf16.mxu0 0
    %420 = vmatpush2.bf16.msra.mxu0 %v335
    %421 = vmatprep.subr.bf16.mxu0 0
    %422 = vmatpush2.bf16.msra.mxu0 %v334
    %423 = vmatprep.subr.bf16.mxu0 0
    %424 = vmatpush2.bf16.msra.mxu0 %v333
    %425 = vmatprep.subr.bf16.mxu0 0
    %426 = vmatpush2.bf16.msra.mxu0 %v332
    %427 = vmatprep.subr.bf16.mxu0 0
    %428 = vmatpush2.bf16.msra.mxu0 %v331
    %429 = vmatprep.subr.bf16.mxu0 0
    %430 = vmatpush2.bf16.msra.mxu0 %v330
    %431 = vmatprep.subr.bf16.mxu0 0
    %432 = vmatpush2.bf16.msra.mxu0 %v329
    %433 = vmatprep.mubr.bf16.mxu0 %v153
    %434 = vmatmul.mubr.bf16.gmra.mxu0 %v139
    %v435 = vpop.f32.mrf.mxu0
    %v436 = vadd.f32 %v114, %v435
    %v437 = vpop.f32.mrf.mxu0
    %v438 = vpop.f32.mrf.mxu0
    %v439 = vpop.f32.mrf.mxu0
    %440 = vdwg.mxu0
    %441 = vmatprep.subr.bf16.mxu0 0
    %442 = vmatpush1.bf16.msra.mxu0 %v344
    %443 = vmatprep.subr.bf16.mxu0 0
    %444 = vmatpush1.bf16.msra.mxu0 %v343
    %445 = vmatprep.subr.bf16.mxu0 0
    %446 = vmatpush1.bf16.msra.mxu0 %v342
    %447 = vmatprep.subr.bf16.mxu0 0
    %448 = vmatpush1.bf16.msra.mxu0 %v341
    %449 = vmatprep.subr.bf16.mxu0 0
    %450 = vmatpush1.bf16.msra.mxu0 %v340
    %451 = vmatprep.subr.bf16.mxu0 0
    %452 = vmatpush1.bf16.msra.mxu0 %v339
    %453 = vmatprep.subr.bf16.mxu0 0
    %454 = vmatpush1.bf16.msra.mxu0 %v338
    %455 = vmatprep.subr.bf16.mxu0 0
    %456 = vmatpush1.bf16.msra.mxu0 %v337
    %457 = vmatprep.subr.bf16.mxu0 0
    %458 = vmatpush2.bf16.msra.mxu0 %v352
    %459 = vmatprep.subr.bf16.mxu0 0
    %460 = vmatpush2.bf16.msra.mxu0 %v351
    %461 = vmatprep.subr.bf16.mxu0 0
    %462 = vmatpush2.bf16.msra.mxu0 %v350
    %463 = vmatprep.subr.bf16.mxu0 0
    %464 = vmatpush2.bf16.msra.mxu0 %v349
    %465 = vmatprep.subr.bf16.mxu0 0
    %466 = vmatpush2.bf16.msra.mxu0 %v348
    %467 = vmatprep.subr.bf16.mxu0 0
    %468 = vmatpush2.bf16.msra.mxu0 %v347
    %469 = vmatprep.subr.bf16.mxu0 0
    %470 = vmatpush2.bf16.msra.mxu0 %v346
    %471 = vmatprep.subr.bf16.mxu0 0
    %472 = vmatpush2.bf16.msra.mxu0 %v345
    %473 = vmatprep.mubr.bf16.mxu0 %v155
    %474 = vmatmul.mubr.bf16.gmra.mxu0 %v154
    %v475 = vpop.f32.mrf.mxu0
    %v476 = vadd.f32 %v436, %v475
    %v477 = vpop.f32.mrf.mxu0
    %v478 = vpop.f32.mrf.mxu0
    %v479 = vpop.f32.mrf.mxu0
    %480 = vdwg.mxu0
    %481 = vmatprep.subr.bf16.mxu0 0
    %482 = vmatpush1.bf16.msra.mxu0 %v360
    %483 = vmatprep.subr.bf16.mxu0 0
    %484 = vmatpush1.bf16.msra.mxu0 %v359
    %485 = vmatprep.subr.bf16.mxu0 0
    %486 = vmatpush1.bf16.msra.mxu0 %v358
    %487 = vmatprep.subr.bf16.mxu0 0
    %488 = vmatpush1.bf16.msra.mxu0 %v357
    %489 = vmatprep.subr.bf16.mxu0 0
    %490 = vmatpush1.bf16.msra.mxu0 %v356
    %491 = vmatprep.subr.bf16.mxu0 0
    %492 = vmatpush1.bf16.msra.mxu0 %v355
    %493 = vmatprep.subr.bf16.mxu0 0
    %494 = vmatpush1.bf16.msra.mxu0 %v354
    %495 = vmatprep.subr.bf16.mxu0 0
    %496 = vmatpush1.bf16.msra.mxu0 %v353
    %497 = vmatprep.subr.bf16.mxu0 0
    %498 = vmatpush2.bf16.msra.mxu0 0
    %499 = vmatprep.subr.bf16.mxu0 0
    %500 = vmatpush2.bf16.msra.mxu0 0
    %501 = vmatprep.subr.bf16.mxu0 0
    %502 = vmatpush2.bf16.msra.mxu0 0
    %503 = vmatprep.subr.bf16.mxu0 0
    %504 = vmatpush2.bf16.msra.mxu0 0
    %505 = vmatprep.subr.bf16.mxu0 0
    %506 = vmatpush2.bf16.msra.mxu0 0
    %507 = vmatprep.subr.bf16.mxu0 0
    %508 = vmatpush2.bf16.msra.mxu0 0
    %509 = vmatprep.subr.bf16.mxu0 0
    %510 = vmatpush2.bf16.msra.mxu0 0
    %511 = vmatprep.subr.bf16.mxu0 0
    %512 = vmatpush2.bf16.msra.mxu0 0
    %513 = vmatprep.mubr.bf16.mxu0 0
    %514 = vmatmul.mubr.bf16.gmra.mxu0 %v146
    %v515 = vpop.f32.mrf.mxu0
    %v516 = vadd.f32 %v476, %v515
    %v517 = vpop.f32.mrf.mxu0
    %v518 = vpop.f32.mrf.mxu0
    %v519 = vpop.f32.mrf.mxu0
    %520 = vdwg.mxu0
    %v521 = vpack.c.bf16 %v516, %v516
    %v522 = vld [vmem:[%s3] sm:$0xf]
    %v523 = vld [vmem:[%s3 + $0x4] sm:$0xf]
    %v524 = vld [vmem:[%s3 + $0x8] sm:$0xf]
    %v525 = vld [vmem:[%s3 + $0xc] sm:$0xf]
    %v526 = vld [vmem:[%s3 + $0x10] sm:$0xf]
    %v527 = vld [vmem:[%s3 + $0x14] sm:$0xf]
    %v528 = vld [vmem:[%s3 + $0x18] sm:$0xf]
    %v529 = vld [vmem:[%s3 + $0x1c] sm:$0xf]
    %v530 = vld [vmem:[%s3 + $0x20] sm:$0xf]
    %v531 = vld [vmem:[%s3 + $0x24] sm:$0xf]
    %v532 = vld [vmem:[%s3 + $0x28] sm:$0xf]
    %v533 = vld [vmem:[%s3 + $0x2c] sm:$0xf]
    %v534 = vld [vmem:[%s3 + $0x30] sm:$0xf]
    %v535 = vld [vmem:[%s3 + $0x34] sm:$0xf]
    %v536 = vld [vmem:[%s3 + $0x38] sm:$0xf]
    %v537 = vld [vmem:[%s3 + $0x3c] sm:$0xf]
    %v538 = vld [vmem:[%s4] sm:$0x1]
    %v540 = vlaneseq
    %v541 = vshrl.u32 %v540, 7
    %v542 = vsub.s32 0, %v541
    %v543 = vrot.slane %v538, %v542
    %v561 = vunpack.c.l.b16 %v522
    %v562 = vunpack.c.l.b16 %v523
    %v563 = vunpack.c.l.b16 %v524
    %v564 = vunpack.c.l.b16 %v525
    %v565 = vunpack.c.l.b16 %v526
    %v566 = vunpack.c.l.b16 %v527
    %v567 = vunpack.c.l.b16 %v528
    %v568 = vunpack.c.l.b16 %v529
    %v569 = vunpack.c.l.b16 %v530
    %v570 = vunpack.c.l.b16 %v531
    %v571 = vunpack.c.l.b16 %v532
    %v572 = vunpack.c.l.b16 %v533
    %v573 = vunpack.c.l.b16 %v534
    %v574 = vunpack.c.l.b16 %v535
    %v575 = vunpack.c.l.b16 %v536
    %v576 = vunpack.c.l.b16 %v537
    %v577 = vpack.c.b16 %v562, %v561
    %v578 = vpack.c.b16 %v564, %v563
    %v579 = vpack.c.b16 %v566, %v565
    %v580 = vpack.c.b16 %v568, %v567
    %v581 = vpack.c.b16 %v570, %v569
    %v582 = vpack.c.b16 %v572, %v571
    %v583 = vpack.c.b16 %v574, %v573
    %v584 = vpack.c.b16 %v576, %v575
    %593 = vmatprep.subr.bf16.mxu0 0
    %594 = vmatpush1.bf16.msra.mxu0 %v584
    %595 = vmatprep.subr.bf16.mxu0 0
    %596 = vmatpush1.bf16.msra.mxu0 %v583
    %597 = vmatprep.subr.bf16.mxu0 0
    %598 = vmatpush1.bf16.msra.mxu0 %v582
    %599 = vmatprep.subr.bf16.mxu0 0
    %600 = vmatpush1.bf16.msra.mxu0 %v581
    %601 = vmatprep.subr.bf16.mxu0 0
    %602 = vmatpush1.bf16.msra.mxu0 %v580
    %603 = vmatprep.subr.bf16.mxu0 0
    %604 = vmatpush1.bf16.msra.mxu0 %v579
    %605 = vmatprep.subr.bf16.mxu0 0
    %606 = vmatpush1.bf16.msra.mxu0 %v578
    %607 = vmatprep.subr.bf16.mxu0 0
    %608 = vmatpush1.bf16.msra.mxu0 %v577
    %609 = vmatprep.subr.bf16.mxu0 0
    %610 = vmatpush2.bf16.msra.mxu0 0
    %611 = vmatprep.subr.bf16.mxu0 0
    %612 = vmatpush2.bf16.msra.mxu0 0
    %613 = vmatprep.subr.bf16.mxu0 0
    %614 = vmatpush2.bf16.msra.mxu0 0
    %615 = vmatprep.subr.bf16.mxu0 0
    %616 = vmatpush2.bf16.msra.mxu0 0
    %617 = vmatprep.subr.bf16.mxu0 0
    %618 = vmatpush2.bf16.msra.mxu0 0
    %619 = vmatprep.subr.bf16.mxu0 0
    %620 = vmatpush2.bf16.msra.mxu0 0
    %621 = vmatprep.subr.bf16.mxu0 0
    %622 = vmatpush2.bf16.msra.mxu0 0
    %623 = vmatprep.subr.bf16.mxu0 0
    %624 = vmatpush2.bf16.msra.mxu0 0
    %625 = vmatprep.mubr.bf16.mxu0 0
    %626 = vmatmul.mubr.bf16.gmra.mxu0 %v521
    %v627 = vpop.f32.mrf.mxu0
    %v628 = vadd.f32 %v543, %v627
    %v629 = vpop.f32.mrf.mxu0
    %v630 = vpop.f32.mrf.mxu0
    %v631 = vpop.f32.mrf.mxu0
    %632 = vdwg.mxu0
    %v633 = vmax.f32 %v628, 0.0
    %v634 = vpack.c.bf16 %v633, %v633
    %v635 = vld [vmem:[%s5] sm:$0xf]
    %v636 = vld [vmem:[%s5 + $0x4] sm:$0xf]
    %v637 = vld [vmem:[%s5 + $0x8] sm:$0xf]
    %v638 = vld [vmem:[%s5 + $0xc] sm:$0xf]
    %v639 = vld [vmem:[%s5 + $0x10] sm:$0xf]
    %v640 = vld [vmem:[%s5 + $0x14] sm:$0xf]
    %v641 = vld [vmem:[%s5 + $0x18] sm:$0xf]
    %v642 = vld [vmem:[%s5 + $0x1c] sm:$0xf]
    %v643 = vld [vmem:[%s5 + $0x20] sm:$0xf]
    %v644 = vld [vmem:[%s5 + $0x24] sm:$0xf]
    %v645 = vld [vmem:[%s5 + $0x28] sm:$0xf]
    %v646 = vld [vmem:[%s5 + $0x2c] sm:$0xf]
    %v647 = vld [vmem:[%s5 + $0x30] sm:$0xf]
    %v648 = vld [vmem:[%s5 + $0x34] sm:$0xf]
    %v649 = vld [vmem:[%s5 + $0x38] sm:$0xf]
    %v650 = vld [vmem:[%s5 + $0x3c] sm:$0xf]
    %v651 = vld [vmem:[%s6] sm:$0x1]
    %v653 = vlaneseq
    %v654 = vshrl.u32 %v653, 7
    %v655 = vsub.s32 0, %v654
    %v656 = vrot.slane %v651, %v655
    %v674 = vunpack.c.l.b16 %v635
    %v675 = vunpack.c.l.b16 %v636
    %v676 = vunpack.c.l.b16 %v637
    %v677 = vunpack.c.l.b16 %v638
    %v678 = vunpack.c.l.b16 %v639
    %v679 = vunpack.c.l.b16 %v640
    %v680 = vunpack.c.l.b16 %v641
    %v681 = vunpack.c.l.b16 %v642
    %v682 = vunpack.c.l.b16 %v643
    %v683 = vunpack.c.l.b16 %v644
    %v684 = vunpack.c.l.b16 %v645
    %v685 = vunpack.c.l.b16 %v646
    %v686 = vunpack.c.l.b16 %v647
    %v687 = vunpack.c.l.b16 %v648
    %v688 = vunpack.c.l.b16 %v649
    %v689 = vunpack.c.l.b16 %v650
    %v690 = vpack.c.b16 %v675, %v674
    %v691 = vpack.c.b16 %v677, %v676
    %v692 = vpack.c.b16 %v679, %v678
    %v693 = vpack.c.b16 %v681, %v680
    %v694 = vpack.c.b16 %v683, %v682
    %v695 = vpack.c.b16 %v685, %v684
    %v696 = vpack.c.b16 %v687, %v686
    %v697 = vpack.c.b16 %v689, %v688
    %706 = vmatprep.subr.bf16.mxu0 0
    %707 = vmatpush1.bf16.msra.mxu0 %v697
    %708 = vmatprep.subr.bf16.mxu0 0
    %709 = vmatpush1.bf16.msra.mxu0 %v696
    %710 = vmatprep.subr.bf16.mxu0 0
    %711 = vmatpush1.bf16.msra.mxu0 %v695
    %712 = vmatprep.subr.bf16.mxu0 0
    %713 = vmatpush1.bf16.msra.mxu0 %v694
    %714 = vmatprep.subr.bf16.mxu0 0
    %715 = vmatpush1.bf16.msra.mxu0 %v693
    %716 = vmatprep.subr.bf16.mxu0 0
    %717 = vmatpush1.bf16.msra.mxu0 %v692
    %718 = vmatprep.subr.bf16.mxu0 0
    %719 = vmatpush1.bf16.msra.mxu0 %v691
    %720 = vmatprep.subr.bf16.mxu0 0
    %721 = vmatpush1.bf16.msra.mxu0 %v690
    %722 = vmatprep.subr.bf16.mxu0 0
    %723 = vmatpush2.bf16.msra.mxu0 0
    %724 = vmatprep.subr.bf16.mxu0 0
    %725 = vmatpush2.bf16.msra.mxu0 0
    %726 = vmatprep.subr.bf16.mxu0 0
    %727 = vmatpush2.bf16.msra.mxu0 0
    %728 = vmatprep.subr.bf16.mxu0 0
    %729 = vmatpush2.bf16.msra.mxu0 0
    %730 = vmatprep.subr.bf16.mxu0 0
    %731 = vmatpush2.bf16.msra.mxu0 0
    %732 = vmatprep.subr.bf16.mxu0 0
    %733 = vmatpush2.bf16.msra.mxu0 0
    %734 = vmatprep.subr.bf16.mxu0 0
    %735 = vmatpush2.bf16.msra.mxu0 0
    %736 = vmatprep.subr.bf16.mxu0 0
    %737 = vmatpush2.bf16.msra.mxu0 0
    %738 = vmatprep.mubr.bf16.mxu0 0
    %739 = vmatmul.mubr.bf16.gmra.mxu0 %v634
    %v740 = vpop.f32.mrf.mxu0
    %v741 = vadd.f32 %v656, %v740
    %v742 = vpop.f32.mrf.mxu0
    %v743 = vpop.f32.mrf.mxu0
    %v744 = vpop.f32.mrf.mxu0
    %745 = vdwg.mxu0
    %v746 = vmax.f32 %v741, 0.0
    %v747 = vlaneseq
    %v748 = vand.u32 %v747, 127
    %vm749 = vcmp.lt.s32.totalorder %v748, 10
    %v750 = vsel %vm749, %v746, -1e+30
    %vm751 = vcmask 1041408
    %v752 = vsel %vm751, %v750, -inf
    %753 = vmax.xlane.f32.xlu0 %v752
    %v754 = vpop.xlane.xlu0 %753
    %v755 = vsub.f32 %v750, %v754
    %v756 = vmul.f32 %v755, 1.442695
    %v757 = vpow.pop %v756
    %v758 = vsel %vm751, %v757, 0.0
    %759 = vadd.xlane.f32.xlu0 %v758
    %v760 = vpop.xlane.xlu0 %759
    %v761 = vlog2.pop %v760
    %v762 = vmul.f32 %v761, 0.6931472
    %v763 = vsub.f32 %v755, %v762
    %764 = vst [vmem:[#allocation2] sm:$0x3] %v763
    // Predicated region
    $region30: #{lenet_k6_forward.5} parent=1 // pred_check
      _
    $region31: #{lenet_k6_forward.5} parent=1 // pred_check_branch
      %766 = sbr.rel (0) target = $region33
    $region32: #{lenet_k6_forward.5} parent=1 // pred_region
      %s768 = ssub.s32 32, 32
      %769 = vsyncadd [#allocation3], %s768
      %s771 = sshll.u32 [#allocation2], 4
      %s772 = int_to_ptr.vmem [resolvable:$true] %s771
      %774 = dma.vmem_to_hbm [thread:$0]  %s772, 32, %s7, [#allocation3]
    $region33: #{lenet_k6_forward.5} parent=1 // pred_fallthru
      _
    // Predicated region
    $region34: #{lenet_k6_forward.5} parent=1 // pred_check
      _
    $region35: #{lenet_k6_forward.5} parent=1 // pred_check_branch
      %776 = sbr.rel (0) target = $region37
    $region36: #{lenet_k6_forward.5} parent=1 // pred_region
      %777 = dma.done [#allocation3], 32
    $region37: #{lenet_k6_forward.5} parent=1 // pred_fallthru
      _
    %778 = vsyncpa [#allocation3], 1

</llo_original>
